<compile_context>
chip_gen: v6e
topology: v6e:2x2x1
jax: 0.10.0
libtpu: 0.0.40
codegen_flags: <defaults>
</compile_context>

<pallas_src>
import functools

import jax
import jax.numpy as jnp
from jax.experimental import pallas as pl
from jax.experimental.pallas import tpu as pltpu


def _mlp_kernel(
    x_ref,                            # (TM, vl)   f32, batch-tiled
    w1_ref, b1_ref, a1_ref,           # (vl, 32)   f32, (1, 32)  f32, (1, 32)  f32
    w2_ref, b2_ref, a2_ref,           # (32, 256)  f32, (1, 256) f32, (1, 256) f32
    w3_ref, b3_ref, a3_ref,           # (256, iso) bf16, (1, iso) f32, (1, iso) f32
    w4_ref, b4_ref,                   # (iso, iso) bf16, (1, iso) f32
    o_ref,                            # (TM, iso)  f32, batch-tiled
):
    x = x_ref[...]

    # Layers 1/2 are tiny (K=6, K=32); keep them in f32.
    h = jnp.dot(x, w1_ref[...], preferred_element_type=jnp.float32) + b1_ref[...]
    h = jnp.where(h >= 0.0, h, a1_ref[...] * h)          # PReLU

    h = jnp.dot(h, w2_ref[...], preferred_element_type=jnp.float32) + b2_ref[...]
    h = jnp.where(h >= 0.0, h, a2_ref[...] * h)          # PReLU

    # Layers 3/4 dominate: bf16 operands on the MXU, f32 accumulation.
    h = jnp.dot(h.astype(w3_ref.dtype), w3_ref[...],
                preferred_element_type=jnp.float32) + b3_ref[...]
    h = jnp.where(h >= 0.0, h, a3_ref[...] * h)          # PReLU

    h = jnp.dot(h.astype(w4_ref.dtype), w4_ref[...],
                preferred_element_type=jnp.float32) + b4_ref[...]

    o_ref[...] = (jnp.tanh(h) + 1.0) * 0.5               # Tanh -> (y+1)/2


def _round_up(n, m):
    return ((n + m - 1) // m) * m


def _default_tile_m():
    # 128 rows saturate v5-class 128x128 MXUs; 256 matches v6e/v7x's 2x256x256.
    try:
        kind = jax.devices()[0].device_kind.lower()
    except Exception:
        return 256
    return 128 if "v5" in kind else 256


@functools.partial(jax.jit, static_argnames=("tm",))
def _forward(x, params, tm):
    w1, b1, a1, w2, b2, a2, w3, b3, a3, w4, b4 = params
    B, vl = x.shape
    h1 = w1.shape[1]
    h2 = w2.shape[1]
    iso = w4.shape[1]

    grid = (pl.cdiv(B, tm),)

    tiled = lambda i: (i, 0)   # batch-tiled operands
    const = lambda i: (0, 0)   # grid-invariant (VMEM-resident) operands

    in_specs = [
        pl.BlockSpec((tm, vl), tiled),
        pl.BlockSpec((vl, h1), const), pl.BlockSpec((1, h1), const),
        pl.BlockSpec((1, h1), const),
        pl.BlockSpec((h1, h2), const), pl.BlockSpec((1, h2), const),
        pl.BlockSpec((1, h2), const),
        pl.BlockSpec((h2, iso), const), pl.BlockSpec((1, iso), const),
        pl.BlockSpec((1, iso), const),
        pl.BlockSpec((iso, iso), const), pl.BlockSpec((1, iso), const),
    ]
    out_specs = pl.BlockSpec((tm, iso), tiled)

    flops = 2 * B * (vl * h1 + h1 * h2 + h2 * iso + iso * iso)
    weight_like = (w1, b1, a1, w2, b2, a2, w3, b3, a3, w4, b4)
    bytes_accessed = (
        x.size * x.dtype.itemsize
        + B * iso * 4
        + sum(int(w.size) * w.dtype.itemsize for w in weight_like)
    )

    return pl.pallas_call(
        _mlp_kernel,
        out_shape=jax.ShapeDtypeStruct((B, iso), jnp.float32),
        grid=grid,
        in_specs=in_specs,
        out_specs=out_specs,
        compiler_params=pltpu.CompilerParams(
            dimension_semantics=("parallel",),
            vmem_limit_bytes=32 * 1024 * 1024,
        ),
        cost_estimate=pl.CostEstimate(
            flops=flops,
            transcendentals=B * iso,          # tanh epilogue
            bytes_accessed=bytes_accessed,
        ),
    )(x, w1, b1, a1, w2, b2, a2, w3, b3, a3, w4, b4)


def highmass_forward(x, params, *, tm=None):
    # TODO(synk): for repeated tiny-batch inference, batch requests at the call
    # site or prefetch w3/w4 across calls; at B~8 the kernel is weight-DMA bound.
    squeeze = False
    if x.ndim == 1:                     # torch nn.Linear also accepts 1-D input
        x = x[None, :]
        squeeze = True
    B = x.shape[0]
    if tm is None:
        tm = _default_tile_m()
    tm = max(8, min(_round_up(tm, 8), _round_up(B, 8)))
    out = _forward(x, params, tm)
    return out[0] if squeeze else out


def init_params(key, isolen=1024, vectorlen=6):
    """Synthetic parameters matching the torch module's shapes.

    Weights are stored transposed relative to torch's nn.Linear, i.e. (in, out),
    so the kernel computes y = x @ W + b. The two large matrices (w3, w4) are
    cast to bfloat16; biases stay float32. Each PReLU alpha (torch default
    num_parameters=1, init=0.25) is broadcast into a (1, out_features) f32 row
    so the kernel applies it with a plain VPU broadcast-multiply.
    """
    h1, h2 = 32, 256
    dims = [(vectorlen, h1), (h1, h2), (h2, isolen), (isolen, isolen)]
    keys = jax.random.split(key, 2 * len(dims))
    params = []
    for i, (din, dout) in enumerate(dims):
        bound = 1.0 / float(din) ** 0.5
        w = jax.random.uniform(keys[2 * i], (din, dout), jnp.float32, -bound, bound)
        b = jax.random.uniform(keys[2 * i + 1], (1, dout), jnp.float32, -bound, bound)
        if i >= 2:  # bf16 for the two big matrices (layers 3 and 4)
            w = w.astype(jnp.bfloat16)
        params.append(w)
        params.append(b)
        if i < 3:   # PReLU follows layers 1-3; layer 4 is followed by Tanh
            params.append(jnp.full((1, dout), 0.25, jnp.float32))
    return tuple(params)


def reference_forward(x, params):
    """Pure-JAX reference mirroring the kernel's dtypes (bf16 w3/w4, f32 accum)."""
    w1, b1, a1, w2, b2, a2, w3, b3, a3, w4, b4 = params

    def prelu(v, a):
        return jnp.where(v >= 0.0, v, a * v)

    h = prelu(jnp.dot(x, w1, preferred_element_type=jnp.float32) + b1, a1)
    h = prelu(jnp.dot(h, w2, preferred_element_type=jnp.float32) + b2, a2)
    h = prelu(jnp.dot(h.astype(w3.dtype), w3,
                      preferred_element_type=jnp.float32) + b3, a3)
    h = jnp.dot(h.astype(w4.dtype), w4, preferred_element_type=jnp.float32) + b4
    return (jnp.tanh(h) + 1.0) * 0.5


if __name__ == "__main__":
    key = jax.random.PRNGKey(0)
    k_x, k_p = jax.random.split(key)

    # Small demo shapes; batch deliberately NOT a multiple of the tile so the
    # partial last block (Pallas-masked writeback) is exercised.
    isolen, vectorlen, batch = 1024, 6, 20
    x = jax.random.normal(k_x, (batch, vectorlen), dtype=jnp.float32)
    params = init_params(k_p, isolen=isolen, vectorlen=vectorlen)

    # tm=8 keeps the demo tiny while still running a 3-step batch grid with the
    # weights resident in VMEM across tiles. Real use: leave tm=None
    # (128 on v5e, 256 on v6e/v7x).
    out = highmass_forward(x, params, tm=8)
    out = jax.block_until_ready(out)

    ref = reference_forward(x, params)
    assert out.shape == (batch, isolen), out.shape
    err = float(jnp.max(jnp.abs(out - ref)))
    assert err < 2e-3, err
    print("KERNEL_OK")
</pallas_src>

<mosaic_0001>
module attributes {stable_mosaic.version = 11 : i64} {
  func.func @_mlp_kernel(%arg0: i32, %arg1: memref<8x6xf32, #tpu.memory_space<vmem>>, %arg2: memref<6x32xf32, #tpu.memory_space<vmem>>, %arg3: memref<1x32xf32, #tpu.memory_space<vmem>>, %arg4: memref<1x32xf32, #tpu.memory_space<vmem>>, %arg5: memref<32x256xf32, #tpu.memory_space<vmem>>, %arg6: memref<1x256xf32, #tpu.memory_space<vmem>>, %arg7: memref<1x256xf32, #tpu.memory_space<vmem>>, %arg8: memref<256x1024xbf16, #tpu.memory_space<vmem>>, %arg9: memref<1x1024xf32, #tpu.memory_space<vmem>>, %arg10: memref<1x1024xf32, #tpu.memory_space<vmem>>, %arg11: memref<1024x1024xbf16, #tpu.memory_space<vmem>>, %arg12: memref<1x1024xf32, #tpu.memory_space<vmem>>, %arg13: memref<8x1024xf32, #tpu.memory_space<vmem>>) attributes {dimension_semantics = [#tpu.dimension_semantics<parallel>], iteration_bounds = array<i64: 3>, scalar_prefetch = 0 : i64, scratch_operands = 0 : i64, tpu.core_type = #tpu.core_type<tc>, window_params = [{transform_indices = @transform_0, window_bounds = array<i64: 8, 6>}, {pipeline_mode = #tpu.pipeline_mode<synchronous>, transform_indices = @transform_1, window_bounds = array<i64: 6, 32>}, {pipeline_mode = #tpu.pipeline_mode<synchronous>, transform_indices = @transform_2, window_bounds = array<i64: 1, 32>}, {pipeline_mode = #tpu.pipeline_mode<synchronous>, transform_indices = @transform_3, window_bounds = array<i64: 1, 32>}, {pipeline_mode = #tpu.pipeline_mode<synchronous>, transform_indices = @transform_4, window_bounds = array<i64: 32, 256>}, {pipeline_mode = #tpu.pipeline_mode<synchronous>, transform_indices = @transform_5, window_bounds = array<i64: 1, 256>}, {pipeline_mode = #tpu.pipeline_mode<synchronous>, transform_indices = @transform_6, window_bounds = array<i64: 1, 256>}, {pipeline_mode = #tpu.pipeline_mode<synchronous>, transform_indices = @transform_7, window_bounds = array<i64: 256, 1024>}, {pipeline_mode = #tpu.pipeline_mode<synchronous>, transform_indices = @transform_8, window_bounds = array<i64: 1, 1024>}, {pipeline_mode = #tpu.pipeline_mode<synchronous>, transform_indices = @transform_9, window_bounds = array<i64: 1, 1024>}, {pipeline_mode = #tpu.pipeline_mode<synchronous>, transform_indices = @transform_10, window_bounds = array<i64: 1024, 1024>}, {pipeline_mode = #tpu.pipeline_mode<synchronous>, transform_indices = @transform_11, window_bounds = array<i64: 1, 1024>}, {transform_indices = @transform_12, window_bounds = array<i64: 8, 1024>}]} {
    %c0 = arith.constant 0 : index
    %c0_0 = arith.constant 0 : index
    %0 = vector.load %arg1[%c0, %c0_0] : memref<8x6xf32, #tpu.memory_space<vmem>>, vector<8x6xf32>
    %c0_1 = arith.constant 0 : index
    %c0_2 = arith.constant 0 : index
    %1 = vector.load %arg2[%c0_1, %c0_2] : memref<6x32xf32, #tpu.memory_space<vmem>>, vector<6x32xf32>
    %cst = arith.constant dense<0.000000e+00> : vector<8x32xf32>
    %2 = tpu.matmul %0, %1, %cst {dimension_numbers = #tpu.dot_dimension_numbers<[1], [0], [0], [1], [0, 0, 1, 1], [], []>} : vector<8x6xf32>, vector<6x32xf32>, vector<8x32xf32> -> vector<8x32xf32>
    %c0_3 = arith.constant 0 : index
    %c0_4 = arith.constant 0 : index
    %3 = vector.load %arg3[%c0_3, %c0_4] : memref<1x32xf32, #tpu.memory_space<vmem>>, vector<1x32xf32>
    %4 = vector.broadcast %3 : vector<1x32xf32> to vector<8x32xf32>
    %5 = arith.addf %2, %4 : vector<8x32xf32>
    %cst_5 = arith.constant 0.000000e+00 : f32
    %6 = vector.broadcast %cst_5 : f32 to vector<8x32xf32>
    %7 = arith.cmpf oge, %5, %6 : vector<8x32xf32>
    %c0_6 = arith.constant 0 : index
    %c0_7 = arith.constant 0 : index
    %8 = vector.load %arg4[%c0_6, %c0_7] : memref<1x32xf32, #tpu.memory_space<vmem>>, vector<1x32xf32>
    %9 = vector.broadcast %8 : vector<1x32xf32> to vector<8x32xf32>
    %10 = arith.mulf %9, %5 : vector<8x32xf32>
    %11 = arith.select %7, %5, %10 : vector<8x32xi1>, vector<8x32xf32>
    %c0_8 = arith.constant 0 : index
    %c0_9 = arith.constant 0 : index
    %12 = vector.load %arg5[%c0_8, %c0_9] : memref<32x256xf32, #tpu.memory_space<vmem>>, vector<32x256xf32>
    %cst_10 = arith.constant dense<0.000000e+00> : vector<8x256xf32>
    %13 = tpu.matmul %11, %12, %cst_10 {dimension_numbers = #tpu.dot_dimension_numbers<[1], [0], [0], [1], [0, 0, 1, 1], [], []>} : vector<8x32xf32>, vector<32x256xf32>, vector<8x256xf32> -> vector<8x256xf32>
    %c0_11 = arith.constant 0 : index
    %c0_12 = arith.constant 0 : index
    %14 = vector.load %arg6[%c0_11, %c0_12] : memref<1x256xf32, #tpu.memory_space<vmem>>, vector<1x256xf32>
    %15 = vector.broadcast %14 : vector<1x256xf32> to vector<8x256xf32>
    %16 = arith.addf %13, %15 : vector<8x256xf32>
    %cst_13 = arith.constant 0.000000e+00 : f32
    %17 = vector.broadcast %cst_13 : f32 to vector<8x256xf32>
    %18 = arith.cmpf oge, %16, %17 : vector<8x256xf32>
    %c0_14 = arith.constant 0 : index
    %c0_15 = arith.constant 0 : index
    %19 = vector.load %arg7[%c0_14, %c0_15] : memref<1x256xf32, #tpu.memory_space<vmem>>, vector<1x256xf32>
    %20 = vector.broadcast %19 : vector<1x256xf32> to vector<8x256xf32>
    %21 = arith.mulf %20, %16 : vector<8x256xf32>
    %22 = arith.select %18, %16, %21 : vector<8x256xi1>, vector<8x256xf32>
    %23 = arith.truncf %22 : vector<8x256xf32> to vector<8x256xbf16>
    %c0_16 = arith.constant 0 : index
    %c0_17 = arith.constant 0 : index
    %24 = vector.load %arg8[%c0_16, %c0_17] : memref<256x1024xbf16, #tpu.memory_space<vmem>>, vector<256x1024xbf16>
    %cst_18 = arith.constant dense<0.000000e+00> : vector<8x1024xf32>
    %25 = tpu.matmul %23, %24, %cst_18 {dimension_numbers = #tpu.dot_dimension_numbers<[1], [0], [0], [1], [0, 0, 1, 1], [], []>} : vector<8x256xbf16>, vector<256x1024xbf16>, vector<8x1024xf32> -> vector<8x1024xf32>
    %c0_19 = arith.constant 0 : index
    %c0_20 = arith.constant 0 : index
    %26 = vector.load %arg9[%c0_19, %c0_20] : memref<1x1024xf32, #tpu.memory_space<vmem>>, vector<1x1024xf32>
    %27 = vector.broadcast %26 : vector<1x1024xf32> to vector<8x1024xf32>
    %28 = arith.addf %25, %27 : vector<8x1024xf32>
    %cst_21 = arith.constant 0.000000e+00 : f32
    %29 = vector.broadcast %cst_21 : f32 to vector<8x1024xf32>
    %30 = arith.cmpf oge, %28, %29 : vector<8x1024xf32>
    %c0_22 = arith.constant 0 : index
    %c0_23 = arith.constant 0 : index
    %31 = vector.load %arg10[%c0_22, %c0_23] : memref<1x1024xf32, #tpu.memory_space<vmem>>, vector<1x1024xf32>
    %32 = vector.broadcast %31 : vector<1x1024xf32> to vector<8x1024xf32>
    %33 = arith.mulf %32, %28 : vector<8x1024xf32>
    %34 = arith.select %30, %28, %33 : vector<8x1024xi1>, vector<8x1024xf32>
    %35 = arith.truncf %34 : vector<8x1024xf32> to vector<8x1024xbf16>
    %c0_24 = arith.constant 0 : index
    %c0_25 = arith.constant 0 : index
    %36 = vector.load %arg11[%c0_24, %c0_25] : memref<1024x1024xbf16, #tpu.memory_space<vmem>>, vector<1024x1024xbf16>
    %cst_26 = arith.constant dense<0.000000e+00> : vector<8x1024xf32>
    %37 = tpu.matmul %35, %36, %cst_26 {dimension_numbers = #tpu.dot_dimension_numbers<[1], [0], [0], [1], [0, 0, 1, 1], [], []>} : vector<8x1024xbf16>, vector<1024x1024xbf16>, vector<8x1024xf32> -> vector<8x1024xf32>
    %c0_27 = arith.constant 0 : index
    %c0_28 = arith.constant 0 : index
    %38 = vector.load %arg12[%c0_27, %c0_28] : memref<1x1024xf32, #tpu.memory_space<vmem>>, vector<1x1024xf32>
    %39 = vector.broadcast %38 : vector<1x1024xf32> to vector<8x1024xf32>
    %40 = arith.addf %37, %39 : vector<8x1024xf32>
    %41 = math.tanh %40 : vector<8x1024xf32>
    %cst_29 = arith.constant 1.000000e+00 : f32
    %42 = vector.broadcast %cst_29 : f32 to vector<8x1024xf32>
    %43 = arith.addf %41, %42 : vector<8x1024xf32>
    %cst_30 = arith.constant 5.000000e-01 : f32
    %44 = vector.broadcast %cst_30 : f32 to vector<8x1024xf32>
    %45 = arith.mulf %43, %44 : vector<8x1024xf32>
    %c0_31 = arith.constant 0 : index
    %c0_32 = arith.constant 0 : index
    %46 = vector.load %arg13[%c0_31, %c0_32] : memref<8x1024xf32, #tpu.memory_space<vmem>>, vector<8x1024xf32>
    tpu.vector_store %arg13[%c0_31, %c0_32], %45 {strides = array<i32>} : memref<8x1024xf32, #tpu.memory_space<vmem>>, vector<8x1024xf32>,
    return
  }
  func.func @transform_0(%arg0: i32) -> (i32, i32) {
    %c0_i32 = arith.constant 0 : i32
    %c0_i32_0 = arith.constant 0 : i32
    return %arg0, %c0_i32 : i32, i32
  }
  func.func @transform_1(%arg0: i32) -> (i32, i32) {
    %c0_i32 = arith.constant 0 : i32
    %c0_i32_0 = arith.constant 0 : i32
    %c0_i32_1 = arith.constant 0 : i32
    return %c0_i32, %c0_i32_0 : i32, i32
  }
  func.func @transform_2(%arg0: i32) -> (i32, i32) {
    %c0_i32 = arith.constant 0 : i32
    %c0_i32_0 = arith.constant 0 : i32
    %c0_i32_1 = arith.constant 0 : i32
    return %c0_i32, %c0_i32_0 : i32, i32
  }
  func.func @transform_3(%arg0: i32) -> (i32, i32) {
    %c0_i32 = arith.constant 0 : i32
    %c0_i32_0 = arith.constant 0 : i32
    %c0_i32_1 = arith.constant 0 : i32
    return %c0_i32, %c0_i32_0 : i32, i32
  }
  func.func @transform_4(%arg0: i32) -> (i32, i32) {
    %c0_i32 = arith.constant 0 : i32
    %c0_i32_0 = arith.constant 0 : i32
    %c0_i32_1 = arith.constant 0 : i32
    return %c0_i32, %c0_i32_0 : i32, i32
  }
  func.func @transform_5(%arg0: i32) -> (i32, i32) {
    %c0_i32 = arith.constant 0 : i32
    %c0_i32_0 = arith.constant 0 : i32
    %c0_i32_1 = arith.constant 0 : i32
    return %c0_i32, %c0_i32_0 : i32, i32
  }
  func.func @transform_6(%arg0: i32) -> (i32, i32) {
    %c0_i32 = arith.constant 0 : i32
    %c0_i32_0 = arith.constant 0 : i32
    %c0_i32_1 = arith.constant 0 : i32
    return %c0_i32, %c0_i32_0 : i32, i32
  }
  func.func @transform_7(%arg0: i32) -> (i32, i32) {
    %c0_i32 = arith.constant 0 : i32
    %c0_i32_0 = arith.constant 0 : i32
    %c0_i32_1 = arith.constant 0 : i32
    return %c0_i32, %c0_i32_0 : i32, i32
  }
  func.func @transform_8(%arg0: i32) -> (i32, i32) {
    %c0_i32 = arith.constant 0 : i32
    %c0_i32_0 = arith.constant 0 : i32
    %c0_i32_1 = arith.constant 0 : i32
    return %c0_i32, %c0_i32_0 : i32, i32
  }
  func.func @transform_9(%arg0: i32) -> (i32, i32) {
    %c0_i32 = arith.constant 0 : i32
    %c0_i32_0 = arith.constant 0 : i32
    %c0_i32_1 = arith.constant 0 : i32
    return %c0_i32, %c0_i32_0 : i32, i32
  }
  func.func @transform_10(%arg0: i32) -> (i32, i32) {
    %c0_i32 = arith.constant 0 : i32
    %c0_i32_0 = arith.constant 0 : i32
    %c0_i32_1 = arith.constant 0 : i32
    return %c0_i32, %c0_i32_0 : i32, i32
  }
  func.func @transform_11(%arg0: i32) -> (i32, i32) {
    %c0_i32 = arith.constant 0 : i32
    %c0_i32_0 = arith.constant 0 : i32
    %c0_i32_1 = arith.constant 0 : i32
    return %c0_i32, %c0_i32_0 : i32, i32
  }
  func.func @transform_12(%arg0: i32) -> (i32, i32) {
    %c0_i32 = arith.constant 0 : i32
    %c0_i32_0 = arith.constant 0 : i32
    return %arg0, %c0_i32 : i32, i32
  }
}

</mosaic_0001>

<llo_original>
// kernel: _forward.1
$region0: #{_forward.1}
  #allocation0 [shape = 'u32[]', space=smem, size = 0x4, offset = 0x4, fixed_abs, tag = 'smem constant byte address 0x4 - core index']
  #allocation1 [shape = 'u32[144,128]{1,0:T(1,128)}', space=vmem, size = 0x12000, scoped, tag = 'internal scratch']
  %s0 = inlined_call_operand.vmem [shape: f32[20,6], index: 0, kind: input, shape index: {}]
  %s1 = inlined_call_operand.hbm [shape: f32[6,32], index: 1, kind: input, shape index: {}]
  %s2 = inlined_call_operand.hbm [shape: f32[1,32], index: 2, kind: input, shape index: {}]
  %s3 = inlined_call_operand.hbm [shape: f32[1,32], index: 3, kind: input, shape index: {}]
  %s4 = inlined_call_operand.hbm [shape: f32[32,256], index: 4, kind: input, shape index: {}]
  %s5 = inlined_call_operand.hbm [shape: f32[1,256], index: 5, kind: input, shape index: {}]
  %s6 = inlined_call_operand.hbm [shape: f32[1,256], index: 6, kind: input, shape index: {}]
  %s7 = inlined_call_operand.hbm [shape: bf16[256,1024], index: 7, kind: input, shape index: {}]
  %s8 = inlined_call_operand.hbm [shape: f32[1,1024], index: 8, kind: input, shape index: {}]
  %s9 = inlined_call_operand.hbm [shape: f32[1,1024], index: 9, kind: input, shape index: {}]
  %s10 = inlined_call_operand.hbm [shape: bf16[1024,1024], index: 10, kind: input, shape index: {}]
  %s11 = inlined_call_operand.hbm [shape: f32[1,1024], index: 11, kind: input, shape index: {}]
  %s12 = inlined_call_operand.hbm [shape: f32[20,1024], index: 12, kind: output, shape index: {}]
  %s13 = sld [smem:[#allocation0]]
  $region125: #{_forward.1} parent=0
    _
  %s15 = ssub.s32 1, %s13
  %s16 = scalar_select 0, %s15, %s13
  $region1: #{_forward.1} parent=0
    #allocation2 [shape = 'u8[4096]{0}', space=vmem, size = 0x1000, scoped, tag = 'input window, operand 1, single buffered']
    #allocation3 [shape = 's32[2]{0}', space=sflag, size = 0x8, scoped, tag = 'scoped memory for _forward.1']
    #allocation4 [shape = 's32[2]{0}', space=sflag, size = 0x8, scoped, tag = 'scoped memory for _forward.1']
    #allocation5 [shape = 'u8[512]{0}', space=vmem, size = 0x400, scoped, tag = 'input window, operand 2, single buffered']
    #allocation6 [shape = 's32[1]{0}', space=sflag, size = 0x4, scoped, tag = 'scoped memory for _forward.1']
    #allocation7 [shape = 'u8[512]{0}', space=vmem, size = 0x400, scoped, tag = 'input window, operand 3, single buffered']
    #allocation8 [shape = 'u8[32768]{0}', space=vmem, size = 0x8000, scoped, tag = 'input window, operand 4, single buffered']
    #allocation9 [shape = 's32[1]{0}', space=sflag, size = 0x4, scoped, tag = 'scoped memory for _forward.1']
    #allocation10 [shape = 'u8[1024]{0}', space=vmem, size = 0x400, scoped, tag = 'input window, operand 5, single buffered']
    #allocation11 [shape = 'u8[1024]{0}', space=vmem, size = 0x400, scoped, tag = 'input window, operand 6, single buffered']
    #allocation12 [shape = 's32[1]{0}', space=sflag, size = 0x4, scoped, tag = 'scoped memory for _forward.1']
    #allocation13 [shape = 'u8[524288]{0}', space=vmem, size = 0x80000, scoped, tag = 'input window, operand 7, single buffered']
    #allocation14 [shape = 'u8[4096]{0}', space=vmem, size = 0x1000, scoped, tag = 'input window, operand 8, single buffered']
    #allocation15 [shape = 's32[1]{0}', space=sflag, size = 0x4, scoped, tag = 'scoped memory for _forward.1']
    #allocation16 [shape = 'u8[4096]{0}', space=vmem, size = 0x1000, scoped, tag = 'input window, operand 9, single buffered']
    #allocation17 [shape = 'u8[2097152]{0}', space=vmem, size = 0x200000, scoped, tag = 'input window, operand 10, single buffered']
    #allocation18 [shape = 's32[1]{0}', space=sflag, size = 0x4, scoped, tag = 'scoped memory for _forward.1']
    #allocation19 [shape = 'u8[4096]{0}', space=vmem, size = 0x1000, scoped, tag = 'input window, operand 11, single buffered']
    #allocation20 [shape = 'u8[65536]{0}', space=vmem, size = 0x10000, scoped, tag = 'output window, operand 0']
    %17 = vsyncpa [#allocation3], 0
    %18 = vsyncpa [#allocation6], 0
    %19 = vsyncpa [#allocation9], 0
    %20 = vsyncpa [#allocation12], 0
    %21 = vsyncpa [#allocation15], 0
    %22 = vsyncpa [#allocation18], 0
    %23 = vsyncpa [#allocation4], 0
    %s24 = scalar_lea.sflag [#allocation4], 1
    %25 = vsyncpa %s24, 0
    loop: start=0, step=1, limit=5
    $region2: #{_forward.1} parent=1 // loop_pre_header
      _
    $region3: #{_forward.1} parent=1 // loop_header
      %s27 = sphi 0, %s31
      %p28 = scmp.ge.s32.totalorder %s27, 5
      %s37 = sphi 0, %s39
      %s40 = sphi 0, %s37
      %s41 = sphi 0, %s40
      %s57 = sphi 0, %s41
      %s61 = sphi 0, %s61
      %s63 = sphi 0, %s61
      %s64 = sphi 0, %s63
      %s78 = sphi 0, %s64
      %s82 = sphi 0, %s82
      %s84 = sphi 0, %s82
      %s85 = sphi 0, %s84
      %s99 = sphi 0, %s85
      %s103 = sphi 0, %s103
      %s105 = sphi 0, %s103
      %s106 = sphi 0, %s105
      %s120 = sphi 0, %s106
      %s124 = sphi 0, %s124
      %s126 = sphi 0, %s124
      %s127 = sphi 0, %s126
      %s141 = sphi 0, %s127
      %s145 = sphi 0, %s145
      %s147 = sphi 0, %s145
      %s148 = sphi 0, %s147
      %s162 = sphi 0, %s148
      %s166 = sphi 0, %s166
      %s168 = sphi 0, %s166
      %s169 = sphi 0, %s168
      %s183 = sphi 0, %s169
      %s187 = sphi 0, %s187
      %s189 = sphi 0, %s187
      %s190 = sphi 0, %s189
      %s204 = sphi 0, %s190
      %s208 = sphi 0, %s208
      %s210 = sphi 0, %s208
      %s211 = sphi 0, %s210
      %s225 = sphi 0, %s211
      %s229 = sphi 0, %s229
      %s231 = sphi 0, %s229
      %s232 = sphi 0, %s231
      %s246 = sphi 0, %s232
      %s250 = sphi 0, %s250
      %s252 = sphi 0, %s250
      %s253 = sphi 0, %s252
      %s267 = sphi 0, %s253
      %s271 = sphi 0, %s271
      %s273 = sphi 0, %s271
      %s274 = sphi 0, %s273
      %s288 = sphi 0, %s274
      %s294 = sphi 0, %s296
      %s297 = sphi 0, %s294
      %s298 = sphi 0, %s297
      %s314 = sphi 0, %s298
    $region4: #{_forward.1} parent=1 // loop_header_branch
      %30 = sbr.rel (%p28) target = $region8
    $region5: #{_forward.1} parent=1 // loop_body
      %s32 = ssub.s32 %s27, 1
      %s33 = ssub.s32 %s27, 2
      %s34 = sadd.s32 %s27, 1
      %s35 = ssub.s32 %s27, %s34
      %p36 = scmp.eq.s32.totalorder %s35, 0
      %s38 = sadd.s32 %s37, 1
      %s39 = scalar_select %p36, %s37, %s38
      %p42 = pneg %p36
      %p43 = scmp.eq.s32.totalorder %s27, 2
      %p44 = por %p42, %p43
      %p45 = scmp.ne.s32.totalorder %s37, %s40
      %p46 = scmp.eq.s32.totalorder %s27, 0
      %p47 = por %p45, %p46
      %p48 = scmp.ne.s32.totalorder %s37, %s40
      %p49 = scmp.eq.s32.totalorder %s32, 2
      %p50 = por %p48, %p49
      %p51 = scmp.ne.s32.totalorder %s40, %s41
      %p52 = scmp.eq.s32.totalorder %s32, 0
      %p53 = por %p51, %p52
      %p54 = scmp.ne.s32.totalorder %s40, %s41
      %p55 = scmp.eq.s32.totalorder %s33, 2
      %p56 = por %p54, %p55
      %p58 = scmp.ne.s32.totalorder %s41, %s57
      %p59 = scmp.eq.s32.totalorder %s33, 0
      %p60 = por %p58, %p59
      %s62 = sadd.s32 %s61, 1
      %p65 = scmp.eq.s32.totalorder %s27, 2
      %p66 = scmp.ne.s32.totalorder %s61, %s63
      %p67 = scmp.eq.s32.totalorder %s27, 0
      %p68 = por %p66, %p67
      %p69 = scmp.ne.s32.totalorder %s61, %s63
      %p70 = scmp.eq.s32.totalorder %s32, 2
      %p71 = por %p69, %p70
      %p72 = scmp.ne.s32.totalorder %s63, %s64
      %p73 = scmp.eq.s32.totalorder %s32, 0
      %p74 = por %p72, %p73
      %p75 = scmp.ne.s32.totalorder %s63, %s64
      %p76 = scmp.eq.s32.totalorder %s33, 2
      %p77 = por %p75, %p76
      %p79 = scmp.ne.s32.totalorder %s64, %s78
      %p80 = scmp.eq.s32.totalorder %s33, 0
      %p81 = por %p79, %p80
      %s83 = sadd.s32 %s82, 1
      %p86 = scmp.eq.s32.totalorder %s27, 2
      %p87 = scmp.ne.s32.totalorder %s82, %s84
      %p88 = scmp.eq.s32.totalorder %s27, 0
      %p89 = por %p87, %p88
      %p90 = scmp.ne.s32.totalorder %s82, %s84
      %p91 = scmp.eq.s32.totalorder %s32, 2
      %p92 = por %p90, %p91
      %p93 = scmp.ne.s32.totalorder %s84, %s85
      %p94 = scmp.eq.s32.totalorder %s32, 0
      %p95 = por %p93, %p94
      %p96 = scmp.ne.s32.totalorder %s84, %s85
      %p97 = scmp.eq.s32.totalorder %s33, 2
      %p98 = por %p96, %p97
      %p100 = scmp.ne.s32.totalorder %s85, %s99
      %p101 = scmp.eq.s32.totalorder %s33, 0
      %p102 = por %p100, %p101
      %s104 = sadd.s32 %s103, 1
      %p107 = scmp.eq.s32.totalorder %s27, 2
      %p108 = scmp.ne.s32.totalorder %s103, %s105
      %p109 = scmp.eq.s32.totalorder %s27, 0
      %p110 = por %p108, %p109
      %p111 = scmp.ne.s32.totalorder %s103, %s105
      %p112 = scmp.eq.s32.totalorder %s32, 2
      %p113 = por %p111, %p112
      %p114 = scmp.ne.s32.totalorder %s105, %s106
      %p115 = scmp.eq.s32.totalorder %s32, 0
      %p116 = por %p114, %p115
      %p117 = scmp.ne.s32.totalorder %s105, %s106
      %p118 = scmp.eq.s32.totalorder %s33, 2
      %p119 = por %p117, %p118
      %p121 = scmp.ne.s32.totalorder %s106, %s120
      %p122 = scmp.eq.s32.totalorder %s33, 0
      %p123 = por %p121, %p122
      %s125 = sadd.s32 %s124, 1
      %p128 = scmp.eq.s32.totalorder %s27, 2
      %p129 = scmp.ne.s32.totalorder %s124, %s126
      %p130 = scmp.eq.s32.totalorder %s27, 0
      %p131 = por %p129, %p130
      %p132 = scmp.ne.s32.totalorder %s124, %s126
      %p133 = scmp.eq.s32.totalorder %s32, 2
      %p134 = por %p132, %p133
      %p135 = scmp.ne.s32.totalorder %s126, %s127
      %p136 = scmp.eq.s32.totalorder %s32, 0
      %p137 = por %p135, %p136
      %p138 = scmp.ne.s32.totalorder %s126, %s127
      %p139 = scmp.eq.s32.totalorder %s33, 2
      %p140 = por %p138, %p139
      %p142 = scmp.ne.s32.totalorder %s127, %s141
      %p143 = scmp.eq.s32.totalorder %s33, 0
      %p144 = por %p142, %p143
      %s146 = sadd.s32 %s145, 1
      %p149 = scmp.eq.s32.totalorder %s27, 2
      %p150 = scmp.ne.s32.totalorder %s145, %s147
      %p151 = scmp.eq.s32.totalorder %s27, 0
      %p152 = por %p150, %p151
      %p153 = scmp.ne.s32.totalorder %s145, %s147
      %p154 = scmp.eq.s32.totalorder %s32, 2
      %p155 = por %p153, %p154
      %p156 = scmp.ne.s32.totalorder %s147, %s148
      %p157 = scmp.eq.s32.totalorder %s32, 0
      %p158 = por %p156, %p157
      %p159 = scmp.ne.s32.totalorder %s147, %s148
      %p160 = scmp.eq.s32.totalorder %s33, 2
      %p161 = por %p159, %p160
      %p163 = scmp.ne.s32.totalorder %s148, %s162
      %p164 = scmp.eq.s32.totalorder %s33, 0
      %p165 = por %p163, %p164
      %s167 = sadd.s32 %s166, 1
      %p170 = scmp.eq.s32.totalorder %s27, 2
      %p171 = scmp.ne.s32.totalorder %s166, %s168
      %p172 = scmp.eq.s32.totalorder %s27, 0
      %p173 = por %p171, %p172
      %p174 = scmp.ne.s32.totalorder %s166, %s168
      %p175 = scmp.eq.s32.totalorder %s32, 2
      %p176 = por %p174, %p175
      %p177 = scmp.ne.s32.totalorder %s168, %s169
      %p178 = scmp.eq.s32.totalorder %s32, 0
      %p179 = por %p177, %p178
      %p180 = scmp.ne.s32.totalorder %s168, %s169
      %p181 = scmp.eq.s32.totalorder %s33, 2
      %p182 = por %p180, %p181
      %p184 = scmp.ne.s32.totalorder %s169, %s183
      %p185 = scmp.eq.s32.totalorder %s33, 0
      %p186 = por %p184, %p185
      %s188 = sadd.s32 %s187, 1
      %p191 = scmp.eq.s32.totalorder %s27, 2
      %p192 = scmp.ne.s32.totalorder %s187, %s189
      %p193 = scmp.eq.s32.totalorder %s27, 0
      %p194 = por %p192, %p193
      %p195 = scmp.ne.s32.totalorder %s187, %s189
      %p196 = scmp.eq.s32.totalorder %s32, 2
      %p197 = por %p195, %p196
      %p198 = scmp.ne.s32.totalorder %s189, %s190
      %p199 = scmp.eq.s32.totalorder %s32, 0
      %p200 = por %p198, %p199
      %p201 = scmp.ne.s32.totalorder %s189, %s190
      %p202 = scmp.eq.s32.totalorder %s33, 2
      %p203 = por %p201, %p202
      %p205 = scmp.ne.s32.totalorder %s190, %s204
      %p206 = scmp.eq.s32.totalorder %s33, 0
      %p207 = por %p205, %p206
      %s209 = sadd.s32 %s208, 1
      %p212 = scmp.eq.s32.totalorder %s27, 2
      %p213 = scmp.ne.s32.totalorder %s208, %s210
      %p214 = scmp.eq.s32.totalorder %s27, 0
      %p215 = por %p213, %p214
      %p216 = scmp.ne.s32.totalorder %s208, %s210
      %p217 = scmp.eq.s32.totalorder %s32, 2
      %p218 = por %p216, %p217
      %p219 = scmp.ne.s32.totalorder %s210, %s211
      %p220 = scmp.eq.s32.totalorder %s32, 0
      %p221 = por %p219, %p220
      %p222 = scmp.ne.s32.totalorder %s210, %s211
      %p223 = scmp.eq.s32.totalorder %s33, 2
      %p224 = por %p222, %p223
      %p226 = scmp.ne.s32.totalorder %s211, %s225
      %p227 = scmp.eq.s32.totalorder %s33, 0
      %p228 = por %p226, %p227
      %s230 = sadd.s32 %s229, 1
      %p233 = scmp.eq.s32.totalorder %s27, 2
      %p234 = scmp.ne.s32.totalorder %s229, %s231
      %p235 = scmp.eq.s32.totalorder %s27, 0
      %p236 = por %p234, %p235
      %p237 = scmp.ne.s32.totalorder %s229, %s231
      %p238 = scmp.eq.s32.totalorder %s32, 2
      %p239 = por %p237, %p238
      %p240 = scmp.ne.s32.totalorder %s231, %s232
      %p241 = scmp.eq.s32.totalorder %s32, 0
      %p242 = por %p240, %p241
      %p243 = scmp.ne.s32.totalorder %s231, %s232
      %p244 = scmp.eq.s32.totalorder %s33, 2
      %p245 = por %p243, %p244
      %p247 = scmp.ne.s32.totalorder %s232, %s246
      %p248 = scmp.eq.s32.totalorder %s33, 0
      %p249 = por %p247, %p248
      %s251 = sadd.s32 %s250, 1
      %p254 = scmp.eq.s32.totalorder %s27, 2
      %p255 = scmp.ne.s32.totalorder %s250, %s252
      %p256 = scmp.eq.s32.totalorder %s27, 0
      %p257 = por %p255, %p256
      %p258 = scmp.ne.s32.totalorder %s250, %s252
      %p259 = scmp.eq.s32.totalorder %s32, 2
      %p260 = por %p258, %p259
      %p261 = scmp.ne.s32.totalorder %s252, %s253
      %p262 = scmp.eq.s32.totalorder %s32, 0
      %p263 = por %p261, %p262
      %p264 = scmp.ne.s32.totalorder %s252, %s253
      %p265 = scmp.eq.s32.totalorder %s33, 2
      %p266 = por %p264, %p265
      %p268 = scmp.ne.s32.totalorder %s253, %s267
      %p269 = scmp.eq.s32.totalorder %s33, 0
      %p270 = por %p268, %p269
      %s272 = sadd.s32 %s271, 1
      %p275 = scmp.eq.s32.totalorder %s27, 2
      %p276 = scmp.ne.s32.totalorder %s271, %s273
      %p277 = scmp.eq.s32.totalorder %s27, 0
      %p278 = por %p276, %p277
      %p279 = scmp.ne.s32.totalorder %s271, %s273
      %p280 = scmp.eq.s32.totalorder %s32, 2
      %p281 = por %p279, %p280
      %p282 = scmp.ne.s32.totalorder %s273, %s274
      %p283 = scmp.eq.s32.totalorder %s32, 0
      %p284 = por %p282, %p283
      %p285 = scmp.ne.s32.totalorder %s273, %s274
      %p286 = scmp.eq.s32.totalorder %s33, 2
      %p287 = por %p285, %p286
      %p289 = scmp.ne.s32.totalorder %s274, %s288
      %p290 = scmp.eq.s32.totalorder %s33, 0
      %p291 = por %p289, %p290
      %s292 = ssub.s32 %s27, %s34
      %p293 = scmp.eq.s32.totalorder %s292, 0
      %s295 = sadd.s32 %s294, 1
      %s296 = scalar_select %p293, %s294, %s295
      %p299 = pneg %p293
      %p300 = scmp.eq.s32.totalorder %s27, 2
      %p301 = por %p299, %p300
      %p302 = scmp.ne.s32.totalorder %s294, %s297
      %p303 = scmp.eq.s32.totalorder %s27, 0
      %p304 = por %p302, %p303
      %p305 = scmp.ne.s32.totalorder %s294, %s297
      %p306 = scmp.eq.s32.totalorder %s32, 2
      %p307 = por %p305, %p306
      %p308 = scmp.ne.s32.totalorder %s297, %s298
      %p309 = scmp.eq.s32.totalorder %s32, 0
      %p310 = por %p308, %p309
      %p311 = scmp.ne.s32.totalorder %s297, %s298
      %p312 = scmp.eq.s32.totalorder %s33, 2
      %p313 = por %p311, %p312
      %p315 = scmp.ne.s32.totalorder %s298, %s314
      %p316 = scmp.eq.s32.totalorder %s33, 0
      %p317 = por %p315, %p316
      %p318 = scmp.le.s32.totalorder 1, %s27
      %p319 = scmp.lt.s32.totalorder %s27, 4
      %p320 = pnand %p318, %p319
      %p321 = pneg %p320
      // Predicated region
      $region9: #{_forward.1} parent=5 // pred_check
        _
      $region10: #{_forward.1} parent=5 // pred_check_branch
        %323 = sbr.rel (%p320) target = $region12
      $region11: #{_forward.1} parent=5 // pred_region
        %s324 = ssub.s32 %s27, 1
        // Predicated region
        $region13: #{_forward.1} parent=11 // pred_check
          %p325 = pneg %p74
        $region14: #{_forward.1} parent=11 // pred_check_branch
          %327 = sbr.rel (%p325) target = $region16
        $region15: #{_forward.1} parent=11 // pred_region
          %s329 = ssub.s32 128, 128
          %330 = vsyncadd [#allocation3], %s329
          %s332 = sshll.u32 [#allocation2], 4
          %s333 = int_to_ptr.vmem [resolvable:$true] %s332
          %335 = dma.hbm_to_vmem [thread:$0]  %s1, 128, %s333, [#allocation3]
        $region16: #{_forward.1} parent=11 // pred_fallthru
          _
        // Predicated region
        $region17: #{_forward.1} parent=11 // pred_check
          %p336 = pneg %p95
        $region18: #{_forward.1} parent=11 // pred_check_branch
          %338 = sbr.rel (%p336) target = $region20
        $region19: #{_forward.1} parent=11 // pred_region
          %s340 = ssub.s32 16, 16
          %341 = vsyncadd [#allocation6], %s340
          %s343 = sshll.u32 [#allocation5], 4
          %s344 = int_to_ptr.vmem [resolvable:$true] %s343
          %346 = dma.hbm_to_vmem [thread:$0]  %s2, 16, %s344, [#allocation6]
        $region20: #{_forward.1} parent=11 // pred_fallthru
          _
        // Predicated region
        $region21: #{_forward.1} parent=11 // pred_check
          %p347 = pneg %p116
        $region22: #{_forward.1} parent=11 // pred_check_branch
          %349 = sbr.rel (%p347) target = $region24
        $region23: #{_forward.1} parent=11 // pred_region
          %s351 = ssub.s32 16, 16
          %352 = vsyncadd [#allocation6], %s351
          %s354 = sshll.u32 [#allocation7], 4
          %s355 = int_to_ptr.vmem [resolvable:$true] %s354
          %357 = dma.hbm_to_vmem [thread:$0]  %s3, 16, %s355, [#allocation6]
        $region24: #{_forward.1} parent=11 // pred_fallthru
          _
        // Predicated region
        $region25: #{_forward.1} parent=11 // pred_check
          %p358 = pneg %p137
        $region26: #{_forward.1} parent=11 // pred_check_branch
          %360 = sbr.rel (%p358) target = $region28
        $region27: #{_forward.1} parent=11 // pred_region
          %s362 = ssub.s32 1024, 1024
          %363 = vsyncadd [#allocation9], %s362
          %s364 = sshll.u32 [#allocation8], 4
          %s365 = int_to_ptr.vmem [resolvable:$true] %s364
          %370 = dma.hbm_to_vmem [thread:$0]  %s4, 1024, %s365, [#allocation9], 256, 256, 16
        $region28: #{_forward.1} parent=11 // pred_fallthru
          _
        // Predicated region
        $region29: #{_forward.1} parent=11 // pred_check
          %p371 = pneg %p158
        $region30: #{_forward.1} parent=11 // pred_check_branch
          %373 = sbr.rel (%p371) target = $region32
        $region31: #{_forward.1} parent=11 // pred_region
          %s375 = ssub.s32 32, 32
          %376 = vsyncadd [#allocation9], %s375
          %s378 = sshll.u32 [#allocation10], 4
          %s379 = int_to_ptr.vmem [resolvable:$true] %s378
          %381 = dma.hbm_to_vmem [thread:$0]  %s5, 32, %s379, [#allocation9]
        $region32: #{_forward.1} parent=11 // pred_fallthru
          _
        // Predicated region
        $region33: #{_forward.1} parent=11 // pred_check
          %p382 = pneg %p179
        $region34: #{_forward.1} parent=11 // pred_check_branch
          %384 = sbr.rel (%p382) target = $region36
        $region35: #{_forward.1} parent=11 // pred_region
          %s386 = ssub.s32 32, 32
          %387 = vsyncadd [#allocation12], %s386
          %s389 = sshll.u32 [#allocation11], 4
          %s390 = int_to_ptr.vmem [resolvable:$true] %s389
          %392 = dma.hbm_to_vmem [thread:$0]  %s6, 32, %s390, [#allocation12]
        $region36: #{_forward.1} parent=11 // pred_fallthru
          _
        // Predicated region
        $region37: #{_forward.1} parent=11 // pred_check
          %p393 = pneg %p200
        $region38: #{_forward.1} parent=11 // pred_check_branch
          %395 = sbr.rel (%p393) target = $region40
        $region39: #{_forward.1} parent=11 // pred_region
          %s397 = ssub.s32 16384, 16384
          %398 = vsyncadd [#allocation12], %s397
          %s399 = sshll.u32 [#allocation13], 4
          %s400 = int_to_ptr.vmem [resolvable:$true] %s399
          %405 = dma.hbm_to_vmem [thread:$0]  %s7, 16384, %s400, [#allocation12], 512, 512, 32
        $region40: #{_forward.1} parent=11 // pred_fallthru
          _
        // Predicated region
        $region41: #{_forward.1} parent=11 // pred_check
          %p406 = pneg %p221
        $region42: #{_forward.1} parent=11 // pred_check_branch
          %408 = sbr.rel (%p406) target = $region44
        $region43: #{_forward.1} parent=11 // pred_region
          %s410 = ssub.s32 128, 128
          %411 = vsyncadd [#allocation15], %s410
          %s413 = sshll.u32 [#allocation14], 4
          %s414 = int_to_ptr.vmem [resolvable:$true] %s413
          %416 = dma.hbm_to_vmem [thread:$0]  %s8, 128, %s414, [#allocation15]
        $region44: #{_forward.1} parent=11 // pred_fallthru
          _
        // Predicated region
        $region45: #{_forward.1} parent=11 // pred_check
          %p417 = pneg %p242
        $region46: #{_forward.1} parent=11 // pred_check_branch
          %419 = sbr.rel (%p417) target = $region48
        $region47: #{_forward.1} parent=11 // pred_region
          %s421 = ssub.s32 128, 128
          %422 = vsyncadd [#allocation15], %s421
          %s424 = sshll.u32 [#allocation16], 4
          %s425 = int_to_ptr.vmem [resolvable:$true] %s424
          %427 = dma.hbm_to_vmem [thread:$0]  %s9, 128, %s425, [#allocation15]
        $region48: #{_forward.1} parent=11 // pred_fallthru
          _
        // Predicated region
        $region49: #{_forward.1} parent=11 // pred_check
          %p428 = pneg %p263
        $region50: #{_forward.1} parent=11 // pred_check_branch
          %430 = sbr.rel (%p428) target = $region52
        $region51: #{_forward.1} parent=11 // pred_region
          %s432 = ssub.s32 65536, 65536
          %433 = vsyncadd [#allocation18], %s432
          %s434 = sshll.u32 [#allocation17], 4
          %s435 = int_to_ptr.vmem [resolvable:$true] %s434
          %440 = dma.hbm_to_vmem [thread:$0]  %s10, 65536, %s435, [#allocation18], 512, 512, 32
        $region52: #{_forward.1} parent=11 // pred_fallthru
          _
        // Predicated region
        $region53: #{_forward.1} parent=11 // pred_check
          %p441 = pneg %p284
        $region54: #{_forward.1} parent=11 // pred_check_branch
          %443 = sbr.rel (%p441) target = $region56
        $region55: #{_forward.1} parent=11 // pred_region
          %s445 = ssub.s32 128, 128
          %446 = vsyncadd [#allocation18], %s445
          %s448 = sshll.u32 [#allocation19], 4
          %s449 = int_to_ptr.vmem [resolvable:$true] %s448
          %451 = dma.hbm_to_vmem [thread:$0]  %s11, 128, %s449, [#allocation18]
        $region56: #{_forward.1} parent=11 // pred_fallthru
          _
      $region12: #{_forward.1} parent=5 // pred_fallthru
        _
      %p452 = scmp.lt.s32.totalorder %s27, 3
      // Predicated region
      $region57: #{_forward.1} parent=5 // pred_check
        %p453 = pneg %p452
      $region58: #{_forward.1} parent=5 // pred_check_branch
        %455 = sbr.rel (%p453) target = $region60
      $region59: #{_forward.1} parent=5 // pred_region
        // Predicated region
        $region61: #{_forward.1} parent=59 // pred_check
          %p456 = pneg %p47
        $region62: #{_forward.1} parent=59 // pred_check_branch
          %458 = sbr.rel (%p456) target = $region64
        $region63: #{_forward.1} parent=59 // pred_region
          %p459 = scmp.lt.s32.totalorder %s27, 2
          %s460 = scalar_select %p459, %s27, 2
          %s461 = smul.addr %s460, 8
          %s462 = scalar_lea.vmem %s0, %s461
        $region64: #{_forward.1} parent=59 // pred_fallthru
          _
      $region60: #{_forward.1} parent=5 // pred_fallthru
        _
      %p463 = scmp.le.s32.totalorder 1, %s27
      %p464 = scmp.lt.s32.totalorder %s27, 4
      %p465 = pnand %p463, %p464
      %p466 = pneg %p465
      // Predicated region
      $region65: #{_forward.1} parent=5 // pred_check
        _
      $region66: #{_forward.1} parent=5 // pred_check_branch
        %468 = sbr.rel (%p465) target = $region68
      $region67: #{_forward.1} parent=5 // pred_region
        %s469 = ssub.s32 %s27, 1
        // Predicated region
        $region69: #{_forward.1} parent=67 // pred_check
          %p470 = pneg %p74
        $region70: #{_forward.1} parent=67 // pred_check_branch
          %472 = sbr.rel (%p470) target = $region72
        $region71: #{_forward.1} parent=67 // pred_region
          %473 = dma.done [#allocation3], 128
        $region72: #{_forward.1} parent=67 // pred_fallthru
          _
        // Predicated region
        $region73: #{_forward.1} parent=67 // pred_check
          %p474 = pneg %p95
        $region74: #{_forward.1} parent=67 // pred_check_branch
          %476 = sbr.rel (%p474) target = $region76
        $region75: #{_forward.1} parent=67 // pred_region
          %477 = dma.done [#allocation6], 16
        $region76: #{_forward.1} parent=67 // pred_fallthru
          _
        // Predicated region
        $region77: #{_forward.1} parent=67 // pred_check
          %p478 = pneg %p116
        $region78: #{_forward.1} parent=67 // pred_check_branch
          %480 = sbr.rel (%p478) target = $region80
        $region79: #{_forward.1} parent=67 // pred_region
          %481 = dma.done [#allocation6], 16
        $region80: #{_forward.1} parent=67 // pred_fallthru
          _
        // Predicated region
        $region81: #{_forward.1} parent=67 // pred_check
          %p482 = pneg %p137
        $region82: #{_forward.1} parent=67 // pred_check_branch
          %484 = sbr.rel (%p482) target = $region84
        $region83: #{_forward.1} parent=67 // pred_region
          %485 = dma.done [#allocation9], 1024
        $region84: #{_forward.1} parent=67 // pred_fallthru
          _
        // Predicated region
        $region85: #{_forward.1} parent=67 // pred_check
          %p486 = pneg %p158
        $region86: #{_forward.1} parent=67 // pred_check_branch
          %488 = sbr.rel (%p486) target = $region88
        $region87: #{_forward.1} parent=67 // pred_region
          %489 = dma.done [#allocation9], 32
        $region88: #{_forward.1} parent=67 // pred_fallthru
          _
        // Predicated region
        $region89: #{_forward.1} parent=67 // pred_check
          %p490 = pneg %p179
        $region90: #{_forward.1} parent=67 // pred_check_branch
          %492 = sbr.rel (%p490) target = $region92
        $region91: #{_forward.1} parent=67 // pred_region
          %493 = dma.done [#allocation12], 32
        $region92: #{_forward.1} parent=67 // pred_fallthru
          _
        // Predicated region
        $region93: #{_forward.1} parent=67 // pred_check
          %p494 = pneg %p200
        $region94: #{_forward.1} parent=67 // pred_check_branch
          %496 = sbr.rel (%p494) target = $region96
        $region95: #{_forward.1} parent=67 // pred_region
          %497 = dma.done [#allocation12], 16384
        $region96: #{_forward.1} parent=67 // pred_fallthru
          _
        // Predicated region
        $region97: #{_forward.1} parent=67 // pred_check
          %p498 = pneg %p221
        $region98: #{_forward.1} parent=67 // pred_check_branch
          %500 = sbr.rel (%p498) target = $region100
        $region99: #{_forward.1} parent=67 // pred_region
          %501 = dma.done [#allocation15], 128
        $region100: #{_forward.1} parent=67 // pred_fallthru
          _
        // Predicated region
        $region101: #{_forward.1} parent=67 // pred_check
          %p502 = pneg %p242
        $region102: #{_forward.1} parent=67 // pred_check_branch
          %504 = sbr.rel (%p502) target = $region104
        $region103: #{_forward.1} parent=67 // pred_region
          %505 = dma.done [#allocation15], 128
        $region104: #{_forward.1} parent=67 // pred_fallthru
          _
        // Predicated region
        $region105: #{_forward.1} parent=67 // pred_check
          %p506 = pneg %p263
        $region106: #{_forward.1} parent=67 // pred_check_branch
          %508 = sbr.rel (%p506) target = $region108
        $region107: #{_forward.1} parent=67 // pred_region
          %509 = dma.done [#allocation18], 65536
        $region108: #{_forward.1} parent=67 // pred_fallthru
          _
        // Predicated region
        $region109: #{_forward.1} parent=67 // pred_check
          %p510 = pneg %p284
        $region110: #{_forward.1} parent=67 // pred_check_branch
          %512 = sbr.rel (%p510) target = $region112
        $region111: #{_forward.1} parent=67 // pred_region
          %513 = dma.done [#allocation18], 128
        $region112: #{_forward.1} parent=67 // pred_fallthru
          _
        %p514 = scmp.lt.s32.totalorder %s32, 2
        %s515 = scalar_select %p514, %s32, 2
        %s516 = smul.addr %s515, 8
        %s517 = scalar_lea.vmem %s0, %s516
        %p518 = pneg %p53
        %p519 = pneg %p50
        %p520 = pneg %p74
        %p521 = pneg %p71
        %p522 = pneg %p95
        %p523 = pneg %p92
        %p524 = pneg %p116
        %p525 = pneg %p113
        %p526 = pneg %p137
        %p527 = pneg %p134
        %p528 = pneg %p158
        %p529 = pneg %p155
        %p530 = pneg %p179
        %p531 = pneg %p176
        %p532 = pneg %p200
        %p533 = pneg %p197
        %p534 = pneg %p221
        %p535 = pneg %p218
        %p536 = pneg %p242
        %p537 = pneg %p239
        %p538 = pneg %p263
        %p539 = pneg %p260
        %p540 = pneg %p284
        %p541 = pneg %p281
        %p542 = pneg %p310
        %p543 = pneg %p307
        %s544 = sand.u32 %s297, 1
        %s545 = scalar_lea.sflag [#allocation4], %s544
        %s546 = sand.u32 %s297, 1
        %s547 = smul.addr %s546, 64
        %s548 = scalar_lea.vmem [#allocation20], %s547
        %p549 = scmp.lt.s32.totalorder %s32, 2
        %s550 = scalar_select %p549, %s32, 2
        %s551 = smul.addr %s550, 8
        %s552 = scalar_lea.vmem %s0, %s551
        %v553 = vld [vmem:[%s552] sm:$0xff]
        %v554 = vld [vmem:[#allocation2] sm:$0x3f]
        %v555 = vld [vmem:[#allocation5] sm:$0x1]
        %v557 = vlaneseq
        %v558 = vshrl.u32 %v557, 7
        %v559 = vsub.s32 0, %v558
        %v560 = vrot.slane %v555, %v559
        %vm562 = vcmask 48128
        %v564 = vsel %vm562, %v553, 0
        %vm566 = vcmask 1045504
        %v568 = vsel %vm566, %v554, 0
        %570 = vmatprep.subr.mxu0 0.0
        %571 = vmatpush1.msra.mxu0 0.0
        %572 = vmatprep.subr.mxu0 0.0
        %573 = vmatpush1.msra.mxu0 0.0
        %574 = vmatprep.subr.mxu0 0.0
        %575 = vmatpush1.msra.mxu0 0.0
        %576 = vmatprep.subr.mxu0 0.0
        %577 = vmatpush1.msra.mxu0 0.0
        %578 = vmatprep.subr.mxu0 0.0
        %579 = vmatpush1.msra.mxu0 0.0
        %580 = vmatprep.subr.mxu0 0.0
        %581 = vmatpush1.msra.mxu0 0.0
        %582 = vmatprep.subr.mxu0 0.0
        %583 = vmatpush1.msra.mxu0 0.0
        %584 = vmatprep.subr.mxu0 0.0
        %585 = vmatpush1.msra.mxu0 0.0
        %586 = vmatprep.subr.mxu0 0.0
        %587 = vmatpush1.msra.mxu0 0.0
        %588 = vmatprep.subr.mxu0 0.0
        %589 = vmatpush1.msra.mxu0 0.0
        %590 = vmatprep.subr.mxu0 0.0
        %591 = vmatpush1.msra.mxu0 0.0
        %592 = vmatprep.subr.mxu0 0.0
        %593 = vmatpush1.msra.mxu0 0.0
        %594 = vmatprep.subr.mxu0 0.0
        %595 = vmatpush1.msra.mxu0 0.0
        %596 = vmatprep.subr.mxu0 0.0
        %597 = vmatpush1.msra.mxu0 0.0
        %598 = vmatprep.subr.mxu0 0.0
        %599 = vmatpush1.msra.mxu0 0.0
        %600 = vmatprep.subr.mxu0 0.0
        %601 = vmatpush1.msra.mxu0 %v568
        %602 = vmatprep.subr.mxu0 0.0
        %603 = vmatpush2.msra.mxu0 0.0
        %604 = vmatprep.subr.mxu0 0.0
        %605 = vmatpush2.msra.mxu0 0.0
        %606 = vmatprep.subr.mxu0 0.0
        %607 = vmatpush2.msra.mxu0 0.0
        %608 = vmatprep.subr.mxu0 0.0
        %609 = vmatpush2.msra.mxu0 0.0
        %610 = vmatprep.subr.mxu0 0.0
        %611 = vmatpush2.msra.mxu0 0.0
        %612 = vmatprep.subr.mxu0 0.0
        %613 = vmatpush2.msra.mxu0 0.0
        %614 = vmatprep.subr.mxu0 0.0
        %615 = vmatpush2.msra.mxu0 0.0
        %616 = vmatprep.subr.mxu0 0.0
        %617 = vmatpush2.msra.mxu0 0.0
        %618 = vmatprep.subr.mxu0 0.0
        %619 = vmatpush2.msra.mxu0 0.0
        %620 = vmatprep.subr.mxu0 0.0
        %621 = vmatpush2.msra.mxu0 0.0
        %622 = vmatprep.subr.mxu0 0.0
        %623 = vmatpush2.msra.mxu0 0.0
        %624 = vmatprep.subr.mxu0 0.0
        %625 = vmatpush2.msra.mxu0 0.0
        %626 = vmatprep.subr.mxu0 0.0
        %627 = vmatpush2.msra.mxu0 0.0
        %628 = vmatprep.subr.mxu0 0.0
        %629 = vmatpush2.msra.mxu0 0.0
        %630 = vmatprep.subr.mxu0 0.0
        %631 = vmatpush2.msra.mxu0 0.0
        %632 = vmatprep.subr.mxu0 0.0
        %633 = vmatpush2.msra.mxu0 0.0
        %634 = vmatprep.mubr.f32.mxu0 0.0
        %635 = vmatmul.mubr.f32.gmra.mxu0 %v564
        %v636 = vpop.f32.mrf.mxu0
        %v637 = vadd.f32 %v560, %v636
        %v638 = vpop.f32.mrf.mxu0
        %639 = vdwg.mxu0
        %vm640 = vcmp.ge.f32.partialorder %v637, 0.0
        %v641 = vld [vmem:[#allocation7] sm:$0x1]
        %v643 = vlaneseq
        %v644 = vshrl.u32 %v643, 7
        %v645 = vsub.s32 0, %v644
        %v646 = vrot.slane %v641, %v645
        %v648 = vmul.f32 %v646, %v637
        %v649 = vsel %vm640, %v637, %v648
        %v650 = vld [vmem:[#allocation8] sm:$0xff]
        %v651 = vld [vmem:[#allocation8 + $0x8] sm:$0xff]
        %v652 = vld [vmem:[#allocation8 + $0x10] sm:$0xff]
        %v653 = vld [vmem:[#allocation8 + $0x18] sm:$0xff]
        %v654 = vld [vmem:[#allocation8 + $0x20] sm:$0xff]
        %v655 = vld [vmem:[#allocation8 + $0x28] sm:$0xff]
        %v656 = vld [vmem:[#allocation8 + $0x30] sm:$0xff]
        %v657 = vld [vmem:[#allocation8 + $0x38] sm:$0xff]
        %v658 = vld [vmem:[#allocation10] sm:$0x3]
        %v660 = vlaneseq
        %v661 = vshrl.u32 %v660, 7
        %v662 = vsub.s32 0, %v661
        %v663 = vrot.slane %v658, %v662
        %v664 = vlaneseq
        %v665 = vshrl.u32 %v664, 7
        %v666 = vsub.s32 1, %v665
        %v667 = vrot.slane %v658, %v666
        %vm670 = vcmask 261120
        %v672 = vsel %vm670, %v649, 0
        %674 = vmatprep.subr.mxu0 0.0
        %675 = vmatpush1.msra.mxu0 0.0
        %676 = vmatprep.subr.mxu0 0.0
        %677 = vmatpush1.msra.mxu0 0.0
        %678 = vmatprep.subr.mxu0 0.0
        %679 = vmatpush1.msra.mxu0 0.0
        %680 = vmatprep.subr.mxu0 0.0
        %681 = vmatpush1.msra.mxu0 0.0
        %682 = vmatprep.subr.mxu0 0.0
        %683 = vmatpush1.msra.mxu0 0.0
        %684 = vmatprep.subr.mxu0 0.0
        %685 = vmatpush1.msra.mxu0 0.0
        %686 = vmatprep.subr.mxu0 0.0
        %687 = vmatpush1.msra.mxu0 0.0
        %688 = vmatprep.subr.mxu0 0.0
        %689 = vmatpush1.msra.mxu0 0.0
        %690 = vmatprep.subr.mxu0 0.0
        %691 = vmatpush1.msra.mxu0 0.0
        %692 = vmatprep.subr.mxu0 0.0
        %693 = vmatpush1.msra.mxu0 0.0
        %694 = vmatprep.subr.mxu0 0.0
        %695 = vmatpush1.msra.mxu0 0.0
        %696 = vmatprep.subr.mxu0 0.0
        %697 = vmatpush1.msra.mxu0 0.0
        %698 = vmatprep.subr.mxu0 %v657
        %699 = vmatpush1.msra.mxu0 %v656
        %700 = vmatprep.subr.mxu0 %v655
        %701 = vmatpush1.msra.mxu0 %v654
        %702 = vmatprep.subr.mxu0 %v653
        %703 = vmatpush1.msra.mxu0 %v652
        %704 = vmatprep.subr.mxu0 %v651
        %705 = vmatpush1.msra.mxu0 %v650
        %706 = vmatprep.subr.mxu0 0.0
        %707 = vmatpush2.msra.mxu0 0.0
        %708 = vmatprep.subr.mxu0 0.0
        %709 = vmatpush2.msra.mxu0 0.0
        %710 = vmatprep.subr.mxu0 0.0
        %711 = vmatpush2.msra.mxu0 0.0
        %712 = vmatprep.subr.mxu0 0.0
        %713 = vmatpush2.msra.mxu0 0.0
        %714 = vmatprep.subr.mxu0 0.0
        %715 = vmatpush2.msra.mxu0 0.0
        %716 = vmatprep.subr.mxu0 0.0
        %717 = vmatpush2.msra.mxu0 0.0
        %718 = vmatprep.subr.mxu0 0.0
        %719 = vmatpush2.msra.mxu0 0.0
        %720 = vmatprep.subr.mxu0 0.0
        %721 = vmatpush2.msra.mxu0 0.0
        %722 = vmatprep.subr.mxu0 0.0
        %723 = vmatpush2.msra.mxu0 0.0
        %724 = vmatprep.subr.mxu0 0.0
        %725 = vmatpush2.msra.mxu0 0.0
        %726 = vmatprep.subr.mxu0 0.0
        %727 = vmatpush2.msra.mxu0 0.0
        %728 = vmatprep.subr.mxu0 0.0
        %729 = vmatpush2.msra.mxu0 0.0
        %730 = vmatprep.subr.mxu0 0.0
        %731 = vmatpush2.msra.mxu0 0.0
        %732 = vmatprep.subr.mxu0 0.0
        %733 = vmatpush2.msra.mxu0 0.0
        %734 = vmatprep.subr.mxu0 0.0
        %735 = vmatpush2.msra.mxu0 0.0
        %736 = vmatprep.subr.mxu0 0.0
        %737 = vmatpush2.msra.mxu0 0.0
        %738 = vmatprep.mubr.f32.mxu0 0.0
        %739 = vmatmul.mubr.f32.gmra.mxu0 %v672
        %v740 = vpop.f32.mrf.mxu0
        %v741 = vadd.f32 %v663, %v740
        %v742 = vpop.f32.mrf.mxu0
        %v743 = vadd.f32 %v667, %v742
        %744 = vdwg.mxu0
        %vm745 = vcmp.ge.f32.partialorder %v741, 0.0
        %vm746 = vcmp.ge.f32.partialorder %v743, 0.0
        %v747 = vld [vmem:[#allocation11] sm:$0x3]
        %v749 = vlaneseq
        %v750 = vshrl.u32 %v749, 7
        %v751 = vsub.s32 0, %v750
        %v752 = vrot.slane %v747, %v751
        %v753 = vlaneseq
        %v754 = vshrl.u32 %v753, 7
        %v755 = vsub.s32 1, %v754
        %v756 = vrot.slane %v747, %v755
        %v759 = vmul.f32 %v752, %v741
        %v760 = vmul.f32 %v756, %v743
        %v761 = vsel %vm745, %v741, %v759
        %v762 = vsel %vm746, %v743, %v760
        %v763 = vpack.c.bf16 %v761, %v761
        %v764 = vpack.c.bf16 %v762, %v762
        %v765 = vld [vmem:[#allocation13] sm:$0xff]
        %v766 = vld [vmem:[#allocation13 + $0x8] sm:$0xff]
        %v767 = vld [vmem:[#allocation13 + $0x10] sm:$0xff]
        %v768 = vld [vmem:[#allocation13 + $0x18] sm:$0xff]
        %v769 = vld [vmem:[#allocation13 + $0x20] sm:$0xff]
        %v770 = vld [vmem:[#allocation13 + $0x28] sm:$0xff]
        %v771 = vld [vmem:[#allocation13 + $0x30] sm:$0xff]
        %v772 = vld [vmem:[#allocation13 + $0x38] sm:$0xff]
        %v773 = vld [vmem:[#allocation13 + $0x40] sm:$0xff]
        %v774 = vld [vmem:[#allocation13 + $0x48] sm:$0xff]
        %v775 = vld [vmem:[#allocation13 + $0x50] sm:$0xff]
        %v776 = vld [vmem:[#allocation13 + $0x58] sm:$0xff]
        %v777 = vld [vmem:[#allocation13 + $0x60] sm:$0xff]
        %v778 = vld [vmem:[#allocation13 + $0x68] sm:$0xff]
        %v779 = vld [vmem:[#allocation13 + $0x70] sm:$0xff]
        %v780 = vld [vmem:[#allocation13 + $0x78] sm:$0xff]
        %v781 = vld [vmem:[#allocation13 + $0x80] sm:$0xff]
        %v782 = vld [vmem:[#allocation13 + $0x88] sm:$0xff]
        %v783 = vld [vmem:[#allocation13 + $0x90] sm:$0xff]
        %v784 = vld [vmem:[#allocation13 + $0x98] sm:$0xff]
        %v785 = vld [vmem:[#allocation13 + $0xa0] sm:$0xff]
        %v786 = vld [vmem:[#allocation13 + $0xa8] sm:$0xff]
        %v787 = vld [vmem:[#allocation13 + $0xb0] sm:$0xff]
        %v788 = vld [vmem:[#allocation13 + $0xb8] sm:$0xff]
        %v789 = vld [vmem:[#allocation13 + $0xc0] sm:$0xff]
        %v790 = vld [vmem:[#allocation13 + $0xc8] sm:$0xff]
        %v791 = vld [vmem:[#allocation13 + $0xd0] sm:$0xff]
        %v792 = vld [vmem:[#allocation13 + $0xd8] sm:$0xff]
        %v793 = vld [vmem:[#allocation13 + $0xe0] sm:$0xff]
        %v794 = vld [vmem:[#allocation13 + $0xe8] sm:$0xff]
        %v795 = vld [vmem:[#allocation13 + $0xf0] sm:$0xff]
        %v796 = vld [vmem:[#allocation13 + $0xf8] sm:$0xff]
        %v797 = vld [vmem:[#allocation13 + $0x100] sm:$0xff]
        %v798 = vld [vmem:[#allocation13 + $0x108] sm:$0xff]
        %v799 = vld [vmem:[#allocation13 + $0x110] sm:$0xff]
        %v800 = vld [vmem:[#allocation13 + $0x118] sm:$0xff]
        %v801 = vld [vmem:[#allocation13 + $0x120] sm:$0xff]
        %v802 = vld [vmem:[#allocation13 + $0x128] sm:$0xff]
        %v803 = vld [vmem:[#allocation13 + $0x130] sm:$0xff]
        %v804 = vld [vmem:[#allocation13 + $0x138] sm:$0xff]
        %v805 = vld [vmem:[#allocation13 + $0x140] sm:$0xff]
        %v806 = vld [vmem:[#allocation13 + $0x148] sm:$0xff]
        %v807 = vld [vmem:[#allocation13 + $0x150] sm:$0xff]
        %v808 = vld [vmem:[#allocation13 + $0x158] sm:$0xff]
        %v809 = vld [vmem:[#allocation13 + $0x160] sm:$0xff]
        %v810 = vld [vmem:[#allocation13 + $0x168] sm:$0xff]
        %v811 = vld [vmem:[#allocation13 + $0x170] sm:$0xff]
        %v812 = vld [vmem:[#allocation13 + $0x178] sm:$0xff]
        %v813 = vld [vmem:[#allocation13 + $0x180] sm:$0xff]
        %v814 = vld [vmem:[#allocation13 + $0x188] sm:$0xff]
        %v815 = vld [vmem:[#allocation13 + $0x190] sm:$0xff]
        %v816 = vld [vmem:[#allocation13 + $0x198] sm:$0xff]
        %v817 = vld [vmem:[#allocation13 + $0x1a0] sm:$0xff]
        %v818 = vld [vmem:[#allocation13 + $0x1a8] sm:$0xff]
        %v819 = vld [vmem:[#allocation13 + $0x1b0] sm:$0xff]
        %v820 = vld [vmem:[#allocation13 + $0x1b8] sm:$0xff]
        %v821 = vld [vmem:[#allocation13 + $0x1c0] sm:$0xff]
        %v822 = vld [vmem:[#allocation13 + $0x1c8] sm:$0xff]
        %v823 = vld [vmem:[#allocation13 + $0x1d0] sm:$0xff]
        %v824 = vld [vmem:[#allocation13 + $0x1d8] sm:$0xff]
        %v825 = vld [vmem:[#allocation13 + $0x1e0] sm:$0xff]
        %v826 = vld [vmem:[#allocation13 + $0x1e8] sm:$0xff]
        %v827 = vld [vmem:[#allocation13 + $0x1f0] sm:$0xff]
        %v828 = vld [vmem:[#allocation13 + $0x1f8] sm:$0xff]
        %v829 = vld [vmem:[#allocation13 + $0x200] sm:$0xff]
        %v830 = vld [vmem:[#allocation13 + $0x208] sm:$0xff]
        %v831 = vld [vmem:[#allocation13 + $0x210] sm:$0xff]
        %v832 = vld [vmem:[#allocation13 + $0x218] sm:$0xff]
        %v833 = vld [vmem:[#allocation13 + $0x220] sm:$0xff]
        %v834 = vld [vmem:[#allocation13 + $0x228] sm:$0xff]
        %v835 = vld [vmem:[#allocation13 + $0x230] sm:$0xff]
        %v836 = vld [vmem:[#allocation13 + $0x238] sm:$0xff]
        %v837 = vld [vmem:[#allocation13 + $0x240] sm:$0xff]
        %v838 = vld [vmem:[#allocation13 + $0x248] sm:$0xff]
        %v839 = vld [vmem:[#allocation13 + $0x250] sm:$0xff]
        %v840 = vld [vmem:[#allocation13 + $0x258] sm:$0xff]
        %v841 = vld [vmem:[#allocation13 + $0x260] sm:$0xff]
        %v842 = vld [vmem:[#allocation13 + $0x268] sm:$0xff]
        %v843 = vld [vmem:[#allocation13 + $0x270] sm:$0xff]
        %v844 = vld [vmem:[#allocation13 + $0x278] sm:$0xff]
        %v845 = vld [vmem:[#allocation13 + $0x280] sm:$0xff]
        %v846 = vld [vmem:[#allocation13 + $0x288] sm:$0xff]
        %v847 = vld [vmem:[#allocation13 + $0x290] sm:$0xff]
        %v848 = vld [vmem:[#allocation13 + $0x298] sm:$0xff]
        %v849 = vld [vmem:[#allocation13 + $0x2a0] sm:$0xff]
        %v850 = vld [vmem:[#allocation13 + $0x2a8] sm:$0xff]
        %v851 = vld [vmem:[#allocation13 + $0x2b0] sm:$0xff]
        %v852 = vld [vmem:[#allocation13 + $0x2b8] sm:$0xff]
        %v853 = vld [vmem:[#allocation13 + $0x2c0] sm:$0xff]
        %v854 = vld [vmem:[#allocation13 + $0x2c8] sm:$0xff]
        %v855 = vld [vmem:[#allocation13 + $0x2d0] sm:$0xff]
        %v856 = vld [vmem:[#allocation13 + $0x2d8] sm:$0xff]
        %v857 = vld [vmem:[#allocation13 + $0x2e0] sm:$0xff]
        %v858 = vld [vmem:[#allocation13 + $0x2e8] sm:$0xff]
        %v859 = vld [vmem:[#allocation13 + $0x2f0] sm:$0xff]
        %v860 = vld [vmem:[#allocation13 + $0x2f8] sm:$0xff]
        %v861 = vld [vmem:[#allocation13 + $0x300] sm:$0xff]
        %v862 = vld [vmem:[#allocation13 + $0x308] sm:$0xff]
        %v863 = vld [vmem:[#allocation13 + $0x310] sm:$0xff]
        %v864 = vld [vmem:[#allocation13 + $0x318] sm:$0xff]
        %v865 = vld [vmem:[#allocation13 + $0x320] sm:$0xff]
        %v866 = vld [vmem:[#allocation13 + $0x328] sm:$0xff]
        %v867 = vld [vmem:[#allocation13 + $0x330] sm:$0xff]
        %v868 = vld [vmem:[#allocation13 + $0x338] sm:$0xff]
        %v869 = vld [vmem:[#allocation13 + $0x340] sm:$0xff]
        %v870 = vld [vmem:[#allocation13 + $0x348] sm:$0xff]
        %v871 = vld [vmem:[#allocation13 + $0x350] sm:$0xff]
        %v872 = vld [vmem:[#allocation13 + $0x358] sm:$0xff]
        %v873 = vld [vmem:[#allocation13 + $0x360] sm:$0xff]
        %v874 = vld [vmem:[#allocation13 + $0x368] sm:$0xff]
        %v875 = vld [vmem:[#allocation13 + $0x370] sm:$0xff]
        %v876 = vld [vmem:[#allocation13 + $0x378] sm:$0xff]
        %v877 = vld [vmem:[#allocation13 + $0x380] sm:$0xff]
        %v878 = vld [vmem:[#allocation13 + $0x388] sm:$0xff]
        %v879 = vld [vmem:[#allocation13 + $0x390] sm:$0xff]
        %v880 = vld [vmem:[#allocation13 + $0x398] sm:$0xff]
        %v881 = vld [vmem:[#allocation13 + $0x3a0] sm:$0xff]
        %v882 = vld [vmem:[#allocation13 + $0x3a8] sm:$0xff]
        %v883 = vld [vmem:[#allocation13 + $0x3b0] sm:$0xff]
        %v884 = vld [vmem:[#allocation13 + $0x3b8] sm:$0xff]
        %v885 = vld [vmem:[#allocation13 + $0x3c0] sm:$0xff]
        %v886 = vld [vmem:[#allocation13 + $0x3c8] sm:$0xff]
        %v887 = vld [vmem:[#allocation13 + $0x3d0] sm:$0xff]
        %v888 = vld [vmem:[#allocation13 + $0x3d8] sm:$0xff]
        %v889 = vld [vmem:[#allocation13 + $0x3e0] sm:$0xff]
        %v890 = vld [vmem:[#allocation13 + $0x3e8] sm:$0xff]
        %v891 = vld [vmem:[#allocation13 + $0x3f0] sm:$0xff]
        %v892 = vld [vmem:[#allocation13 + $0x3f8] sm:$0xff]
        %v893 = vld [vmem:[#allocation14] sm:$0xff]
        %v895 = vlaneseq
        %v896 = vshrl.u32 %v895, 7
        %v897 = vsub.s32 0, %v896
        %v898 = vrot.slane %v893, %v897
        %v899 = vlaneseq
        %v900 = vshrl.u32 %v899, 7
        %v901 = vsub.s32 1, %v900
        %v902 = vrot.slane %v893, %v901
        %v903 = vlaneseq
        %v904 = vshrl.u32 %v903, 7
        %v905 = vsub.s32 2, %v904
        %v906 = vrot.slane %v893, %v905
        %v907 = vlaneseq
        %v908 = vshrl.u32 %v907, 7
        %v909 = vsub.s32 3, %v908
        %v910 = vrot.slane %v893, %v909
        %v911 = vlaneseq
        %v912 = vshrl.u32 %v911, 7
        %v913 = vsub.s32 4, %v912
        %v914 = vrot.slane %v893, %v913
        %v915 = vlaneseq
        %v916 = vshrl.u32 %v915, 7
        %v917 = vsub.s32 5, %v916
        %v918 = vrot.slane %v893, %v917
        %v919 = vlaneseq
        %v920 = vshrl.u32 %v919, 7
        %v921 = vsub.s32 6, %v920
        %v922 = vrot.slane %v893, %v921
        %v923 = vlaneseq
        %v924 = vshrl.u32 %v923, 7
        %v925 = vsub.s32 7, %v924
        %v926 = vrot.slane %v893, %v925
        %v1063 = vunpack.c.l.b16 %v765
        %v1064 = vunpack.c.h.b16 %v765
        %v1065 = vunpack.c.l.b16 %v766
        %v1066 = vunpack.c.h.b16 %v766
        %v1067 = vunpack.c.l.b16 %v767
        %v1068 = vunpack.c.h.b16 %v767
        %v1069 = vunpack.c.l.b16 %v768
        %v1070 = vunpack.c.h.b16 %v768
        %v1071 = vunpack.c.l.b16 %v769
        %v1072 = vunpack.c.h.b16 %v769
        %v1073 = vunpack.c.l.b16 %v770
        %v1074 = vunpack.c.h.b16 %v770
        %v1075 = vunpack.c.l.b16 %v771
        %v1076 = vunpack.c.h.b16 %v771
        %v1077 = vunpack.c.l.b16 %v772
        %v1078 = vunpack.c.h.b16 %v772
        %v1079 = vunpack.c.l.b16 %v773
        %v1080 = vunpack.c.h.b16 %v773
        %v1081 = vunpack.c.l.b16 %v774
        %v1082 = vunpack.c.h.b16 %v774
        %v1083 = vunpack.c.l.b16 %v775
        %v1084 = vunpack.c.h.b16 %v775
        %v1085 = vunpack.c.l.b16 %v776
        %v1086 = vunpack.c.h.b16 %v776
        %v1087 = vunpack.c.l.b16 %v777
        %v1088 = vunpack.c.h.b16 %v777
        %v1089 = vunpack.c.l.b16 %v778
        %v1090 = vunpack.c.h.b16 %v778
        %v1091 = vunpack.c.l.b16 %v779
        %v1092 = vunpack.c.h.b16 %v779
        %v1093 = vunpack.c.l.b16 %v780
        %v1094 = vunpack.c.h.b16 %v780
        %v1095 = vunpack.c.l.b16 %v781
        %v1096 = vunpack.c.h.b16 %v781
        %v1097 = vunpack.c.l.b16 %v782
        %v1098 = vunpack.c.h.b16 %v782
        %v1099 = vunpack.c.l.b16 %v783
        %v1100 = vunpack.c.h.b16 %v783
        %v1101 = vunpack.c.l.b16 %v784
        %v1102 = vunpack.c.h.b16 %v784
        %v1103 = vunpack.c.l.b16 %v785
        %v1104 = vunpack.c.h.b16 %v785
        %v1105 = vunpack.c.l.b16 %v786
        %v1106 = vunpack.c.h.b16 %v786
        %v1107 = vunpack.c.l.b16 %v787
        %v1108 = vunpack.c.h.b16 %v787
        %v1109 = vunpack.c.l.b16 %v788
        %v1110 = vunpack.c.h.b16 %v788
        %v1111 = vunpack.c.l.b16 %v789
        %v1112 = vunpack.c.h.b16 %v789
        %v1113 = vunpack.c.l.b16 %v790
        %v1114 = vunpack.c.h.b16 %v790
        %v1115 = vunpack.c.l.b16 %v791
        %v1116 = vunpack.c.h.b16 %v791
        %v1117 = vunpack.c.l.b16 %v792
        %v1118 = vunpack.c.h.b16 %v792
        %v1119 = vunpack.c.l.b16 %v793
        %v1120 = vunpack.c.h.b16 %v793
        %v1121 = vunpack.c.l.b16 %v794
        %v1122 = vunpack.c.h.b16 %v794
        %v1123 = vunpack.c.l.b16 %v795
        %v1124 = vunpack.c.h.b16 %v795
        %v1125 = vunpack.c.l.b16 %v796
        %v1126 = vunpack.c.h.b16 %v796
        %v1127 = vunpack.c.l.b16 %v797
        %v1128 = vunpack.c.h.b16 %v797
        %v1129 = vunpack.c.l.b16 %v798
        %v1130 = vunpack.c.h.b16 %v798
        %v1131 = vunpack.c.l.b16 %v799
        %v1132 = vunpack.c.h.b16 %v799
        %v1133 = vunpack.c.l.b16 %v800
        %v1134 = vunpack.c.h.b16 %v800
        %v1135 = vunpack.c.l.b16 %v801
        %v1136 = vunpack.c.h.b16 %v801
        %v1137 = vunpack.c.l.b16 %v802
        %v1138 = vunpack.c.h.b16 %v802
        %v1139 = vunpack.c.l.b16 %v803
        %v1140 = vunpack.c.h.b16 %v803
        %v1141 = vunpack.c.l.b16 %v804
        %v1142 = vunpack.c.h.b16 %v804
        %v1143 = vunpack.c.l.b16 %v805
        %v1144 = vunpack.c.h.b16 %v805
        %v1145 = vunpack.c.l.b16 %v806
        %v1146 = vunpack.c.h.b16 %v806
        %v1147 = vunpack.c.l.b16 %v807
        %v1148 = vunpack.c.h.b16 %v807
        %v1149 = vunpack.c.l.b16 %v808
        %v1150 = vunpack.c.h.b16 %v808
        %v1151 = vunpack.c.l.b16 %v809
        %v1152 = vunpack.c.h.b16 %v809
        %v1153 = vunpack.c.l.b16 %v810
        %v1154 = vunpack.c.h.b16 %v810
        %v1155 = vunpack.c.l.b16 %v811
        %v1156 = vunpack.c.h.b16 %v811
        %v1157 = vunpack.c.l.b16 %v812
        %v1158 = vunpack.c.h.b16 %v812
        %v1159 = vunpack.c.l.b16 %v813
        %v1160 = vunpack.c.h.b16 %v813
        %v1161 = vunpack.c.l.b16 %v814
        %v1162 = vunpack.c.h.b16 %v814
        %v1163 = vunpack.c.l.b16 %v815
        %v1164 = vunpack.c.h.b16 %v815
        %v1165 = vunpack.c.l.b16 %v816
        %v1166 = vunpack.c.h.b16 %v816
        %v1167 = vunpack.c.l.b16 %v817
        %v1168 = vunpack.c.h.b16 %v817
        %v1169 = vunpack.c.l.b16 %v818
        %v1170 = vunpack.c.h.b16 %v818
        %v1171 = vunpack.c.l.b16 %v819
        %v1172 = vunpack.c.h.b16 %v819
        %v1173 = vunpack.c.l.b16 %v820
        %v1174 = vunpack.c.h.b16 %v820
        %v1175 = vunpack.c.l.b16 %v821
        %v1176 = vunpack.c.h.b16 %v821
        %v1177 = vunpack.c.l.b16 %v822
        %v1178 = vunpack.c.h.b16 %v822
        %v1179 = vunpack.c.l.b16 %v823
        %v1180 = vunpack.c.h.b16 %v823
        %v1181 = vunpack.c.l.b16 %v824
        %v1182 = vunpack.c.h.b16 %v824
        %v1183 = vunpack.c.l.b16 %v825
        %v1184 = vunpack.c.h.b16 %v825
        %v1185 = vunpack.c.l.b16 %v826
        %v1186 = vunpack.c.h.b16 %v826
        %v1187 = vunpack.c.l.b16 %v827
        %v1188 = vunpack.c.h.b16 %v827
        %v1189 = vunpack.c.l.b16 %v828
        %v1190 = vunpack.c.h.b16 %v828
        %v1191 = vunpack.c.l.b16 %v829
        %v1192 = vunpack.c.h.b16 %v829
        %v1193 = vunpack.c.l.b16 %v830
        %v1194 = vunpack.c.h.b16 %v830
        %v1195 = vunpack.c.l.b16 %v831
        %v1196 = vunpack.c.h.b16 %v831
        %v1197 = vunpack.c.l.b16 %v832
        %v1198 = vunpack.c.h.b16 %v832
        %v1199 = vunpack.c.l.b16 %v833
        %v1200 = vunpack.c.h.b16 %v833
        %v1201 = vunpack.c.l.b16 %v834
        %v1202 = vunpack.c.h.b16 %v834
        %v1203 = vunpack.c.l.b16 %v835
        %v1204 = vunpack.c.h.b16 %v835
        %v1205 = vunpack.c.l.b16 %v836
        %v1206 = vunpack.c.h.b16 %v836
        %v1207 = vunpack.c.l.b16 %v837
        %v1208 = vunpack.c.h.b16 %v837
        %v1209 = vunpack.c.l.b16 %v838
        %v1210 = vunpack.c.h.b16 %v838
        %v1211 = vunpack.c.l.b16 %v839
        %v1212 = vunpack.c.h.b16 %v839
        %v1213 = vunpack.c.l.b16 %v840
        %v1214 = vunpack.c.h.b16 %v840
        %v1215 = vunpack.c.l.b16 %v841
        %v1216 = vunpack.c.h.b16 %v841
        %v1217 = vunpack.c.l.b16 %v842
        %v1218 = vunpack.c.h.b16 %v842
        %v1219 = vunpack.c.l.b16 %v843
        %v1220 = vunpack.c.h.b16 %v843
        %v1221 = vunpack.c.l.b16 %v844
        %v1222 = vunpack.c.h.b16 %v844
        %v1223 = vunpack.c.l.b16 %v845
        %v1224 = vunpack.c.h.b16 %v845
        %v1225 = vunpack.c.l.b16 %v846
        %v1226 = vunpack.c.h.b16 %v846
        %v1227 = vunpack.c.l.b16 %v847
        %v1228 = vunpack.c.h.b16 %v847
        %v1229 = vunpack.c.l.b16 %v848
        %v1230 = vunpack.c.h.b16 %v848
        %v1231 = vunpack.c.l.b16 %v849
        %v1232 = vunpack.c.h.b16 %v849
        %v1233 = vunpack.c.l.b16 %v850
        %v1234 = vunpack.c.h.b16 %v850
        %v1235 = vunpack.c.l.b16 %v851
        %v1236 = vunpack.c.h.b16 %v851
        %v1237 = vunpack.c.l.b16 %v852
        %v1238 = vunpack.c.h.b16 %v852
        %v1239 = vunpack.c.l.b16 %v853
        %v1240 = vunpack.c.h.b16 %v853
        %v1241 = vunpack.c.l.b16 %v854
        %v1242 = vunpack.c.h.b16 %v854
        %v1243 = vunpack.c.l.b16 %v855
        %v1244 = vunpack.c.h.b16 %v855
        %v1245 = vunpack.c.l.b16 %v856
        %v1246 = vunpack.c.h.b16 %v856
        %v1247 = vunpack.c.l.b16 %v857
        %v1248 = vunpack.c.h.b16 %v857
        %v1249 = vunpack.c.l.b16 %v858
        %v1250 = vunpack.c.h.b16 %v858
        %v1251 = vunpack.c.l.b16 %v859
        %v1252 = vunpack.c.h.b16 %v859
        %v1253 = vunpack.c.l.b16 %v860
        %v1254 = vunpack.c.h.b16 %v860
        %v1255 = vunpack.c.l.b16 %v861
        %v1256 = vunpack.c.h.b16 %v861
        %v1257 = vunpack.c.l.b16 %v862
        %v1258 = vunpack.c.h.b16 %v862
        %v1259 = vunpack.c.l.b16 %v863
        %v1260 = vunpack.c.h.b16 %v863
        %v1261 = vunpack.c.l.b16 %v864
        %v1262 = vunpack.c.h.b16 %v864
        %v1263 = vunpack.c.l.b16 %v865
        %v1264 = vunpack.c.h.b16 %v865
        %v1265 = vunpack.c.l.b16 %v866
        %v1266 = vunpack.c.h.b16 %v866
        %v1267 = vunpack.c.l.b16 %v867
        %v1268 = vunpack.c.h.b16 %v867
        %v1269 = vunpack.c.l.b16 %v868
        %v1270 = vunpack.c.h.b16 %v868
        %v1271 = vunpack.c.l.b16 %v869
        %v1272 = vunpack.c.h.b16 %v869
        %v1273 = vunpack.c.l.b16 %v870
        %v1274 = vunpack.c.h.b16 %v870
        %v1275 = vunpack.c.l.b16 %v871
        %v1276 = vunpack.c.h.b16 %v871
        %v1277 = vunpack.c.l.b16 %v872
        %v1278 = vunpack.c.h.b16 %v872
        %v1279 = vunpack.c.l.b16 %v873
        %v1280 = vunpack.c.h.b16 %v873
        %v1281 = vunpack.c.l.b16 %v874
        %v1282 = vunpack.c.h.b16 %v874
        %v1283 = vunpack.c.l.b16 %v875
        %v1284 = vunpack.c.h.b16 %v875
        %v1285 = vunpack.c.l.b16 %v876
        %v1286 = vunpack.c.h.b16 %v876
        %v1287 = vunpack.c.l.b16 %v877
        %v1288 = vunpack.c.h.b16 %v877
        %v1289 = vunpack.c.l.b16 %v878
        %v1290 = vunpack.c.h.b16 %v878
        %v1291 = vunpack.c.l.b16 %v879
        %v1292 = vunpack.c.h.b16 %v879
        %v1293 = vunpack.c.l.b16 %v880
        %v1294 = vunpack.c.h.b16 %v880
        %v1295 = vunpack.c.l.b16 %v881
        %v1296 = vunpack.c.h.b16 %v881
        %v1297 = vunpack.c.l.b16 %v882
        %v1298 = vunpack.c.h.b16 %v882
        %v1299 = vunpack.c.l.b16 %v883
        %v1300 = vunpack.c.h.b16 %v883
        %v1301 = vunpack.c.l.b16 %v884
        %v1302 = vunpack.c.h.b16 %v884
        %v1303 = vunpack.c.l.b16 %v885
        %v1304 = vunpack.c.h.b16 %v885
        %v1305 = vunpack.c.l.b16 %v886
        %v1306 = vunpack.c.h.b16 %v886
        %v1307 = vunpack.c.l.b16 %v887
        %v1308 = vunpack.c.h.b16 %v887
        %v1309 = vunpack.c.l.b16 %v888
        %v1310 = vunpack.c.h.b16 %v888
        %v1311 = vunpack.c.l.b16 %v889
        %v1312 = vunpack.c.h.b16 %v889
        %v1313 = vunpack.c.l.b16 %v890
        %v1314 = vunpack.c.h.b16 %v890
        %v1315 = vunpack.c.l.b16 %v891
        %v1316 = vunpack.c.h.b16 %v891
        %v1317 = vunpack.c.l.b16 %v892
        %v1318 = vunpack.c.h.b16 %v892
        %v1319 = vpack.c.b16 %v1071, %v1063
        %v1320 = vpack.c.b16 %v1072, %v1064
        %v1321 = vpack.c.b16 %v1073, %v1065
        %v1322 = vpack.c.b16 %v1074, %v1066
        %v1323 = vpack.c.b16 %v1075, %v1067
        %v1324 = vpack.c.b16 %v1076, %v1068
        %v1325 = vpack.c.b16 %v1077, %v1069
        %v1326 = vpack.c.b16 %v1078, %v1070
        %v1327 = vpack.c.b16 %v1087, %v1079
        %v1328 = vpack.c.b16 %v1088, %v1080
        %v1329 = vpack.c.b16 %v1089, %v1081
        %v1330 = vpack.c.b16 %v1090, %v1082
        %v1331 = vpack.c.b16 %v1091, %v1083
        %v1332 = vpack.c.b16 %v1092, %v1084
        %v1333 = vpack.c.b16 %v1093, %v1085
        %v1334 = vpack.c.b16 %v1094, %v1086
        %v1335 = vpack.c.b16 %v1103, %v1095
        %v1336 = vpack.c.b16 %v1104, %v1096
        %v1337 = vpack.c.b16 %v1105, %v1097
        %v1338 = vpack.c.b16 %v1106, %v1098
        %v1339 = vpack.c.b16 %v1107, %v1099
        %v1340 = vpack.c.b16 %v1108, %v1100
        %v1341 = vpack.c.b16 %v1109, %v1101
        %v1342 = vpack.c.b16 %v1110, %v1102
        %v1343 = vpack.c.b16 %v1119, %v1111
        %v1344 = vpack.c.b16 %v1120, %v1112
        %v1345 = vpack.c.b16 %v1121, %v1113
        %v1346 = vpack.c.b16 %v1122, %v1114
        %v1347 = vpack.c.b16 %v1123, %v1115
        %v1348 = vpack.c.b16 %v1124, %v1116
        %v1349 = vpack.c.b16 %v1125, %v1117
        %v1350 = vpack.c.b16 %v1126, %v1118
        %v1351 = vpack.c.b16 %v1135, %v1127
        %v1352 = vpack.c.b16 %v1136, %v1128
        %v1353 = vpack.c.b16 %v1137, %v1129
        %v1354 = vpack.c.b16 %v1138, %v1130
        %v1355 = vpack.c.b16 %v1139, %v1131
        %v1356 = vpack.c.b16 %v1140, %v1132
        %v1357 = vpack.c.b16 %v1141, %v1133
        %v1358 = vpack.c.b16 %v1142, %v1134
        %v1359 = vpack.c.b16 %v1151, %v1143
        %v1360 = vpack.c.b16 %v1152, %v1144
        %v1361 = vpack.c.b16 %v1153, %v1145
        %v1362 = vpack.c.b16 %v1154, %v1146
        %v1363 = vpack.c.b16 %v1155, %v1147
        %v1364 = vpack.c.b16 %v1156, %v1148
        %v1365 = vpack.c.b16 %v1157, %v1149
        %v1366 = vpack.c.b16 %v1158, %v1150
        %v1367 = vpack.c.b16 %v1167, %v1159
        %v1368 = vpack.c.b16 %v1168, %v1160
        %v1369 = vpack.c.b16 %v1169, %v1161
        %v1370 = vpack.c.b16 %v1170, %v1162
        %v1371 = vpack.c.b16 %v1171, %v1163
        %v1372 = vpack.c.b16 %v1172, %v1164
        %v1373 = vpack.c.b16 %v1173, %v1165
        %v1374 = vpack.c.b16 %v1174, %v1166
        %v1375 = vpack.c.b16 %v1183, %v1175
        %v1376 = vpack.c.b16 %v1184, %v1176
        %v1377 = vpack.c.b16 %v1185, %v1177
        %v1378 = vpack.c.b16 %v1186, %v1178
        %v1379 = vpack.c.b16 %v1187, %v1179
        %v1380 = vpack.c.b16 %v1188, %v1180
        %v1381 = vpack.c.b16 %v1189, %v1181
        %v1382 = vpack.c.b16 %v1190, %v1182
        %v1383 = vpack.c.b16 %v1199, %v1191
        %v1384 = vpack.c.b16 %v1200, %v1192
        %v1385 = vpack.c.b16 %v1201, %v1193
        %v1386 = vpack.c.b16 %v1202, %v1194
        %v1387 = vpack.c.b16 %v1203, %v1195
        %v1388 = vpack.c.b16 %v1204, %v1196
        %v1389 = vpack.c.b16 %v1205, %v1197
        %v1390 = vpack.c.b16 %v1206, %v1198
        %v1391 = vpack.c.b16 %v1215, %v1207
        %v1392 = vpack.c.b16 %v1216, %v1208
        %v1393 = vpack.c.b16 %v1217, %v1209
        %v1394 = vpack.c.b16 %v1218, %v1210
        %v1395 = vpack.c.b16 %v1219, %v1211
        %v1396 = vpack.c.b16 %v1220, %v1212
        %v1397 = vpack.c.b16 %v1221, %v1213
        %v1398 = vpack.c.b16 %v1222, %v1214
        %v1399 = vpack.c.b16 %v1231, %v1223
        %v1400 = vpack.c.b16 %v1232, %v1224
        %v1401 = vpack.c.b16 %v1233, %v1225
        %v1402 = vpack.c.b16 %v1234, %v1226
        %v1403 = vpack.c.b16 %v1235, %v1227
        %v1404 = vpack.c.b16 %v1236, %v1228
        %v1405 = vpack.c.b16 %v1237, %v1229
        %v1406 = vpack.c.b16 %v1238, %v1230
        %v1407 = vpack.c.b16 %v1247, %v1239
        %v1408 = vpack.c.b16 %v1248, %v1240
        %v1409 = vpack.c.b16 %v1249, %v1241
        %v1410 = vpack.c.b16 %v1250, %v1242
        %v1411 = vpack.c.b16 %v1251, %v1243
        %v1412 = vpack.c.b16 %v1252, %v1244
        %v1413 = vpack.c.b16 %v1253, %v1245
        %v1414 = vpack.c.b16 %v1254, %v1246
        %v1415 = vpack.c.b16 %v1263, %v1255
        %v1416 = vpack.c.b16 %v1264, %v1256
        %v1417 = vpack.c.b16 %v1265, %v1257
        %v1418 = vpack.c.b16 %v1266, %v1258
        %v1419 = vpack.c.b16 %v1267, %v1259
        %v1420 = vpack.c.b16 %v1268, %v1260
        %v1421 = vpack.c.b16 %v1269, %v1261
        %v1422 = vpack.c.b16 %v1270, %v1262
        %v1423 = vpack.c.b16 %v1279, %v1271
        %v1424 = vpack.c.b16 %v1280, %v1272
        %v1425 = vpack.c.b16 %v1281, %v1273
        %v1426 = vpack.c.b16 %v1282, %v1274
        %v1427 = vpack.c.b16 %v1283, %v1275
        %v1428 = vpack.c.b16 %v1284, %v1276
        %v1429 = vpack.c.b16 %v1285, %v1277
        %v1430 = vpack.c.b16 %v1286, %v1278
        %v1431 = vpack.c.b16 %v1295, %v1287
        %v1432 = vpack.c.b16 %v1296, %v1288
        %v1433 = vpack.c.b16 %v1297, %v1289
        %v1434 = vpack.c.b16 %v1298, %v1290
        %v1435 = vpack.c.b16 %v1299, %v1291
        %v1436 = vpack.c.b16 %v1300, %v1292
        %v1437 = vpack.c.b16 %v1301, %v1293
        %v1438 = vpack.c.b16 %v1302, %v1294
        %v1439 = vpack.c.b16 %v1311, %v1303
        %v1440 = vpack.c.b16 %v1312, %v1304
        %v1441 = vpack.c.b16 %v1313, %v1305
        %v1442 = vpack.c.b16 %v1314, %v1306
        %v1443 = vpack.c.b16 %v1315, %v1307
        %v1444 = vpack.c.b16 %v1316, %v1308
        %v1445 = vpack.c.b16 %v1317, %v1309
        %v1446 = vpack.c.b16 %v1318, %v1310
        %1575 = vmatprep.subr.bf16.mxu0 %v1376
        %1576 = vmatpush1.bf16.msra.mxu0 %v1375
        %1577 = vmatprep.subr.bf16.mxu0 %v1368
        %1578 = vmatpush1.bf16.msra.mxu0 %v1367
        %1579 = vmatprep.subr.bf16.mxu0 %v1360
        %1580 = vmatpush1.bf16.msra.mxu0 %v1359
        %1581 = vmatprep.subr.bf16.mxu0 %v1352
        %1582 = vmatpush1.bf16.msra.mxu0 %v1351
        %1583 = vmatprep.subr.bf16.mxu0 %v1344
        %1584 = vmatpush1.bf16.msra.mxu0 %v1343
        %1585 = vmatprep.subr.bf16.mxu0 %v1336
        %1586 = vmatpush1.bf16.msra.mxu0 %v1335
        %1587 = vmatprep.subr.bf16.mxu0 %v1328
        %1588 = vmatpush1.bf16.msra.mxu0 %v1327
        %1589 = vmatprep.subr.bf16.mxu0 %v1320
        %1590 = vmatpush1.bf16.msra.mxu0 %v1319
        %1591 = vmatprep.subr.bf16.mxu0 %v1440
        %1592 = vmatpush2.bf16.msra.mxu0 %v1439
        %1593 = vmatprep.subr.bf16.mxu0 %v1432
        %1594 = vmatpush2.bf16.msra.mxu0 %v1431
        %1595 = vmatprep.subr.bf16.mxu0 %v1424
        %1596 = vmatpush2.bf16.msra.mxu0 %v1423
        %1597 = vmatprep.subr.bf16.mxu0 %v1416
        %1598 = vmatpush2.bf16.msra.mxu0 %v1415
        %1599 = vmatprep.subr.bf16.mxu0 %v1408
        %1600 = vmatpush2.bf16.msra.mxu0 %v1407
        %1601 = vmatprep.subr.bf16.mxu0 %v1400
        %1602 = vmatpush2.bf16.msra.mxu0 %v1399
        %1603 = vmatprep.subr.bf16.mxu0 %v1392
        %1604 = vmatpush2.bf16.msra.mxu0 %v1391
        %1605 = vmatprep.subr.bf16.mxu0 %v1384
        %1606 = vmatpush2.bf16.msra.mxu0 %v1383
        %1607 = vmatprep.mubr.bf16.mxu0 %v764
        %1608 = vmatmul.mubr.bf16.gmra.mxu0 %v763
        %v1609 = vpop.f32.mrf.mxu0
        %v1610 = vadd.f32 %v898, %v1609
        %v1611 = vpop.f32.mrf.mxu0
        %v1612 = vadd.f32 %v902, %v1611
        %v1613 = vpop.f32.mrf.mxu0
        %v1614 = vpop.f32.mrf.mxu0
        %1615 = vdwg.mxu0
        %1616 = vmatprep.subr.bf16.mxu0 %v1378
        %1617 = vmatpush1.bf16.msra.mxu0 %v1377
        %1618 = vmatprep.subr.bf16.mxu0 %v1370
        %1619 = vmatpush1.bf16.msra.mxu0 %v1369
        %1620 = vmatprep.subr.bf16.mxu0 %v1362
        %1621 = vmatpush1.bf16.msra.mxu0 %v1361
        %1622 = vmatprep.subr.bf16.mxu0 %v1354
        %1623 = vmatpush1.bf16.msra.mxu0 %v1353
        %1624 = vmatprep.subr.bf16.mxu0 %v1346
        %1625 = vmatpush1.bf16.msra.mxu0 %v1345
        %1626 = vmatprep.subr.bf16.mxu0 %v1338
        %1627 = vmatpush1.bf16.msra.mxu0 %v1337
        %1628 = vmatprep.subr.bf16.mxu0 %v1330
        %1629 = vmatpush1.bf16.msra.mxu0 %v1329
        %1630 = vmatprep.subr.bf16.mxu0 %v1322
        %1631 = vmatpush1.bf16.msra.mxu0 %v1321
        %1632 = vmatprep.subr.bf16.mxu0 %v1442
        %1633 = vmatpush2.bf16.msra.mxu0 %v1441
        %1634 = vmatprep.subr.bf16.mxu0 %v1434
        %1635 = vmatpush2.bf16.msra.mxu0 %v1433
        %1636 = vmatprep.subr.bf16.mxu0 %v1426
        %1637 = vmatpush2.bf16.msra.mxu0 %v1425
        %1638 = vmatprep.subr.bf16.mxu0 %v1418
        %1639 = vmatpush2.bf16.msra.mxu0 %v1417
        %1640 = vmatprep.subr.bf16.mxu0 %v1410
        %1641 = vmatpush2.bf16.msra.mxu0 %v1409
        %1642 = vmatprep.subr.bf16.mxu0 %v1402
        %1643 = vmatpush2.bf16.msra.mxu0 %v1401
        %1644 = vmatprep.subr.bf16.mxu0 %v1394
        %1645 = vmatpush2.bf16.msra.mxu0 %v1393
        %1646 = vmatprep.subr.bf16.mxu0 %v1386
        %1647 = vmatpush2.bf16.msra.mxu0 %v1385
        %1648 = vmatprep.mubr.bf16.mxu0 %v764
        %1649 = vmatmul.mubr.bf16.gmra.mxu0 %v763
        %v1650 = vpop.f32.mrf.mxu0
        %v1651 = vadd.f32 %v906, %v1650
        %v1652 = vpop.f32.mrf.mxu0
        %v1653 = vadd.f32 %v910, %v1652
        %v1654 = vpop.f32.mrf.mxu0
        %v1655 = vpop.f32.mrf.mxu0
        %1656 = vdwg.mxu0
        %1657 = vmatprep.subr.bf16.mxu0 %v1380
        %1658 = vmatpush1.bf16.msra.mxu0 %v1379
        %1659 = vmatprep.subr.bf16.mxu0 %v1372
        %1660 = vmatpush1.bf16.msra.mxu0 %v1371
        %1661 = vmatprep.subr.bf16.mxu0 %v1364
        %1662 = vmatpush1.bf16.msra.mxu0 %v1363
        %1663 = vmatprep.subr.bf16.mxu0 %v1356
        %1664 = vmatpush1.bf16.msra.mxu0 %v1355
        %1665 = vmatprep.subr.bf16.mxu0 %v1348
        %1666 = vmatpush1.bf16.msra.mxu0 %v1347
        %1667 = vmatprep.subr.bf16.mxu0 %v1340
        %1668 = vmatpush1.bf16.msra.mxu0 %v1339
        %1669 = vmatprep.subr.bf16.mxu0 %v1332
        %1670 = vmatpush1.bf16.msra.mxu0 %v1331
        %1671 = vmatprep.subr.bf16.mxu0 %v1324
        %1672 = vmatpush1.bf16.msra.mxu0 %v1323
        %1673 = vmatprep.subr.bf16.mxu0 %v1444
        %1674 = vmatpush2.bf16.msra.mxu0 %v1443
        %1675 = vmatprep.subr.bf16.mxu0 %v1436
        %1676 = vmatpush2.bf16.msra.mxu0 %v1435
        %1677 = vmatprep.subr.bf16.mxu0 %v1428
        %1678 = vmatpush2.bf16.msra.mxu0 %v1427
        %1679 = vmatprep.subr.bf16.mxu0 %v1420
        %1680 = vmatpush2.bf16.msra.mxu0 %v1419
        %1681 = vmatprep.subr.bf16.mxu0 %v1412
        %1682 = vmatpush2.bf16.msra.mxu0 %v1411
        %1683 = vmatprep.subr.bf16.mxu0 %v1404
        %1684 = vmatpush2.bf16.msra.mxu0 %v1403
        %1685 = vmatprep.subr.bf16.mxu0 %v1396
        %1686 = vmatpush2.bf16.msra.mxu0 %v1395
        %1687 = vmatprep.subr.bf16.mxu0 %v1388
        %1688 = vmatpush2.bf16.msra.mxu0 %v1387
        %1689 = vmatprep.mubr.bf16.mxu0 %v764
        %1690 = vmatmul.mubr.bf16.gmra.mxu0 %v763
        %v1691 = vpop.f32.mrf.mxu0
        %v1692 = vadd.f32 %v914, %v1691
        %v1693 = vpop.f32.mrf.mxu0
        %v1694 = vadd.f32 %v918, %v1693
        %v1695 = vpop.f32.mrf.mxu0
        %v1696 = vpop.f32.mrf.mxu0
        %1697 = vdwg.mxu0
        %1698 = vmatprep.subr.bf16.mxu0 %v1382
        %1699 = vmatpush1.bf16.msra.mxu0 %v1381
        %1700 = vmatprep.subr.bf16.mxu0 %v1374
        %1701 = vmatpush1.bf16.msra.mxu0 %v1373
        %1702 = vmatprep.subr.bf16.mxu0 %v1366
        %1703 = vmatpush1.bf16.msra.mxu0 %v1365
        %1704 = vmatprep.subr.bf16.mxu0 %v1358
        %1705 = vmatpush1.bf16.msra.mxu0 %v1357
        %1706 = vmatprep.subr.bf16.mxu0 %v1350
        %1707 = vmatpush1.bf16.msra.mxu0 %v1349
        %1708 = vmatprep.subr.bf16.mxu0 %v1342
        %1709 = vmatpush1.bf16.msra.mxu0 %v1341
        %1710 = vmatprep.subr.bf16.mxu0 %v1334
        %1711 = vmatpush1.bf16.msra.mxu0 %v1333
        %1712 = vmatprep.subr.bf16.mxu0 %v1326
        %1713 = vmatpush1.bf16.msra.mxu0 %v1325
        %1714 = vmatprep.subr.bf16.mxu0 %v1446
        %1715 = vmatpush2.bf16.msra.mxu0 %v1445
        %1716 = vmatprep.subr.bf16.mxu0 %v1438
        %1717 = vmatpush2.bf16.msra.mxu0 %v1437
        %1718 = vmatprep.subr.bf16.mxu0 %v1430
        %1719 = vmatpush2.bf16.msra.mxu0 %v1429
        %1720 = vmatprep.subr.bf16.mxu0 %v1422
        %1721 = vmatpush2.bf16.msra.mxu0 %v1421
        %1722 = vmatprep.subr.bf16.mxu0 %v1414
        %1723 = vmatpush2.bf16.msra.mxu0 %v1413
        %1724 = vmatprep.subr.bf16.mxu0 %v1406
        %1725 = vmatpush2.bf16.msra.mxu0 %v1405
        %1726 = vmatprep.subr.bf16.mxu0 %v1398
        %1727 = vmatpush2.bf16.msra.mxu0 %v1397
        %1728 = vmatprep.subr.bf16.mxu0 %v1390
        %1729 = vmatpush2.bf16.msra.mxu0 %v1389
        %1730 = vmatprep.mubr.bf16.mxu0 %v764
        %1731 = vmatmul.mubr.bf16.gmra.mxu0 %v763
        %v1732 = vpop.f32.mrf.mxu0
        %v1733 = vadd.f32 %v922, %v1732
        %v1734 = vpop.f32.mrf.mxu0
        %v1735 = vadd.f32 %v926, %v1734
        %v1736 = vpop.f32.mrf.mxu0
        %v1737 = vpop.f32.mrf.mxu0
        %1738 = vdwg.mxu0
        %vm1739 = vcmp.ge.f32.partialorder %v1610, 0.0
        %vm1740 = vcmp.ge.f32.partialorder %v1612, 0.0
        %vm1741 = vcmp.ge.f32.partialorder %v1651, 0.0
        %vm1742 = vcmp.ge.f32.partialorder %v1653, 0.0
        %vm1743 = vcmp.ge.f32.partialorder %v1692, 0.0
        %vm1744 = vcmp.ge.f32.partialorder %v1694, 0.0
        %vm1745 = vcmp.ge.f32.partialorder %v1733, 0.0
        %vm1746 = vcmp.ge.f32.partialorder %v1735, 0.0
        %v1747 = vld [vmem:[#allocation16] sm:$0xff]
        %v1749 = vlaneseq
        %v1750 = vshrl.u32 %v1749, 7
        %v1751 = vsub.s32 0, %v1750
        %v1752 = vrot.slane %v1747, %v1751
        %v1753 = vlaneseq
        %v1754 = vshrl.u32 %v1753, 7
        %v1755 = vsub.s32 1, %v1754
        %v1756 = vrot.slane %v1747, %v1755
        %v1757 = vlaneseq
        %v1758 = vshrl.u32 %v1757, 7
        %v1759 = vsub.s32 2, %v1758
        %v1760 = vrot.slane %v1747, %v1759
        %v1761 = vlaneseq
        %v1762 = vshrl.u32 %v1761, 7
        %v1763 = vsub.s32 3, %v1762
        %v1764 = vrot.slane %v1747, %v1763
        %v1765 = vlaneseq
        %v1766 = vshrl.u32 %v1765, 7
        %v1767 = vsub.s32 4, %v1766
        %v1768 = vrot.slane %v1747, %v1767
        %v1769 = vlaneseq
        %v1770 = vshrl.u32 %v1769, 7
        %v1771 = vsub.s32 5, %v1770
        %v1772 = vrot.slane %v1747, %v1771
        %v1773 = vlaneseq
        %v1774 = vshrl.u32 %v1773, 7
        %v1775 = vsub.s32 6, %v1774
        %v1776 = vrot.slane %v1747, %v1775
        %v1777 = vlaneseq
        %v1778 = vshrl.u32 %v1777, 7
        %v1779 = vsub.s32 7, %v1778
        %v1780 = vrot.slane %v1747, %v1779
        %v1789 = vmul.f32 %v1752, %v1610
        %v1790 = vmul.f32 %v1756, %v1612
        %v1791 = vmul.f32 %v1760, %v1651
        %v1792 = vmul.f32 %v1764, %v1653
        %v1793 = vmul.f32 %v1768, %v1692
        %v1794 = vmul.f32 %v1772, %v1694
        %v1795 = vmul.f32 %v1776, %v1733
        %v1796 = vmul.f32 %v1780, %v1735
        %v1797 = vsel %vm1739, %v1610, %v1789
        %v1798 = vsel %vm1740, %v1612, %v1790
        %v1799 = vsel %vm1741, %v1651, %v1791
        %v1800 = vsel %vm1742, %v1653, %v1792
        %v1801 = vsel %vm1743, %v1692, %v1793
        %v1802 = vsel %vm1744, %v1694, %v1794
        %v1803 = vsel %vm1745, %v1733, %v1795
        %v1804 = vsel %vm1746, %v1735, %v1796
        %v1805 = vpack.c.bf16 %v1797, %v1797
        %v1806 = vpack.c.bf16 %v1798, %v1798
        %v1807 = vpack.c.bf16 %v1799, %v1799
        %v1808 = vpack.c.bf16 %v1800, %v1800
        %v1809 = vpack.c.bf16 %v1801, %v1801
        %v1810 = vpack.c.bf16 %v1802, %v1802
        %v1811 = vpack.c.bf16 %v1803, %v1803
        %v1812 = vpack.c.bf16 %v1804, %v1804
        %v1813 = vld [vmem:[#allocation17] sm:$0xff]
        %v1814 = vld [vmem:[#allocation17 + $0x8] sm:$0xff]
        %v1815 = vld [vmem:[#allocation17 + $0x10] sm:$0xff]
        %v1816 = vld [vmem:[#allocation17 + $0x18] sm:$0xff]
        %v1817 = vld [vmem:[#allocation17 + $0x20] sm:$0xff]
        %v1818 = vld [vmem:[#allocation17 + $0x28] sm:$0xff]
        %v1819 = vld [vmem:[#allocation17 + $0x30] sm:$0xff]
        %v1820 = vld [vmem:[#allocation17 + $0x38] sm:$0xff]
        %v1821 = vld [vmem:[#allocation17 + $0x40] sm:$0xff]
        %v1822 = vld [vmem:[#allocation17 + $0x48] sm:$0xff]
        %v1823 = vld [vmem:[#allocation17 + $0x50] sm:$0xff]
        %v1824 = vld [vmem:[#allocation17 + $0x58] sm:$0xff]
        %v1825 = vld [vmem:[#allocation17 + $0x60] sm:$0xff]
        %v1826 = vld [vmem:[#allocation17 + $0x68] sm:$0xff]
        %v1827 = vld [vmem:[#allocation17 + $0x70] sm:$0xff]
        %v1828 = vld [vmem:[#allocation17 + $0x78] sm:$0xff]
        %v1829 = vld [vmem:[#allocation17 + $0x80] sm:$0xff]
        %v1830 = vld [vmem:[#allocation17 + $0x88] sm:$0xff]
        %v1831 = vld [vmem:[#allocation17 + $0x90] sm:$0xff]
        %v1832 = vld [vmem:[#allocation17 + $0x98] sm:$0xff]
        %v1833 = vld [vmem:[#allocation17 + $0xa0] sm:$0xff]
        %v1834 = vld [vmem:[#allocation17 + $0xa8] sm:$0xff]
        %v1835 = vld [vmem:[#allocation17 + $0xb0] sm:$0xff]
        %v1836 = vld [vmem:[#allocation17 + $0xb8] sm:$0xff]
        %v1837 = vld [vmem:[#allocation17 + $0xc0] sm:$0xff]
        %v1838 = vld [vmem:[#allocation17 + $0xc8] sm:$0xff]
        %v1839 = vld [vmem:[#allocation17 + $0xd0] sm:$0xff]
        %v1840 = vld [vmem:[#allocation17 + $0xd8] sm:$0xff]
        %v1841 = vld [vmem:[#allocation17 + $0xe0] sm:$0xff]
        %v1842 = vld [vmem:[#allocation17 + $0xe8] sm:$0xff]
        %v1843 = vld [vmem:[#allocation17 + $0xf0] sm:$0xff]
        %v1844 = vld [vmem:[#allocation17 + $0xf8] sm:$0xff]
        %v1845 = vld [vmem:[#allocation17 + $0x100] sm:$0xff]
        %v1846 = vld [vmem:[#allocation17 + $0x108] sm:$0xff]
        %v1847 = vld [vmem:[#allocation17 + $0x110] sm:$0xff]
        %v1848 = vld [vmem:[#allocation17 + $0x118] sm:$0xff]
        %v1849 = vld [vmem:[#allocation17 + $0x120] sm:$0xff]
        %v1850 = vld [vmem:[#allocation17 + $0x128] sm:$0xff]
        %v1851 = vld [vmem:[#allocation17 + $0x130] sm:$0xff]
        %v1852 = vld [vmem:[#allocation17 + $0x138] sm:$0xff]
        %v1853 = vld [vmem:[#allocation17 + $0x140] sm:$0xff]
        %v1854 = vld [vmem:[#allocation17 + $0x148] sm:$0xff]
        %v1855 = vld [vmem:[#allocation17 + $0x150] sm:$0xff]
        %v1856 = vld [vmem:[#allocation17 + $0x158] sm:$0xff]
        %v1857 = vld [vmem:[#allocation17 + $0x160] sm:$0xff]
        %v1858 = vld [vmem:[#allocation17 + $0x168] sm:$0xff]
        %v1859 = vld [vmem:[#allocation17 + $0x170] sm:$0xff]
        %v1860 = vld [vmem:[#allocation17 + $0x178] sm:$0xff]
        %v1861 = vld [vmem:[#allocation17 + $0x180] sm:$0xff]
        %v1862 = vld [vmem:[#allocation17 + $0x188] sm:$0xff]
        %v1863 = vld [vmem:[#allocation17 + $0x190] sm:$0xff]
        %v1864 = vld [vmem:[#allocation17 + $0x198] sm:$0xff]
        %v1865 = vld [vmem:[#allocation17 + $0x1a0] sm:$0xff]
        %v1866 = vld [vmem:[#allocation17 + $0x1a8] sm:$0xff]
        %v1867 = vld [vmem:[#allocation17 + $0x1b0] sm:$0xff]
        %v1868 = vld [vmem:[#allocation17 + $0x1b8] sm:$0xff]
        %v1869 = vld [vmem:[#allocation17 + $0x1c0] sm:$0xff]
        %v1870 = vld [vmem:[#allocation17 + $0x1c8] sm:$0xff]
        %v1871 = vld [vmem:[#allocation17 + $0x1d0] sm:$0xff]
        %v1872 = vld [vmem:[#allocation17 + $0x1d8] sm:$0xff]
        %v1873 = vld [vmem:[#allocation17 + $0x1e0] sm:$0xff]
        %v1874 = vld [vmem:[#allocation17 + $0x1e8] sm:$0xff]
        %v1875 = vld [vmem:[#allocation17 + $0x1f0] sm:$0xff]
        %v1876 = vld [vmem:[#allocation17 + $0x1f8] sm:$0xff]
        %v1877 = vld [vmem:[#allocation17 + $0x200] sm:$0xff]
        %v1878 = vld [vmem:[#allocation17 + $0x208] sm:$0xff]
        %v1879 = vld [vmem:[#allocation17 + $0x210] sm:$0xff]
        %v1880 = vld [vmem:[#allocation17 + $0x218] sm:$0xff]
        %v1881 = vld [vmem:[#allocation17 + $0x220] sm:$0xff]
        %v1882 = vld [vmem:[#allocation17 + $0x228] sm:$0xff]
        %v1883 = vld [vmem:[#allocation17 + $0x230] sm:$0xff]
        %v1884 = vld [vmem:[#allocation17 + $0x238] sm:$0xff]
        %v1885 = vld [vmem:[#allocation17 + $0x240] sm:$0xff]
        %v1886 = vld [vmem:[#allocation17 + $0x248] sm:$0xff]
        %v1887 = vld [vmem:[#allocation17 + $0x250] sm:$0xff]
        %v1888 = vld [vmem:[#allocation17 + $0x258] sm:$0xff]
        %v1889 = vld [vmem:[#allocation17 + $0x260] sm:$0xff]
        %v1890 = vld [vmem:[#allocation17 + $0x268] sm:$0xff]
        %v1891 = vld [vmem:[#allocation17 + $0x270] sm:$0xff]
        %v1892 = vld [vmem:[#allocation17 + $0x278] sm:$0xff]
        %v1893 = vld [vmem:[#allocation17 + $0x280] sm:$0xff]
        %v1894 = vld [vmem:[#allocation17 + $0x288] sm:$0xff]
        %v1895 = vld [vmem:[#allocation17 + $0x290] sm:$0xff]
        %v1896 = vld [vmem:[#allocation17 + $0x298] sm:$0xff]
        %v1897 = vld [vmem:[#allocation17 + $0x2a0] sm:$0xff]
        %v1898 = vld [vmem:[#allocation17 + $0x2a8] sm:$0xff]
        %v1899 = vld [vmem:[#allocation17 + $0x2b0] sm:$0xff]
        %v1900 = vld [vmem:[#allocation17 + $0x2b8] sm:$0xff]
        %v1901 = vld [vmem:[#allocation17 + $0x2c0] sm:$0xff]
        %v1902 = vld [vmem:[#allocation17 + $0x2c8] sm:$0xff]
        %v1903 = vld [vmem:[#allocation17 + $0x2d0] sm:$0xff]
        %v1904 = vld [vmem:[#allocation17 + $0x2d8] sm:$0xff]
        %v1905 = vld [vmem:[#allocation17 + $0x2e0] sm:$0xff]
        %v1906 = vld [vmem:[#allocation17 + $0x2e8] sm:$0xff]
        %v1907 = vld [vmem:[#allocation17 + $0x2f0] sm:$0xff]
        %v1908 = vld [vmem:[#allocation17 + $0x2f8] sm:$0xff]
        %v1909 = vld [vmem:[#allocation17 + $0x300] sm:$0xff]
        %v1910 = vld [vmem:[#allocation17 + $0x308] sm:$0xff]
        %v1911 = vld [vmem:[#allocation17 + $0x310] sm:$0xff]
        %v1912 = vld [vmem:[#allocation17 + $0x318] sm:$0xff]
        %v1913 = vld [vmem:[#allocation17 + $0x320] sm:$0xff]
        %v1914 = vld [vmem:[#allocation17 + $0x328] sm:$0xff]
        %v1915 = vld [vmem:[#allocation17 + $0x330] sm:$0xff]
        %v1916 = vld [vmem:[#allocation17 + $0x338] sm:$0xff]
        %v1917 = vld [vmem:[#allocation17 + $0x340] sm:$0xff]
        %v1918 = vld [vmem:[#allocation17 + $0x348] sm:$0xff]
        %v1919 = vld [vmem:[#allocation17 + $0x350] sm:$0xff]
        %v1920 = vld [vmem:[#allocation17 + $0x358] sm:$0xff]
        %v1921 = vld [vmem:[#allocation17 + $0x360] sm:$0xff]
        %v1922 = vld [vmem:[#allocation17 + $0x368] sm:$0xff]
        %v1923 = vld [vmem:[#allocation17 + $0x370] sm:$0xff]
        %v1924 = vld [vmem:[#allocation17 + $0x378] sm:$0xff]
        %v1925 = vld [vmem:[#allocation17 + $0x380] sm:$0xff]
        %v1926 = vld [vmem:[#allocation17 + $0x388] sm:$0xff]
        %v1927 = vld [vmem:[#allocation17 + $0x390] sm:$0xff]
        %v1928 = vld [vmem:[#allocation17 + $0x398] sm:$0xff]
        %v1929 = vld [vmem:[#allocation17 + $0x3a0] sm:$0xff]
        %v1930 = vld [vmem:[#allocation17 + $0x3a8] sm:$0xff]
        %v1931 = vld [vmem:[#allocation17 + $0x3b0] sm:$0xff]
        %v1932 = vld [vmem:[#allocation17 + $0x3b8] sm:$0xff]
        %v1933 = vld [vmem:[#allocation17 + $0x3c0] sm:$0xff]
        %v1934 = vld [vmem:[#allocation17 + $0x3c8] sm:$0xff]
        %v1935 = vld [vmem:[#allocation17 + $0x3d0] sm:$0xff]
        %v1936 = vld [vmem:[#allocation17 + $0x3d8] sm:$0xff]
        %v1937 = vld [vmem:[#allocation17 + $0x3e0] sm:$0xff]
        %v1938 = vld [vmem:[#allocation17 + $0x3e8] sm:$0xff]
        %v1939 = vld [vmem:[#allocation17 + $0x3f0] sm:$0xff]
        %v1940 = vld [vmem:[#allocation17 + $0x3f8] sm:$0xff]
        %v1941 = vld [vmem:[#allocation17 + $0x400] sm:$0xff]
        %v1942 = vld [vmem:[#allocation17 + $0x408] sm:$0xff]
        %v1943 = vld [vmem:[#allocation17 + $0x410] sm:$0xff]
        %v1944 = vld [vmem:[#allocation17 + $0x418] sm:$0xff]
        %v1945 = vld [vmem:[#allocation17 + $0x420] sm:$0xff]
        %v1946 = vld [vmem:[#allocation17 + $0x428] sm:$0xff]
        %v1947 = vld [vmem:[#allocation17 + $0x430] sm:$0xff]
        %v1948 = vld [vmem:[#allocation17 + $0x438] sm:$0xff]
        %v1949 = vld [vmem:[#allocation17 + $0x440] sm:$0xff]
        %v1950 = vld [vmem:[#allocation17 + $0x448] sm:$0xff]
        %v1951 = vld [vmem:[#allocation17 + $0x450] sm:$0xff]
        %v1952 = vld [vmem:[#allocation17 + $0x458] sm:$0xff]
        %v1953 = vld [vmem:[#allocation17 + $0x460] sm:$0xff]
        %v1954 = vld [vmem:[#allocation17 + $0x468] sm:$0xff]
        %v1955 = vld [vmem:[#allocation17 + $0x470] sm:$0xff]
        %v1956 = vld [vmem:[#allocation17 + $0x478] sm:$0xff]
        %v1957 = vld [vmem:[#allocation17 + $0x480] sm:$0xff]
        %v1958 = vld [vmem:[#allocation17 + $0x488] sm:$0xff]
        %v1959 = vld [vmem:[#allocation17 + $0x490] sm:$0xff]
        %v1960 = vld [vmem:[#allocation17 + $0x498] sm:$0xff]
        %v1961 = vld [vmem:[#allocation17 + $0x4a0] sm:$0xff]
        %v1962 = vld [vmem:[#allocation17 + $0x4a8] sm:$0xff]
        %v1963 = vld [vmem:[#allocation17 + $0x4b0] sm:$0xff]
        %v1964 = vld [vmem:[#allocation17 + $0x4b8] sm:$0xff]
        %v1965 = vld [vmem:[#allocation17 + $0x4c0] sm:$0xff]
        %v1966 = vld [vmem:[#allocation17 + $0x4c8] sm:$0xff]
        %v1967 = vld [vmem:[#allocation17 + $0x4d0] sm:$0xff]
        %v1968 = vld [vmem:[#allocation17 + $0x4d8] sm:$0xff]
        %v1969 = vld [vmem:[#allocation17 + $0x4e0] sm:$0xff]
        %v1970 = vld [vmem:[#allocation17 + $0x4e8] sm:$0xff]
        %v1971 = vld [vmem:[#allocation17 + $0x4f0] sm:$0xff]
        %v1972 = vld [vmem:[#allocation17 + $0x4f8] sm:$0xff]
        %v1973 = vld [vmem:[#allocation17 + $0x500] sm:$0xff]
        %v1974 = vld [vmem:[#allocation17 + $0x508] sm:$0xff]
        %v1975 = vld [vmem:[#allocation17 + $0x510] sm:$0xff]
        %v1976 = vld [vmem:[#allocation17 + $0x518] sm:$0xff]
        %v1977 = vld [vmem:[#allocation17 + $0x520] sm:$0xff]
        %v1978 = vld [vmem:[#allocation17 + $0x528] sm:$0xff]
        %v1979 = vld [vmem:[#allocation17 + $0x530] sm:$0xff]
        %v1980 = vld [vmem:[#allocation17 + $0x538] sm:$0xff]
        %v1981 = vld [vmem:[#allocation17 + $0x540] sm:$0xff]
        %v1982 = vld [vmem:[#allocation17 + $0x548] sm:$0xff]
        %v1983 = vld [vmem:[#allocation17 + $0x550] sm:$0xff]
        %v1984 = vld [vmem:[#allocation17 + $0x558] sm:$0xff]
        %v1985 = vld [vmem:[#allocation17 + $0x560] sm:$0xff]
        %v1986 = vld [vmem:[#allocation17 + $0x568] sm:$0xff]
        %v1987 = vld [vmem:[#allocation17 + $0x570] sm:$0xff]
        %v1988 = vld [vmem:[#allocation17 + $0x578] sm:$0xff]
        %v1989 = vld [vmem:[#allocation17 + $0x580] sm:$0xff]
        %v1990 = vld [vmem:[#allocation17 + $0x588] sm:$0xff]
        %v1991 = vld [vmem:[#allocation17 + $0x590] sm:$0xff]
        %v1992 = vld [vmem:[#allocation17 + $0x598] sm:$0xff]
        %v1993 = vld [vmem:[#allocation17 + $0x5a0] sm:$0xff]
        %v1994 = vld [vmem:[#allocation17 + $0x5a8] sm:$0xff]
        %v1995 = vld [vmem:[#allocation17 + $0x5b0] sm:$0xff]
        %v1996 = vld [vmem:[#allocation17 + $0x5b8] sm:$0xff]
        %v1997 = vld [vmem:[#allocation17 + $0x5c0] sm:$0xff]
        %v1998 = vld [vmem:[#allocation17 + $0x5c8] sm:$0xff]
        %v1999 = vld [vmem:[#allocation17 + $0x5d0] sm:$0xff]
        %v2000 = vld [vmem:[#allocation17 + $0x5d8] sm:$0xff]
        %v2001 = vld [vmem:[#allocation17 + $0x5e0] sm:$0xff]
        %v2002 = vld [vmem:[#allocation17 + $0x5e8] sm:$0xff]
        %v2003 = vld [vmem:[#allocation17 + $0x5f0] sm:$0xff]
        %v2004 = vld [vmem:[#allocation17 + $0x5f8] sm:$0xff]
        %v2005 = vld [vmem:[#allocation17 + $0x600] sm:$0xff]
        %v2006 = vld [vmem:[#allocation17 + $0x608] sm:$0xff]
        %v2007 = vld [vmem:[#allocation17 + $0x610] sm:$0xff]
        %v2008 = vld [vmem:[#allocation17 + $0x618] sm:$0xff]
        %v2009 = vld [vmem:[#allocation17 + $0x620] sm:$0xff]
        %v2010 = vld [vmem:[#allocation17 + $0x628] sm:$0xff]
        %v2011 = vld [vmem:[#allocation17 + $0x630] sm:$0xff]
        %v2012 = vld [vmem:[#allocation17 + $0x638] sm:$0xff]
        %v2013 = vld [vmem:[#allocation17 + $0x640] sm:$0xff]
        %v2014 = vld [vmem:[#allocation17 + $0x648] sm:$0xff]
        %v2015 = vld [vmem:[#allocation17 + $0x650] sm:$0xff]
        %v2016 = vld [vmem:[#allocation17 + $0x658] sm:$0xff]
        %v2017 = vld [vmem:[#allocation17 + $0x660] sm:$0xff]
        %v2018 = vld [vmem:[#allocation17 + $0x668] sm:$0xff]
        %v2019 = vld [vmem:[#allocation17 + $0x670] sm:$0xff]
        %v2020 = vld [vmem:[#allocation17 + $0x678] sm:$0xff]
        %v2021 = vld [vmem:[#allocation17 + $0x680] sm:$0xff]
        %v2022 = vld [vmem:[#allocation17 + $0x688] sm:$0xff]
        %v2023 = vld [vmem:[#allocation17 + $0x690] sm:$0xff]
        %v2024 = vld [vmem:[#allocation17 + $0x698] sm:$0xff]
        %v2025 = vld [vmem:[#allocation17 + $0x6a0] sm:$0xff]
        %v2026 = vld [vmem:[#allocation17 + $0x6a8] sm:$0xff]
        %v2027 = vld [vmem:[#allocation17 + $0x6b0] sm:$0xff]
        %v2028 = vld [vmem:[#allocation17 + $0x6b8] sm:$0xff]
        %v2029 = vld [vmem:[#allocation17 + $0x6c0] sm:$0xff]
        %v2030 = vld [vmem:[#allocation17 + $0x6c8] sm:$0xff]
        %v2031 = vld [vmem:[#allocation17 + $0x6d0] sm:$0xff]
        %v2032 = vld [vmem:[#allocation17 + $0x6d8] sm:$0xff]
        %v2033 = vld [vmem:[#allocation17 + $0x6e0] sm:$0xff]
        %v2034 = vld [vmem:[#allocation17 + $0x6e8] sm:$0xff]
        %v2035 = vld [vmem:[#allocation17 + $0x6f0] sm:$0xff]
        %v2036 = vld [vmem:[#allocation17 + $0x6f8] sm:$0xff]
        %v2037 = vld [vmem:[#allocation17 + $0x700] sm:$0xff]
        %v2038 = vld [vmem:[#allocation17 + $0x708] sm:$0xff]
        %v2039 = vld [vmem:[#allocation17 + $0x710] sm:$0xff]
        %v2040 = vld [vmem:[#allocation17 + $0x718] sm:$0xff]
        %v2041 = vld [vmem:[#allocation17 + $0x720] sm:$0xff]
        %v2042 = vld [vmem:[#allocation17 + $0x728] sm:$0xff]
        %v2043 = vld [vmem:[#allocation17 + $0x730] sm:$0xff]
        %v2044 = vld [vmem:[#allocation17 + $0x738] sm:$0xff]
        %v2045 = vld [vmem:[#allocation17 + $0x740] sm:$0xff]
        %v2046 = vld [vmem:[#allocation17 + $0x748] sm:$0xff]
        %v2047 = vld [vmem:[#allocation17 + $0x750] sm:$0xff]
        %v2048 = vld [vmem:[#allocation17 + $0x758] sm:$0xff]
        %v2049 = vld [vmem:[#allocation17 + $0x760] sm:$0xff]
        %v2050 = vld [vmem:[#allocation17 + $0x768] sm:$0xff]
        %v2051 = vld [vmem:[#allocation17 + $0x770] sm:$0xff]
        %v2052 = vld [vmem:[#allocation17 + $0x778] sm:$0xff]
        %v2053 = vld [vmem:[#allocation17 + $0x780] sm:$0xff]
        %v2054 = vld [vmem:[#allocation17 + $0x788] sm:$0xff]
        %v2055 = vld [vmem:[#allocation17 + $0x790] sm:$0xff]
        %v2056 = vld [vmem:[#allocation17 + $0x798] sm:$0xff]
        %v2057 = vld [vmem:[#allocation17 + $0x7a0] sm:$0xff]
        %v2058 = vld [vmem:[#allocation17 + $0x7a8] sm:$0xff]
        %v2059 = vld [vmem:[#allocation17 + $0x7b0] sm:$0xff]
        %v2060 = vld [vmem:[#allocation17 + $0x7b8] sm:$0xff]
        %v2061 = vld [vmem:[#allocation17 + $0x7c0] sm:$0xff]
        %v2062 = vld [vmem:[#allocation17 + $0x7c8] sm:$0xff]
        %v2063 = vld [vmem:[#allocation17 + $0x7d0] sm:$0xff]
        %v2064 = vld [vmem:[#allocation17 + $0x7d8] sm:$0xff]
        %v2065 = vld [vmem:[#allocation17 + $0x7e0] sm:$0xff]
        %v2066 = vld [vmem:[#allocation17 + $0x7e8] sm:$0xff]
        %v2067 = vld [vmem:[#allocation17 + $0x7f0] sm:$0xff]
        %v2068 = vld [vmem:[#allocation17 + $0x7f8] sm:$0xff]
        %v2069 = vld [vmem:[#allocation17 + $0x800] sm:$0xff]
        %v2070 = vld [vmem:[#allocation17 + $0x808] sm:$0xff]
        %v2071 = vld [vmem:[#allocation17 + $0x810] sm:$0xff]
        %v2072 = vld [vmem:[#allocation17 + $0x818] sm:$0xff]
        %v2073 = vld [vmem:[#allocation17 + $0x820] sm:$0xff]
        %v2074 = vld [vmem:[#allocation17 + $0x828] sm:$0xff]
        %v2075 = vld [vmem:[#allocation17 + $0x830] sm:$0xff]
        %v2076 = vld [vmem:[#allocation17 + $0x838] sm:$0xff]
        %v2077 = vld [vmem:[#allocation17 + $0x840] sm:$0xff]
        %v2078 = vld [vmem:[#allocation17 + $0x848] sm:$0xff]
        %v2079 = vld [vmem:[#allocation17 + $0x850] sm:$0xff]
        %v2080 = vld [vmem:[#allocation17 + $0x858] sm:$0xff]
        %v2081 = vld [vmem:[#allocation17 + $0x860] sm:$0xff]
        %v2082 = vld [vmem:[#allocation17 + $0x868] sm:$0xff]
        %v2083 = vld [vmem:[#allocation17 + $0x870] sm:$0xff]
        %v2084 = vld [vmem:[#allocation17 + $0x878] sm:$0xff]
        %v2085 = vld [vmem:[#allocation17 + $0x880] sm:$0xff]
        %v2086 = vld [vmem:[#allocation17 + $0x888] sm:$0xff]
        %v2087 = vld [vmem:[#allocation17 + $0x890] sm:$0xff]
        %v2088 = vld [vmem:[#allocation17 + $0x898] sm:$0xff]
        %v2089 = vld [vmem:[#allocation17 + $0x8a0] sm:$0xff]
        %v2090 = vld [vmem:[#allocation17 + $0x8a8] sm:$0xff]
        %v2091 = vld [vmem:[#allocation17 + $0x8b0] sm:$0xff]
        %v2092 = vld [vmem:[#allocation17 + $0x8b8] sm:$0xff]
        %v2093 = vld [vmem:[#allocation17 + $0x8c0] sm:$0xff]
        %v2094 = vld [vmem:[#allocation17 + $0x8c8] sm:$0xff]
        %v2095 = vld [vmem:[#allocation17 + $0x8d0] sm:$0xff]
        %v2096 = vld [vmem:[#allocation17 + $0x8d8] sm:$0xff]
        %v2097 = vld [vmem:[#allocation17 + $0x8e0] sm:$0xff]
        %v2098 = vld [vmem:[#allocation17 + $0x8e8] sm:$0xff]
        %v2099 = vld [vmem:[#allocation17 + $0x8f0] sm:$0xff]
        %v2100 = vld [vmem:[#allocation17 + $0x8f8] sm:$0xff]
        %v2101 = vld [vmem:[#allocation17 + $0x900] sm:$0xff]
        %v2102 = vld [vmem:[#allocation17 + $0x908] sm:$0xff]
        %v2103 = vld [vmem:[#allocation17 + $0x910] sm:$0xff]
        %v2104 = vld [vmem:[#allocation17 + $0x918] sm:$0xff]
        %v2105 = vld [vmem:[#allocation17 + $0x920] sm:$0xff]
        %v2106 = vld [vmem:[#allocation17 + $0x928] sm:$0xff]
        %v2107 = vld [vmem:[#allocation17 + $0x930] sm:$0xff]
        %v2108 = vld [vmem:[#allocation17 + $0x938] sm:$0xff]
        %v2109 = vld [vmem:[#allocation17 + $0x940] sm:$0xff]
        %v2110 = vld [vmem:[#allocation17 + $0x948] sm:$0xff]
        %v2111 = vld [vmem:[#allocation17 + $0x950] sm:$0xff]
        %v2112 = vld [vmem:[#allocation17 + $0x958] sm:$0xff]
        %v2113 = vld [vmem:[#allocation17 + $0x960] sm:$0xff]
        %v2114 = vld [vmem:[#allocation17 + $0x968] sm:$0xff]
        %v2115 = vld [vmem:[#allocation17 + $0x970] sm:$0xff]
        %v2116 = vld [vmem:[#allocation17 + $0x978] sm:$0xff]
        %v2117 = vld [vmem:[#allocation17 + $0x980] sm:$0xff]
        %v2118 = vld [vmem:[#allocation17 + $0x988] sm:$0xff]
        %v2119 = vld [vmem:[#allocation17 + $0x990] sm:$0xff]
        %v2120 = vld [vmem:[#allocation17 + $0x998] sm:$0xff]
        %v2121 = vld [vmem:[#allocation17 + $0x9a0] sm:$0xff]
        %v2122 = vld [vmem:[#allocation17 + $0x9a8] sm:$0xff]
        %v2123 = vld [vmem:[#allocation17 + $0x9b0] sm:$0xff]
        %v2124 = vld [vmem:[#allocation17 + $0x9b8] sm:$0xff]
        %v2125 = vld [vmem:[#allocation17 + $0x9c0] sm:$0xff]
        %v2126 = vld [vmem:[#allocation17 + $0x9c8] sm:$0xff]
        %v2127 = vld [vmem:[#allocation17 + $0x9d0] sm:$0xff]
        %v2128 = vld [vmem:[#allocation17 + $0x9d8] sm:$0xff]
        %v2129 = vld [vmem:[#allocation17 + $0x9e0] sm:$0xff]
        %v2130 = vld [vmem:[#allocation17 + $0x9e8] sm:$0xff]
        %v2131 = vld [vmem:[#allocation17 + $0x9f0] sm:$0xff]
        %v2132 = vld [vmem:[#allocation17 + $0x9f8] sm:$0xff]
        %v2133 = vld [vmem:[#allocation17 + $0xa00] sm:$0xff]
        %v2134 = vld [vmem:[#allocation17 + $0xa08] sm:$0xff]
        %v2135 = vld [vmem:[#allocation17 + $0xa10] sm:$0xff]
        %v2136 = vld [vmem:[#allocation17 + $0xa18] sm:$0xff]
        %v2137 = vld [vmem:[#allocation17 + $0xa20] sm:$0xff]
        %v2138 = vld [vmem:[#allocation17 + $0xa28] sm:$0xff]
        %v2139 = vld [vmem:[#allocation17 + $0xa30] sm:$0xff]
        %v2140 = vld [vmem:[#allocation17 + $0xa38] sm:$0xff]
        %v2141 = vld [vmem:[#allocation17 + $0xa40] sm:$0xff]
        %v2142 = vld [vmem:[#allocation17 + $0xa48] sm:$0xff]
        %v2143 = vld [vmem:[#allocation17 + $0xa50] sm:$0xff]
        %v2144 = vld [vmem:[#allocation17 + $0xa58] sm:$0xff]
        %v2145 = vld [vmem:[#allocation17 + $0xa60] sm:$0xff]
        %v2146 = vld [vmem:[#allocation17 + $0xa68] sm:$0xff]
        %v2147 = vld [vmem:[#allocation17 + $0xa70] sm:$0xff]
        %v2148 = vld [vmem:[#allocation17 + $0xa78] sm:$0xff]
        %v2149 = vld [vmem:[#allocation17 + $0xa80] sm:$0xff]
        %v2150 = vld [vmem:[#allocation17 + $0xa88] sm:$0xff]
        %v2151 = vld [vmem:[#allocation17 + $0xa90] sm:$0xff]
        %v2152 = vld [vmem:[#allocation17 + $0xa98] sm:$0xff]
        %v2153 = vld [vmem:[#allocation17 + $0xaa0] sm:$0xff]
        %v2154 = vld [vmem:[#allocation17 + $0xaa8] sm:$0xff]
        %v2155 = vld [vmem:[#allocation17 + $0xab0] sm:$0xff]
        %v2156 = vld [vmem:[#allocation17 + $0xab8] sm:$0xff]
        %v2157 = vld [vmem:[#allocation17 + $0xac0] sm:$0xff]
        %v2158 = vld [vmem:[#allocation17 + $0xac8] sm:$0xff]
        %v2159 = vld [vmem:[#allocation17 + $0xad0] sm:$0xff]
        %v2160 = vld [vmem:[#allocation17 + $0xad8] sm:$0xff]
        %v2161 = vld [vmem:[#allocation17 + $0xae0] sm:$0xff]
        %v2162 = vld [vmem:[#allocation17 + $0xae8] sm:$0xff]
        %v2163 = vld [vmem:[#allocation17 + $0xaf0] sm:$0xff]
        %v2164 = vld [vmem:[#allocation17 + $0xaf8] sm:$0xff]
        %v2165 = vld [vmem:[#allocation17 + $0xb00] sm:$0xff]
        %v2166 = vld [vmem:[#allocation17 + $0xb08] sm:$0xff]
        %v2167 = vld [vmem:[#allocation17 + $0xb10] sm:$0xff]
        %v2168 = vld [vmem:[#allocation17 + $0xb18] sm:$0xff]
        %v2169 = vld [vmem:[#allocation17 + $0xb20] sm:$0xff]
        %v2170 = vld [vmem:[#allocation17 + $0xb28] sm:$0xff]
        %v2171 = vld [vmem:[#allocation17 + $0xb30] sm:$0xff]
        %v2172 = vld [vmem:[#allocation17 + $0xb38] sm:$0xff]
        %v2173 = vld [vmem:[#allocation17 + $0xb40] sm:$0xff]
        %v2174 = vld [vmem:[#allocation17 + $0xb48] sm:$0xff]
        %v2175 = vld [vmem:[#allocation17 + $0xb50] sm:$0xff]
        %v2176 = vld [vmem:[#allocation17 + $0xb58] sm:$0xff]
        %v2177 = vld [vmem:[#allocation17 + $0xb60] sm:$0xff]
        %v2178 = vld [vmem:[#allocation17 + $0xb68] sm:$0xff]
        %v2179 = vld [vmem:[#allocation17 + $0xb70] sm:$0xff]
        %v2180 = vld [vmem:[#allocation17 + $0xb78] sm:$0xff]
        %v2181 = vld [vmem:[#allocation17 + $0xb80] sm:$0xff]
        %v2182 = vld [vmem:[#allocation17 + $0xb88] sm:$0xff]
        %v2183 = vld [vmem:[#allocation17 + $0xb90] sm:$0xff]
        %v2184 = vld [vmem:[#allocation17 + $0xb98] sm:$0xff]
        %v2185 = vld [vmem:[#allocation17 + $0xba0] sm:$0xff]
        %v2186 = vld [vmem:[#allocation17 + $0xba8] sm:$0xff]
        %v2187 = vld [vmem:[#allocation17 + $0xbb0] sm:$0xff]
        %v2188 = vld [vmem:[#allocation17 + $0xbb8] sm:$0xff]
        %v2189 = vld [vmem:[#allocation17 + $0xbc0] sm:$0xff]
        %v2190 = vld [vmem:[#allocation17 + $0xbc8] sm:$0xff]
        %v2191 = vld [vmem:[#allocation17 + $0xbd0] sm:$0xff]
        %v2192 = vld [vmem:[#allocation17 + $0xbd8] sm:$0xff]
        %v2193 = vld [vmem:[#allocation17 + $0xbe0] sm:$0xff]
        %v2194 = vld [vmem:[#allocation17 + $0xbe8] sm:$0xff]
        %v2195 = vld [vmem:[#allocation17 + $0xbf0] sm:$0xff]
        %v2196 = vld [vmem:[#allocation17 + $0xbf8] sm:$0xff]
        %v2197 = vld [vmem:[#allocation17 + $0xc00] sm:$0xff]
        %v2198 = vld [vmem:[#allocation17 + $0xc08] sm:$0xff]
        %v2199 = vld [vmem:[#allocation17 + $0xc10] sm:$0xff]
        %v2200 = vld [vmem:[#allocation17 + $0xc18] sm:$0xff]
        %v2201 = vld [vmem:[#allocation17 + $0xc20] sm:$0xff]
        %v2202 = vld [vmem:[#allocation17 + $0xc28] sm:$0xff]
        %v2203 = vld [vmem:[#allocation17 + $0xc30] sm:$0xff]
        %v2204 = vld [vmem:[#allocation17 + $0xc38] sm:$0xff]
        %v2205 = vld [vmem:[#allocation17 + $0xc40] sm:$0xff]
        %v2206 = vld [vmem:[#allocation17 + $0xc48] sm:$0xff]
        %v2207 = vld [vmem:[#allocation17 + $0xc50] sm:$0xff]
        %v2208 = vld [vmem:[#allocation17 + $0xc58] sm:$0xff]
        %v2209 = vld [vmem:[#allocation17 + $0xc60] sm:$0xff]
        %v2210 = vld [vmem:[#allocation17 + $0xc68] sm:$0xff]
        %v2211 = vld [vmem:[#allocation17 + $0xc70] sm:$0xff]
        %v2212 = vld [vmem:[#allocation17 + $0xc78] sm:$0xff]
        %v2213 = vld [vmem:[#allocation17 + $0xc80] sm:$0xff]
        %v2214 = vld [vmem:[#allocation17 + $0xc88] sm:$0xff]
        %v2215 = vld [vmem:[#allocation17 + $0xc90] sm:$0xff]
        %v2216 = vld [vmem:[#allocation17 + $0xc98] sm:$0xff]
        %v2217 = vld [vmem:[#allocation17 + $0xca0] sm:$0xff]
        %v2218 = vld [vmem:[#allocation17 + $0xca8] sm:$0xff]
        %v2219 = vld [vmem:[#allocation17 + $0xcb0] sm:$0xff]
        %v2220 = vld [vmem:[#allocation17 + $0xcb8] sm:$0xff]
        %v2221 = vld [vmem:[#allocation17 + $0xcc0] sm:$0xff]
        %v2222 = vld [vmem:[#allocation17 + $0xcc8] sm:$0xff]
        %v2223 = vld [vmem:[#allocation17 + $0xcd0] sm:$0xff]
        %v2224 = vld [vmem:[#allocation17 + $0xcd8] sm:$0xff]
        %v2225 = vld [vmem:[#allocation17 + $0xce0] sm:$0xff]
        %v2226 = vld [vmem:[#allocation17 + $0xce8] sm:$0xff]
        %v2227 = vld [vmem:[#allocation17 + $0xcf0] sm:$0xff]
        %v2228 = vld [vmem:[#allocation17 + $0xcf8] sm:$0xff]
        %v2229 = vld [vmem:[#allocation17 + $0xd00] sm:$0xff]
        %v2230 = vld [vmem:[#allocation17 + $0xd08] sm:$0xff]
        %v2231 = vld [vmem:[#allocation17 + $0xd10] sm:$0xff]
        %v2232 = vld [vmem:[#allocation17 + $0xd18] sm:$0xff]
        %v2233 = vld [vmem:[#allocation17 + $0xd20] sm:$0xff]
        %v2234 = vld [vmem:[#allocation17 + $0xd28] sm:$0xff]
        %v2235 = vld [vmem:[#allocation17 + $0xd30] sm:$0xff]
        %v2236 = vld [vmem:[#allocation17 + $0xd38] sm:$0xff]
        %v2237 = vld [vmem:[#allocation17 + $0xd40] sm:$0xff]
        %v2238 = vld [vmem:[#allocation17 + $0xd48] sm:$0xff]
        %v2239 = vld [vmem:[#allocation17 + $0xd50] sm:$0xff]
        %v2240 = vld [vmem:[#allocation17 + $0xd58] sm:$0xff]
        %v2241 = vld [vmem:[#allocation17 + $0xd60] sm:$0xff]
        %v2242 = vld [vmem:[#allocation17 + $0xd68] sm:$0xff]
        %v2243 = vld [vmem:[#allocation17 + $0xd70] sm:$0xff]
        %v2244 = vld [vmem:[#allocation17 + $0xd78] sm:$0xff]
        %v2245 = vld [vmem:[#allocation17 + $0xd80] sm:$0xff]
        %v2246 = vld [vmem:[#allocation17 + $0xd88] sm:$0xff]
        %v2247 = vld [vmem:[#allocation17 + $0xd90] sm:$0xff]
        %v2248 = vld [vmem:[#allocation17 + $0xd98] sm:$0xff]
        %v2249 = vld [vmem:[#allocation17 + $0xda0] sm:$0xff]
        %v2250 = vld [vmem:[#allocation17 + $0xda8] sm:$0xff]
        %v2251 = vld [vmem:[#allocation17 + $0xdb0] sm:$0xff]
        %v2252 = vld [vmem:[#allocation17 + $0xdb8] sm:$0xff]
        %v2253 = vld [vmem:[#allocation17 + $0xdc0] sm:$0xff]
        %v2254 = vld [vmem:[#allocation17 + $0xdc8] sm:$0xff]
        %v2255 = vld [vmem:[#allocation17 + $0xdd0] sm:$0xff]
        %v2256 = vld [vmem:[#allocation17 + $0xdd8] sm:$0xff]
        %v2257 = vld [vmem:[#allocation17 + $0xde0] sm:$0xff]
        %v2258 = vld [vmem:[#allocation17 + $0xde8] sm:$0xff]
        %v2259 = vld [vmem:[#allocation17 + $0xdf0] sm:$0xff]
        %v2260 = vld [vmem:[#allocation17 + $0xdf8] sm:$0xff]
        %v2261 = vld [vmem:[#allocation17 + $0xe00] sm:$0xff]
        %v2262 = vld [vmem:[#allocation17 + $0xe08] sm:$0xff]
        %v2263 = vld [vmem:[#allocation17 + $0xe10] sm:$0xff]
        %v2264 = vld [vmem:[#allocation17 + $0xe18] sm:$0xff]
        %v2265 = vld [vmem:[#allocation17 + $0xe20] sm:$0xff]
        %v2266 = vld [vmem:[#allocation17 + $0xe28] sm:$0xff]
        %v2267 = vld [vmem:[#allocation17 + $0xe30] sm:$0xff]
        %v2268 = vld [vmem:[#allocation17 + $0xe38] sm:$0xff]
        %v2269 = vld [vmem:[#allocation17 + $0xe40] sm:$0xff]
        %v2270 = vld [vmem:[#allocation17 + $0xe48] sm:$0xff]
        %v2271 = vld [vmem:[#allocation17 + $0xe50] sm:$0xff]
        %v2272 = vld [vmem:[#allocation17 + $0xe58] sm:$0xff]
        %v2273 = vld [vmem:[#allocation17 + $0xe60] sm:$0xff]
        %v2274 = vld [vmem:[#allocation17 + $0xe68] sm:$0xff]
        %v2275 = vld [vmem:[#allocation17 + $0xe70] sm:$0xff]
        %v2276 = vld [vmem:[#allocation17 + $0xe78] sm:$0xff]
        %v2277 = vld [vmem:[#allocation17 + $0xe80] sm:$0xff]
        %v2278 = vld [vmem:[#allocation17 + $0xe88] sm:$0xff]
        %v2279 = vld [vmem:[#allocation17 + $0xe90] sm:$0xff]
        %v2280 = vld [vmem:[#allocation17 + $0xe98] sm:$0xff]
        %v2281 = vld [vmem:[#allocation17 + $0xea0] sm:$0xff]
        %v2282 = vld [vmem:[#allocation17 + $0xea8] sm:$0xff]
        %v2283 = vld [vmem:[#allocation17 + $0xeb0] sm:$0xff]
        %v2284 = vld [vmem:[#allocation17 + $0xeb8] sm:$0xff]
        %v2285 = vld [vmem:[#allocation17 + $0xec0] sm:$0xff]
        %v2286 = vld [vmem:[#allocation17 + $0xec8] sm:$0xff]
        %v2287 = vld [vmem:[#allocation17 + $0xed0] sm:$0xff]
        %v2288 = vld [vmem:[#allocation17 + $0xed8] sm:$0xff]
        %v2289 = vld [vmem:[#allocation17 + $0xee0] sm:$0xff]
        %v2290 = vld [vmem:[#allocation17 + $0xee8] sm:$0xff]
        %v2291 = vld [vmem:[#allocation17 + $0xef0] sm:$0xff]
        %v2292 = vld [vmem:[#allocation17 + $0xef8] sm:$0xff]
        %v2293 = vld [vmem:[#allocation17 + $0xf00] sm:$0xff]
        %v2294 = vld [vmem:[#allocation17 + $0xf08] sm:$0xff]
        %v2295 = vld [vmem:[#allocation17 + $0xf10] sm:$0xff]
        %v2296 = vld [vmem:[#allocation17 + $0xf18] sm:$0xff]
        %v2297 = vld [vmem:[#allocation17 + $0xf20] sm:$0xff]
        %v2298 = vld [vmem:[#allocation17 + $0xf28] sm:$0xff]
        %v2299 = vld [vmem:[#allocation17 + $0xf30] sm:$0xff]
        %v2300 = vld [vmem:[#allocation17 + $0xf38] sm:$0xff]
        %v2301 = vld [vmem:[#allocation17 + $0xf40] sm:$0xff]
        %v2302 = vld [vmem:[#allocation17 + $0xf48] sm:$0xff]
        %v2303 = vld [vmem:[#allocation17 + $0xf50] sm:$0xff]
        %v2304 = vld [vmem:[#allocation17 + $0xf58] sm:$0xff]
        %v2305 = vld [vmem:[#allocation17 + $0xf60] sm:$0xff]
        %v2306 = vld [vmem:[#allocation17 + $0xf68] sm:$0xff]
        %v2307 = vld [vmem:[#allocation17 + $0xf70] sm:$0xff]
        %v2308 = vld [vmem:[#allocation17 + $0xf78] sm:$0xff]
        %v2309 = vld [vmem:[#allocation17 + $0xf80] sm:$0xff]
        %v2310 = vld [vmem:[#allocation17 + $0xf88] sm:$0xff]
        %v2311 = vld [vmem:[#allocation17 + $0xf90] sm:$0xff]
        %v2312 = vld [vmem:[#allocation17 + $0xf98] sm:$0xff]
        %v2313 = vld [vmem:[#allocation17 + $0xfa0] sm:$0xff]
        %v2314 = vld [vmem:[#allocation17 + $0xfa8] sm:$0xff]
        %v2315 = vld [vmem:[#allocation17 + $0xfb0] sm:$0xff]
        %v2316 = vld [vmem:[#allocation17 + $0xfb8] sm:$0xff]
        %v2317 = vld [vmem:[#allocation17 + $0xfc0] sm:$0xff]
        %v2318 = vld [vmem:[#allocation17 + $0xfc8] sm:$0xff]
        %v2319 = vld [vmem:[#allocation17 + $0xfd0] sm:$0xff]
        %v2320 = vld [vmem:[#allocation17 + $0xfd8] sm:$0xff]
        %v2321 = vld [vmem:[#allocation17 + $0xfe0] sm:$0xff]
        %v2322 = vld [vmem:[#allocation17 + $0xfe8] sm:$0xff]
        %v2323 = vld [vmem:[#allocation17 + $0xff0] sm:$0xff]
        %v2324 = vld [vmem:[#allocation17 + $0xff8] sm:$0xff]
        %v2325 = vld [vmem:[#allocation19] sm:$0xff]
        %v2327 = vlaneseq
        %v2328 = vshrl.u32 %v2327, 7
        %v2329 = vsub.s32 0, %v2328
        %v2330 = vrot.slane %v2325, %v2329
        %v2331 = vlaneseq
        %v2332 = vshrl.u32 %v2331, 7
        %v2333 = vsub.s32 1, %v2332
        %v2334 = vrot.slane %v2325, %v2333
        %v2335 = vlaneseq
        %v2336 = vshrl.u32 %v2335, 7
        %v2337 = vsub.s32 2, %v2336
        %v2338 = vrot.slane %v2325, %v2337
        %v2339 = vlaneseq
        %v2340 = vshrl.u32 %v2339, 7
        %v2341 = vsub.s32 3, %v2340
        %v2342 = vrot.slane %v2325, %v2341
        %v2343 = vlaneseq
        %v2344 = vshrl.u32 %v2343, 7
        %v2345 = vsub.s32 4, %v2344
        %v2346 = vrot.slane %v2325, %v2345
        %v2347 = vlaneseq
        %v2348 = vshrl.u32 %v2347, 7
        %v2349 = vsub.s32 5, %v2348
        %v2350 = vrot.slane %v2325, %v2349
        %v2351 = vlaneseq
        %v2352 = vshrl.u32 %v2351, 7
        %v2353 = vsub.s32 6, %v2352
        %v2354 = vrot.slane %v2325, %v2353
        %v2355 = vlaneseq
        %v2356 = vshrl.u32 %v2355, 7
        %v2357 = vsub.s32 7, %v2356
        %v2358 = vrot.slane %v2325, %v2357
        %v2879 = vunpack.c.l.b16 %v1813
        %v2880 = vunpack.c.h.b16 %v1813
        %v2881 = vunpack.c.l.b16 %v1814
        %v2882 = vunpack.c.h.b16 %v1814
        %v2883 = vunpack.c.l.b16 %v1815
        %v2884 = vunpack.c.h.b16 %v1815
        %v2885 = vunpack.c.l.b16 %v1816
        %v2886 = vunpack.c.h.b16 %v1816
        %v2887 = vunpack.c.l.b16 %v1817
        %v2888 = vunpack.c.h.b16 %v1817
        %v2889 = vunpack.c.l.b16 %v1818
        %v2890 = vunpack.c.h.b16 %v1818
        %v2891 = vunpack.c.l.b16 %v1819
        %v2892 = vunpack.c.h.b16 %v1819
        %v2893 = vunpack.c.l.b16 %v1820
        %v2894 = vunpack.c.h.b16 %v1820
        %v2895 = vunpack.c.l.b16 %v1821
        %v2896 = vunpack.c.h.b16 %v1821
        %v2897 = vunpack.c.l.b16 %v1822
        %v2898 = vunpack.c.h.b16 %v1822
        %v2899 = vunpack.c.l.b16 %v1823
        %v2900 = vunpack.c.h.b16 %v1823
        %v2901 = vunpack.c.l.b16 %v1824
        %v2902 = vunpack.c.h.b16 %v1824
        %v2903 = vunpack.c.l.b16 %v1825
        %v2904 = vunpack.c.h.b16 %v1825
        %v2905 = vunpack.c.l.b16 %v1826
        %v2906 = vunpack.c.h.b16 %v1826
        %v2907 = vunpack.c.l.b16 %v1827
        %v2908 = vunpack.c.h.b16 %v1827
        %v2909 = vunpack.c.l.b16 %v1828
        %v2910 = vunpack.c.h.b16 %v1828
        %v2911 = vunpack.c.l.b16 %v1829
        %v2912 = vunpack.c.h.b16 %v1829
        %v2913 = vunpack.c.l.b16 %v1830
        %v2914 = vunpack.c.h.b16 %v1830
        %v2915 = vunpack.c.l.b16 %v1831
        %v2916 = vunpack.c.h.b16 %v1831
        %v2917 = vunpack.c.l.b16 %v1832
        %v2918 = vunpack.c.h.b16 %v1832
        %v2919 = vunpack.c.l.b16 %v1833
        %v2920 = vunpack.c.h.b16 %v1833
        %v2921 = vunpack.c.l.b16 %v1834
        %v2922 = vunpack.c.h.b16 %v1834
        %v2923 = vunpack.c.l.b16 %v1835
        %v2924 = vunpack.c.h.b16 %v1835
        %v2925 = vunpack.c.l.b16 %v1836
        %v2926 = vunpack.c.h.b16 %v1836
        %v2927 = vunpack.c.l.b16 %v1837
        %v2928 = vunpack.c.h.b16 %v1837
        %v2929 = vunpack.c.l.b16 %v1838
        %v2930 = vunpack.c.h.b16 %v1838
        %v2931 = vunpack.c.l.b16 %v1839
        %v2932 = vunpack.c.h.b16 %v1839
        %v2933 = vunpack.c.l.b16 %v1840
        %v2934 = vunpack.c.h.b16 %v1840
        %v2935 = vunpack.c.l.b16 %v1841
        %v2936 = vunpack.c.h.b16 %v1841
        %v2937 = vunpack.c.l.b16 %v1842
        %v2938 = vunpack.c.h.b16 %v1842
        %v2939 = vunpack.c.l.b16 %v1843
        %v2940 = vunpack.c.h.b16 %v1843
        %v2941 = vunpack.c.l.b16 %v1844
        %v2942 = vunpack.c.h.b16 %v1844
        %v2943 = vunpack.c.l.b16 %v1845
        %v2944 = vunpack.c.h.b16 %v1845
        %v2945 = vunpack.c.l.b16 %v1846
        %v2946 = vunpack.c.h.b16 %v1846
        %v2947 = vunpack.c.l.b16 %v1847
        %v2948 = vunpack.c.h.b16 %v1847
        %v2949 = vunpack.c.l.b16 %v1848
        %v2950 = vunpack.c.h.b16 %v1848
        %v2951 = vunpack.c.l.b16 %v1849
        %v2952 = vunpack.c.h.b16 %v1849
        %v2953 = vunpack.c.l.b16 %v1850
        %v2954 = vunpack.c.h.b16 %v1850
        %v2955 = vunpack.c.l.b16 %v1851
        %v2956 = vunpack.c.h.b16 %v1851
        %v2957 = vunpack.c.l.b16 %v1852
        %v2958 = vunpack.c.h.b16 %v1852
        %v2959 = vunpack.c.l.b16 %v1853
        %v2960 = vunpack.c.h.b16 %v1853
        %v2961 = vunpack.c.l.b16 %v1854
        %v2962 = vunpack.c.h.b16 %v1854
        %v2963 = vunpack.c.l.b16 %v1855
        %v2964 = vunpack.c.h.b16 %v1855
        %v2965 = vunpack.c.l.b16 %v1856
        %v2966 = vunpack.c.h.b16 %v1856
        %v2967 = vunpack.c.l.b16 %v1857
        %v2968 = vunpack.c.h.b16 %v1857
        %v2969 = vunpack.c.l.b16 %v1858
        %v2970 = vunpack.c.h.b16 %v1858
        %v2971 = vunpack.c.l.b16 %v1859
        %v2972 = vunpack.c.h.b16 %v1859
        %v2973 = vunpack.c.l.b16 %v1860
        %v2974 = vunpack.c.h.b16 %v1860
        %v2975 = vunpack.c.l.b16 %v1861
        %v2976 = vunpack.c.h.b16 %v1861
        %v2977 = vunpack.c.l.b16 %v1862
        %v2978 = vunpack.c.h.b16 %v1862
        %v2979 = vunpack.c.l.b16 %v1863
        %v2980 = vunpack.c.h.b16 %v1863
        %v2981 = vunpack.c.l.b16 %v1864
        %v2982 = vunpack.c.h.b16 %v1864
        %v2983 = vunpack.c.l.b16 %v1865
        %v2984 = vunpack.c.h.b16 %v1865
        %v2985 = vunpack.c.l.b16 %v1866
        %v2986 = vunpack.c.h.b16 %v1866
        %v2987 = vunpack.c.l.b16 %v1867
        %v2988 = vunpack.c.h.b16 %v1867
        %v2989 = vunpack.c.l.b16 %v1868
        %v2990 = vunpack.c.h.b16 %v1868
        %v2991 = vunpack.c.l.b16 %v1869
        %v2992 = vunpack.c.h.b16 %v1869
        %v2993 = vunpack.c.l.b16 %v1870
        %v2994 = vunpack.c.h.b16 %v1870
        %v2995 = vunpack.c.l.b16 %v1871
        %v2996 = vunpack.c.h.b16 %v1871
        %v2997 = vunpack.c.l.b16 %v1872
        %v2998 = vunpack.c.h.b16 %v1872
        %v2999 = vunpack.c.l.b16 %v1873
        %v3000 = vunpack.c.h.b16 %v1873
        %v3001 = vunpack.c.l.b16 %v1874
        %v3002 = vunpack.c.h.b16 %v1874
        %v3003 = vunpack.c.l.b16 %v1875
        %v3004 = vunpack.c.h.b16 %v1875
        %v3005 = vunpack.c.l.b16 %v1876
        %v3006 = vunpack.c.h.b16 %v1876
        %v3007 = vunpack.c.l.b16 %v1877
        %v3008 = vunpack.c.h.b16 %v1877
        %v3009 = vunpack.c.l.b16 %v1878
        %v3010 = vunpack.c.h.b16 %v1878
        %v3011 = vunpack.c.l.b16 %v1879
        %v3012 = vunpack.c.h.b16 %v1879
        %v3013 = vunpack.c.l.b16 %v1880
        %v3014 = vunpack.c.h.b16 %v1880
        %v3015 = vunpack.c.l.b16 %v1881
        %v3016 = vunpack.c.h.b16 %v1881
        %v3017 = vunpack.c.l.b16 %v1882
        %v3018 = vunpack.c.h.b16 %v1882
        %v3019 = vunpack.c.l.b16 %v1883
        %v3020 = vunpack.c.h.b16 %v1883
        %v3021 = vunpack.c.l.b16 %v1884
        %v3022 = vunpack.c.h.b16 %v1884
        %v3023 = vunpack.c.l.b16 %v1885
        %v3024 = vunpack.c.h.b16 %v1885
        %v3025 = vunpack.c.l.b16 %v1886
        %v3026 = vunpack.c.h.b16 %v1886
        %v3027 = vunpack.c.l.b16 %v1887
        %v3028 = vunpack.c.h.b16 %v1887
        %v3029 = vunpack.c.l.b16 %v1888
        %v3030 = vunpack.c.h.b16 %v1888
        %v3031 = vunpack.c.l.b16 %v1889
        %v3032 = vunpack.c.h.b16 %v1889
        %v3033 = vunpack.c.l.b16 %v1890
        %v3034 = vunpack.c.h.b16 %v1890
        %v3035 = vunpack.c.l.b16 %v1891
        %v3036 = vunpack.c.h.b16 %v1891
        %v3037 = vunpack.c.l.b16 %v1892
        %v3038 = vunpack.c.h.b16 %v1892
        %v3039 = vunpack.c.l.b16 %v1893
        %v3040 = vunpack.c.h.b16 %v1893
        %v3041 = vunpack.c.l.b16 %v1894
        %v3042 = vunpack.c.h.b16 %v1894
        %v3043 = vunpack.c.l.b16 %v1895
        %v3044 = vunpack.c.h.b16 %v1895
        %v3045 = vunpack.c.l.b16 %v1896
        %v3046 = vunpack.c.h.b16 %v1896
        %v3047 = vunpack.c.l.b16 %v1897
        %v3048 = vunpack.c.h.b16 %v1897
        %v3049 = vunpack.c.l.b16 %v1898
        %v3050 = vunpack.c.h.b16 %v1898
        %v3051 = vunpack.c.l.b16 %v1899
        %v3052 = vunpack.c.h.b16 %v1899
        %v3053 = vunpack.c.l.b16 %v1900
        %v3054 = vunpack.c.h.b16 %v1900
        %v3055 = vunpack.c.l.b16 %v1901
        %v3056 = vunpack.c.h.b16 %v1901
        %v3057 = vunpack.c.l.b16 %v1902
        %v3058 = vunpack.c.h.b16 %v1902
        %v3059 = vunpack.c.l.b16 %v1903
        %v3060 = vunpack.c.h.b16 %v1903
        %v3061 = vunpack.c.l.b16 %v1904
        %v3062 = vunpack.c.h.b16 %v1904
        %v3063 = vunpack.c.l.b16 %v1905
        %v3064 = vunpack.c.h.b16 %v1905
        %v3065 = vunpack.c.l.b16 %v1906
        %v3066 = vunpack.c.h.b16 %v1906
        %v3067 = vunpack.c.l.b16 %v1907
        %v3068 = vunpack.c.h.b16 %v1907
        %v3069 = vunpack.c.l.b16 %v1908
        %v3070 = vunpack.c.h.b16 %v1908
        %v3071 = vunpack.c.l.b16 %v1909
        %v3072 = vunpack.c.h.b16 %v1909
        %v3073 = vunpack.c.l.b16 %v1910
        %v3074 = vunpack.c.h.b16 %v1910
        %v3075 = vunpack.c.l.b16 %v1911
        %v3076 = vunpack.c.h.b16 %v1911
        %v3077 = vunpack.c.l.b16 %v1912
        %v3078 = vunpack.c.h.b16 %v1912
        %v3079 = vunpack.c.l.b16 %v1913
        %v3080 = vunpack.c.h.b16 %v1913
        %v3081 = vunpack.c.l.b16 %v1914
        %v3082 = vunpack.c.h.b16 %v1914
        %v3083 = vunpack.c.l.b16 %v1915
        %v3084 = vunpack.c.h.b16 %v1915
        %v3085 = vunpack.c.l.b16 %v1916
        %v3086 = vunpack.c.h.b16 %v1916
        %v3087 = vunpack.c.l.b16 %v1917
        %v3088 = vunpack.c.h.b16 %v1917
        %v3089 = vunpack.c.l.b16 %v1918
        %v3090 = vunpack.c.h.b16 %v1918
        %v3091 = vunpack.c.l.b16 %v1919
        %v3092 = vunpack.c.h.b16 %v1919
        %v3093 = vunpack.c.l.b16 %v1920
        %v3094 = vunpack.c.h.b16 %v1920
        %v3095 = vunpack.c.l.b16 %v1921
        %v3096 = vunpack.c.h.b16 %v1921
        %v3097 = vunpack.c.l.b16 %v1922
        %v3098 = vunpack.c.h.b16 %v1922
        %v3099 = vunpack.c.l.b16 %v1923
        %v3100 = vunpack.c.h.b16 %v1923
        %v3101 = vunpack.c.l.b16 %v1924
        %v3102 = vunpack.c.h.b16 %v1924
        %v3103 = vunpack.c.l.b16 %v1925
        %v3104 = vunpack.c.h.b16 %v1925
        %v3105 = vunpack.c.l.b16 %v1926
        %v3106 = vunpack.c.h.b16 %v1926
        %v3107 = vunpack.c.l.b16 %v1927
        %v3108 = vunpack.c.h.b16 %v1927
        %v3109 = vunpack.c.l.b16 %v1928
        %v3110 = vunpack.c.h.b16 %v1928
        %v3111 = vunpack.c.l.b16 %v1929
        %v3112 = vunpack.c.h.b16 %v1929
        %v3113 = vunpack.c.l.b16 %v1930
        %v3114 = vunpack.c.h.b16 %v1930
        %v3115 = vunpack.c.l.b16 %v1931
        %v3116 = vunpack.c.h.b16 %v1931
        %v3117 = vunpack.c.l.b16 %v1932
        %v3118 = vunpack.c.h.b16 %v1932
        %v3119 = vunpack.c.l.b16 %v1933
        %v3120 = vunpack.c.h.b16 %v1933
        %v3121 = vunpack.c.l.b16 %v1934
        %v3122 = vunpack.c.h.b16 %v1934
        %v3123 = vunpack.c.l.b16 %v1935
        %v3124 = vunpack.c.h.b16 %v1935
        %v3125 = vunpack.c.l.b16 %v1936
        %v3126 = vunpack.c.h.b16 %v1936
        %v3127 = vunpack.c.l.b16 %v1937
        %v3128 = vunpack.c.h.b16 %v1937
        %v3129 = vunpack.c.l.b16 %v1938
        %v3130 = vunpack.c.h.b16 %v1938
        %v3131 = vunpack.c.l.b16 %v1939
        %v3132 = vunpack.c.h.b16 %v1939
        %v3133 = vunpack.c.l.b16 %v1940
        %v3134 = vunpack.c.h.b16 %v1940
        %v3135 = vunpack.c.l.b16 %v1941
        %v3136 = vunpack.c.h.b16 %v1941
        %v3137 = vunpack.c.l.b16 %v1942
        %v3138 = vunpack.c.h.b16 %v1942
        %v3139 = vunpack.c.l.b16 %v1943
        %v3140 = vunpack.c.h.b16 %v1943
        %v3141 = vunpack.c.l.b16 %v1944
        %v3142 = vunpack.c.h.b16 %v1944
        %v3143 = vunpack.c.l.b16 %v1945
        %v3144 = vunpack.c.h.b16 %v1945
        %v3145 = vunpack.c.l.b16 %v1946
        %v3146 = vunpack.c.h.b16 %v1946
        %v3147 = vunpack.c.l.b16 %v1947
        %v3148 = vunpack.c.h.b16 %v1947
        %v3149 = vunpack.c.l.b16 %v1948
        %v3150 = vunpack.c.h.b16 %v1948
        %v3151 = vunpack.c.l.b16 %v1949
        %v3152 = vunpack.c.h.b16 %v1949
        %v3153 = vunpack.c.l.b16 %v1950
        %v3154 = vunpack.c.h.b16 %v1950
        %v3155 = vunpack.c.l.b16 %v1951
        %v3156 = vunpack.c.h.b16 %v1951
        %v3157 = vunpack.c.l.b16 %v1952
        %v3158 = vunpack.c.h.b16 %v1952
        %v3159 = vunpack.c.l.b16 %v1953
        %v3160 = vunpack.c.h.b16 %v1953
        %v3161 = vunpack.c.l.b16 %v1954
        %v3162 = vunpack.c.h.b16 %v1954
        %v3163 = vunpack.c.l.b16 %v1955
        %v3164 = vunpack.c.h.b16 %v1955
        %v3165 = vunpack.c.l.b16 %v1956
        %v3166 = vunpack.c.h.b16 %v1956
        %v3167 = vunpack.c.l.b16 %v1957
        %v3168 = vunpack.c.h.b16 %v1957
        %v3169 = vunpack.c.l.b16 %v1958
        %v3170 = vunpack.c.h.b16 %v1958
        %v3171 = vunpack.c.l.b16 %v1959
        %v3172 = vunpack.c.h.b16 %v1959
        %v3173 = vunpack.c.l.b16 %v1960
        %v3174 = vunpack.c.h.b16 %v1960
        %v3175 = vunpack.c.l.b16 %v1961
        %v3176 = vunpack.c.h.b16 %v1961
        %v3177 = vunpack.c.l.b16 %v1962
        %v3178 = vunpack.c.h.b16 %v1962
        %v3179 = vunpack.c.l.b16 %v1963
        %v3180 = vunpack.c.h.b16 %v1963
        %v3181 = vunpack.c.l.b16 %v1964
        %v3182 = vunpack.c.h.b16 %v1964
        %v3183 = vunpack.c.l.b16 %v1965
        %v3184 = vunpack.c.h.b16 %v1965
        %v3185 = vunpack.c.l.b16 %v1966
        %v3186 = vunpack.c.h.b16 %v1966
        %v3187 = vunpack.c.l.b16 %v1967
        %v3188 = vunpack.c.h.b16 %v1967
        %v3189 = vunpack.c.l.b16 %v1968
        %v3190 = vunpack.c.h.b16 %v1968
        %v3191 = vunpack.c.l.b16 %v1969
        %v3192 = vunpack.c.h.b16 %v1969
        %v3193 = vunpack.c.l.b16 %v1970
        %v3194 = vunpack.c.h.b16 %v1970
        %v3195 = vunpack.c.l.b16 %v1971
        %v3196 = vunpack.c.h.b16 %v1971
        %v3197 = vunpack.c.l.b16 %v1972
        %v3198 = vunpack.c.h.b16 %v1972
        %v3199 = vunpack.c.l.b16 %v1973
        %v3200 = vunpack.c.h.b16 %v1973
        %v3201 = vunpack.c.l.b16 %v1974
        %v3202 = vunpack.c.h.b16 %v1974
        %v3203 = vunpack.c.l.b16 %v1975
        %v3204 = vunpack.c.h.b16 %v1975
        %v3205 = vunpack.c.l.b16 %v1976
        %v3206 = vunpack.c.h.b16 %v1976
        %v3207 = vunpack.c.l.b16 %v1977
        %v3208 = vunpack.c.h.b16 %v1977
        %v3209 = vunpack.c.l.b16 %v1978
        %v3210 = vunpack.c.h.b16 %v1978
        %v3211 = vunpack.c.l.b16 %v1979
        %v3212 = vunpack.c.h.b16 %v1979
        %v3213 = vunpack.c.l.b16 %v1980
        %v3214 = vunpack.c.h.b16 %v1980
        %v3215 = vunpack.c.l.b16 %v1981
        %v3216 = vunpack.c.h.b16 %v1981
        %v3217 = vunpack.c.l.b16 %v1982
        %v3218 = vunpack.c.h.b16 %v1982
        %v3219 = vunpack.c.l.b16 %v1983
        %v3220 = vunpack.c.h.b16 %v1983
        %v3221 = vunpack.c.l.b16 %v1984
        %v3222 = vunpack.c.h.b16 %v1984
        %v3223 = vunpack.c.l.b16 %v1985
        %v3224 = vunpack.c.h.b16 %v1985
        %v3225 = vunpack.c.l.b16 %v1986
        %v3226 = vunpack.c.h.b16 %v1986
        %v3227 = vunpack.c.l.b16 %v1987
        %v3228 = vunpack.c.h.b16 %v1987
        %v3229 = vunpack.c.l.b16 %v1988
        %v3230 = vunpack.c.h.b16 %v1988
        %v3231 = vunpack.c.l.b16 %v1989
        %v3232 = vunpack.c.h.b16 %v1989
        %v3233 = vunpack.c.l.b16 %v1990
        %v3234 = vunpack.c.h.b16 %v1990
        %v3235 = vunpack.c.l.b16 %v1991
        %v3236 = vunpack.c.h.b16 %v1991
        %v3237 = vunpack.c.l.b16 %v1992
        %v3238 = vunpack.c.h.b16 %v1992
        %v3239 = vunpack.c.l.b16 %v1993
        %v3240 = vunpack.c.h.b16 %v1993
        %v3241 = vunpack.c.l.b16 %v1994
        %v3242 = vunpack.c.h.b16 %v1994
        %v3243 = vunpack.c.l.b16 %v1995
        %v3244 = vunpack.c.h.b16 %v1995
        %v3245 = vunpack.c.l.b16 %v1996
        %v3246 = vunpack.c.h.b16 %v1996
        %v3247 = vunpack.c.l.b16 %v1997
        %v3248 = vunpack.c.h.b16 %v1997
        %v3249 = vunpack.c.l.b16 %v1998
        %v3250 = vunpack.c.h.b16 %v1998
        %v3251 = vunpack.c.l.b16 %v1999
        %v3252 = vunpack.c.h.b16 %v1999
        %v3253 = vunpack.c.l.b16 %v2000
        %v3254 = vunpack.c.h.b16 %v2000
        %v3255 = vunpack.c.l.b16 %v2001
        %v3256 = vunpack.c.h.b16 %v2001
        %v3257 = vunpack.c.l.b16 %v2002
        %v3258 = vunpack.c.h.b16 %v2002
        %v3259 = vunpack.c.l.b16 %v2003
        %v3260 = vunpack.c.h.b16 %v2003
        %v3261 = vunpack.c.l.b16 %v2004
        %v3262 = vunpack.c.h.b16 %v2004
        %v3263 = vunpack.c.l.b16 %v2005
        %v3264 = vunpack.c.h.b16 %v2005
        %v3265 = vunpack.c.l.b16 %v2006
        %v3266 = vunpack.c.h.b16 %v2006
        %v3267 = vunpack.c.l.b16 %v2007
        %v3268 = vunpack.c.h.b16 %v2007
        %v3269 = vunpack.c.l.b16 %v2008
        %v3270 = vunpack.c.h.b16 %v2008
        %v3271 = vunpack.c.l.b16 %v2009
        %v3272 = vunpack.c.h.b16 %v2009
        %v3273 = vunpack.c.l.b16 %v2010
        %v3274 = vunpack.c.h.b16 %v2010
        %v3275 = vunpack.c.l.b16 %v2011
        %v3276 = vunpack.c.h.b16 %v2011
        %v3277 = vunpack.c.l.b16 %v2012
        %v3278 = vunpack.c.h.b16 %v2012
        %v3279 = vunpack.c.l.b16 %v2013
        %v3280 = vunpack.c.h.b16 %v2013
        %v3281 = vunpack.c.l.b16 %v2014
        %v3282 = vunpack.c.h.b16 %v2014
        %v3283 = vunpack.c.l.b16 %v2015
        %v3284 = vunpack.c.h.b16 %v2015
        %v3285 = vunpack.c.l.b16 %v2016
        %v3286 = vunpack.c.h.b16 %v2016
        %v3287 = vunpack.c.l.b16 %v2017
        %v3288 = vunpack.c.h.b16 %v2017
        %v3289 = vunpack.c.l.b16 %v2018
        %v3290 = vunpack.c.h.b16 %v2018
        %v3291 = vunpack.c.l.b16 %v2019
        %v3292 = vunpack.c.h.b16 %v2019
        %v3293 = vunpack.c.l.b16 %v2020
        %v3294 = vunpack.c.h.b16 %v2020
        %v3295 = vunpack.c.l.b16 %v2021
        %v3296 = vunpack.c.h.b16 %v2021
        %v3297 = vunpack.c.l.b16 %v2022
        %v3298 = vunpack.c.h.b16 %v2022
        %v3299 = vunpack.c.l.b16 %v2023
        %v3300 = vunpack.c.h.b16 %v2023
        %v3301 = vunpack.c.l.b16 %v2024
        %v3302 = vunpack.c.h.b16 %v2024
        %v3303 = vunpack.c.l.b16 %v2025
        %v3304 = vunpack.c.h.b16 %v2025
        %v3305 = vunpack.c.l.b16 %v2026
        %v3306 = vunpack.c.h.b16 %v2026
        %v3307 = vunpack.c.l.b16 %v2027
        %v3308 = vunpack.c.h.b16 %v2027
        %v3309 = vunpack.c.l.b16 %v2028
        %v3310 = vunpack.c.h.b16 %v2028
        %v3311 = vunpack.c.l.b16 %v2029
        %v3312 = vunpack.c.h.b16 %v2029
        %v3313 = vunpack.c.l.b16 %v2030
        %v3314 = vunpack.c.h.b16 %v2030
        %v3315 = vunpack.c.l.b16 %v2031
        %v3316 = vunpack.c.h.b16 %v2031
        %v3317 = vunpack.c.l.b16 %v2032
        %v3318 = vunpack.c.h.b16 %v2032
        %v3319 = vunpack.c.l.b16 %v2033
        %v3320 = vunpack.c.h.b16 %v2033
        %v3321 = vunpack.c.l.b16 %v2034
        %v3322 = vunpack.c.h.b16 %v2034
        %v3323 = vunpack.c.l.b16 %v2035
        %v3324 = vunpack.c.h.b16 %v2035
        %v3325 = vunpack.c.l.b16 %v2036
        %v3326 = vunpack.c.h.b16 %v2036
        %v3327 = vunpack.c.l.b16 %v2037
        %v3328 = vunpack.c.h.b16 %v2037
        %v3329 = vunpack.c.l.b16 %v2038
        %v3330 = vunpack.c.h.b16 %v2038
        %v3331 = vunpack.c.l.b16 %v2039
        %v3332 = vunpack.c.h.b16 %v2039
        %v3333 = vunpack.c.l.b16 %v2040
        %v3334 = vunpack.c.h.b16 %v2040
        %v3335 = vunpack.c.l.b16 %v2041
        %v3336 = vunpack.c.h.b16 %v2041
        %v3337 = vunpack.c.l.b16 %v2042
        %v3338 = vunpack.c.h.b16 %v2042
        %v3339 = vunpack.c.l.b16 %v2043
        %v3340 = vunpack.c.h.b16 %v2043
        %v3341 = vunpack.c.l.b16 %v2044
        %v3342 = vunpack.c.h.b16 %v2044
        %v3343 = vunpack.c.l.b16 %v2045
        %v3344 = vunpack.c.h.b16 %v2045
        %v3345 = vunpack.c.l.b16 %v2046
        %v3346 = vunpack.c.h.b16 %v2046
        %v3347 = vunpack.c.l.b16 %v2047
        %v3348 = vunpack.c.h.b16 %v2047
        %v3349 = vunpack.c.l.b16 %v2048
        %v3350 = vunpack.c.h.b16 %v2048
        %v3351 = vunpack.c.l.b16 %v2049
        %v3352 = vunpack.c.h.b16 %v2049
        %v3353 = vunpack.c.l.b16 %v2050
        %v3354 = vunpack.c.h.b16 %v2050
        %v3355 = vunpack.c.l.b16 %v2051
        %v3356 = vunpack.c.h.b16 %v2051
        %v3357 = vunpack.c.l.b16 %v2052
        %v3358 = vunpack.c.h.b16 %v2052
        %v3359 = vunpack.c.l.b16 %v2053
        %v3360 = vunpack.c.h.b16 %v2053
        %v3361 = vunpack.c.l.b16 %v2054
        %v3362 = vunpack.c.h.b16 %v2054
        %v3363 = vunpack.c.l.b16 %v2055
        %v3364 = vunpack.c.h.b16 %v2055
        %v3365 = vunpack.c.l.b16 %v2056
        %v3366 = vunpack.c.h.b16 %v2056
        %v3367 = vunpack.c.l.b16 %v2057
        %v3368 = vunpack.c.h.b16 %v2057
        %v3369 = vunpack.c.l.b16 %v2058
        %v3370 = vunpack.c.h.b16 %v2058
        %v3371 = vunpack.c.l.b16 %v2059
        %v3372 = vunpack.c.h.b16 %v2059
        %v3373 = vunpack.c.l.b16 %v2060
        %v3374 = vunpack.c.h.b16 %v2060
        %v3375 = vunpack.c.l.b16 %v2061
        %v3376 = vunpack.c.h.b16 %v2061
        %v3377 = vunpack.c.l.b16 %v2062
        %v3378 = vunpack.c.h.b16 %v2062
        %v3379 = vunpack.c.l.b16 %v2063
        %v3380 = vunpack.c.h.b16 %v2063
        %v3381 = vunpack.c.l.b16 %v2064
        %v3382 = vunpack.c.h.b16 %v2064
        %v3383 = vunpack.c.l.b16 %v2065
        %v3384 = vunpack.c.h.b16 %v2065
        %v3385 = vunpack.c.l.b16 %v2066
        %v3386 = vunpack.c.h.b16 %v2066
        %v3387 = vunpack.c.l.b16 %v2067
        %v3388 = vunpack.c.h.b16 %v2067
        %v3389 = vunpack.c.l.b16 %v2068
        %v3390 = vunpack.c.h.b16 %v2068
        %v3391 = vunpack.c.l.b16 %v2069
        %v3392 = vunpack.c.h.b16 %v2069
        %v3393 = vunpack.c.l.b16 %v2070
        %v3394 = vunpack.c.h.b16 %v2070
        %v3395 = vunpack.c.l.b16 %v2071
        %v3396 = vunpack.c.h.b16 %v2071
        %v3397 = vunpack.c.l.b16 %v2072
        %v3398 = vunpack.c.h.b16 %v2072
        %v3399 = vunpack.c.l.b16 %v2073
        %v3400 = vunpack.c.h.b16 %v2073
        %v3401 = vunpack.c.l.b16 %v2074
        %v3402 = vunpack.c.h.b16 %v2074
        %v3403 = vunpack.c.l.b16 %v2075
        %v3404 = vunpack.c.h.b16 %v2075
        %v3405 = vunpack.c.l.b16 %v2076
        %v3406 = vunpack.c.h.b16 %v2076
        %v3407 = vunpack.c.l.b16 %v2077
        %v3408 = vunpack.c.h.b16 %v2077
        %v3409 = vunpack.c.l.b16 %v2078
        %v3410 = vunpack.c.h.b16 %v2078
        %v3411 = vunpack.c.l.b16 %v2079
        %v3412 = vunpack.c.h.b16 %v2079
        %v3413 = vunpack.c.l.b16 %v2080
        %v3414 = vunpack.c.h.b16 %v2080
        %v3415 = vunpack.c.l.b16 %v2081
        %v3416 = vunpack.c.h.b16 %v2081
        %v3417 = vunpack.c.l.b16 %v2082
        %v3418 = vunpack.c.h.b16 %v2082
        %v3419 = vunpack.c.l.b16 %v2083
        %v3420 = vunpack.c.h.b16 %v2083
        %v3421 = vunpack.c.l.b16 %v2084
        %v3422 = vunpack.c.h.b16 %v2084
        %v3423 = vunpack.c.l.b16 %v2085
        %v3424 = vunpack.c.h.b16 %v2085
        %v3425 = vunpack.c.l.b16 %v2086
        %v3426 = vunpack.c.h.b16 %v2086
        %v3427 = vunpack.c.l.b16 %v2087
        %v3428 = vunpack.c.h.b16 %v2087
        %v3429 = vunpack.c.l.b16 %v2088
        %v3430 = vunpack.c.h.b16 %v2088
        %v3431 = vunpack.c.l.b16 %v2089
        %v3432 = vunpack.c.h.b16 %v2089
        %v3433 = vunpack.c.l.b16 %v2090
        %v3434 = vunpack.c.h.b16 %v2090
        %v3435 = vunpack.c.l.b16 %v2091
        %v3436 = vunpack.c.h.b16 %v2091
        %v3437 = vunpack.c.l.b16 %v2092
        %v3438 = vunpack.c.h.b16 %v2092
        %v3439 = vunpack.c.l.b16 %v2093
        %v3440 = vunpack.c.h.b16 %v2093
        %v3441 = vunpack.c.l.b16 %v2094
        %v3442 = vunpack.c.h.b16 %v2094
        %v3443 = vunpack.c.l.b16 %v2095
        %v3444 = vunpack.c.h.b16 %v2095
        %v3445 = vunpack.c.l.b16 %v2096
        %v3446 = vunpack.c.h.b16 %v2096
        %v3447 = vunpack.c.l.b16 %v2097
        %v3448 = vunpack.c.h.b16 %v2097
        %v3449 = vunpack.c.l.b16 %v2098
        %v3450 = vunpack.c.h.b16 %v2098
        %v3451 = vunpack.c.l.b16 %v2099
        %v3452 = vunpack.c.h.b16 %v2099
        %v3453 = vunpack.c.l.b16 %v2100
        %v3454 = vunpack.c.h.b16 %v2100
        %v3455 = vunpack.c.l.b16 %v2101
        %v3456 = vunpack.c.h.b16 %v2101
        %v3457 = vunpack.c.l.b16 %v2102
        %v3458 = vunpack.c.h.b16 %v2102
        %v3459 = vunpack.c.l.b16 %v2103
        %v3460 = vunpack.c.h.b16 %v2103
        %v3461 = vunpack.c.l.b16 %v2104
        %v3462 = vunpack.c.h.b16 %v2104
        %v3463 = vunpack.c.l.b16 %v2105
        %v3464 = vunpack.c.h.b16 %v2105
        %v3465 = vunpack.c.l.b16 %v2106
        %v3466 = vunpack.c.h.b16 %v2106
        %v3467 = vunpack.c.l.b16 %v2107
        %v3468 = vunpack.c.h.b16 %v2107
        %v3469 = vunpack.c.l.b16 %v2108
        %v3470 = vunpack.c.h.b16 %v2108
        %v3471 = vunpack.c.l.b16 %v2109
        %v3472 = vunpack.c.h.b16 %v2109
        %v3473 = vunpack.c.l.b16 %v2110
        %v3474 = vunpack.c.h.b16 %v2110
        %v3475 = vunpack.c.l.b16 %v2111
        %v3476 = vunpack.c.h.b16 %v2111
        %v3477 = vunpack.c.l.b16 %v2112
        %v3478 = vunpack.c.h.b16 %v2112
        %v3479 = vunpack.c.l.b16 %v2113
        %v3480 = vunpack.c.h.b16 %v2113
        %v3481 = vunpack.c.l.b16 %v2114
        %v3482 = vunpack.c.h.b16 %v2114
        %v3483 = vunpack.c.l.b16 %v2115
        %v3484 = vunpack.c.h.b16 %v2115
        %v3485 = vunpack.c.l.b16 %v2116
        %v3486 = vunpack.c.h.b16 %v2116
        %v3487 = vunpack.c.l.b16 %v2117
        %v3488 = vunpack.c.h.b16 %v2117
        %v3489 = vunpack.c.l.b16 %v2118
        %v3490 = vunpack.c.h.b16 %v2118
        %v3491 = vunpack.c.l.b16 %v2119
        %v3492 = vunpack.c.h.b16 %v2119
        %v3493 = vunpack.c.l.b16 %v2120
        %v3494 = vunpack.c.h.b16 %v2120
        %v3495 = vunpack.c.l.b16 %v2121
        %v3496 = vunpack.c.h.b16 %v2121
        %v3497 = vunpack.c.l.b16 %v2122
        %v3498 = vunpack.c.h.b16 %v2122
        %v3499 = vunpack.c.l.b16 %v2123
        %v3500 = vunpack.c.h.b16 %v2123
        %v3501 = vunpack.c.l.b16 %v2124
        %v3502 = vunpack.c.h.b16 %v2124
        %v3503 = vunpack.c.l.b16 %v2125
        %v3504 = vunpack.c.h.b16 %v2125
        %v3505 = vunpack.c.l.b16 %v2126
        %v3506 = vunpack.c.h.b16 %v2126
        %v3507 = vunpack.c.l.b16 %v2127
        %v3508 = vunpack.c.h.b16 %v2127
        %v3509 = vunpack.c.l.b16 %v2128
        %v3510 = vunpack.c.h.b16 %v2128
        %v3511 = vunpack.c.l.b16 %v2129
        %v3512 = vunpack.c.h.b16 %v2129
        %v3513 = vunpack.c.l.b16 %v2130
        %v3514 = vunpack.c.h.b16 %v2130
        %v3515 = vunpack.c.l.b16 %v2131
        %v3516 = vunpack.c.h.b16 %v2131
        %v3517 = vunpack.c.l.b16 %v2132
        %v3518 = vunpack.c.h.b16 %v2132
        %v3519 = vunpack.c.l.b16 %v2133
        %v3520 = vunpack.c.h.b16 %v2133
        %v3521 = vunpack.c.l.b16 %v2134
        %v3522 = vunpack.c.h.b16 %v2134
        %v3523 = vunpack.c.l.b16 %v2135
        %v3524 = vunpack.c.h.b16 %v2135
        %v3525 = vunpack.c.l.b16 %v2136
        %v3526 = vunpack.c.h.b16 %v2136
        %v3527 = vunpack.c.l.b16 %v2137
        %v3528 = vunpack.c.h.b16 %v2137
        %v3529 = vunpack.c.l.b16 %v2138
        %v3530 = vunpack.c.h.b16 %v2138
        %v3531 = vunpack.c.l.b16 %v2139
        %v3532 = vunpack.c.h.b16 %v2139
        %v3533 = vunpack.c.l.b16 %v2140
        %v3534 = vunpack.c.h.b16 %v2140
        %v3535 = vunpack.c.l.b16 %v2141
        %v3536 = vunpack.c.h.b16 %v2141
        %v3537 = vunpack.c.l.b16 %v2142
        %v3538 = vunpack.c.h.b16 %v2142
        %v3539 = vunpack.c.l.b16 %v2143
        %v3540 = vunpack.c.h.b16 %v2143
        %v3541 = vunpack.c.l.b16 %v2144
        %v3542 = vunpack.c.h.b16 %v2144
        %v3543 = vunpack.c.l.b16 %v2145
        %v3544 = vunpack.c.h.b16 %v2145
        %v3545 = vunpack.c.l.b16 %v2146
        %v3546 = vunpack.c.h.b16 %v2146
        %v3547 = vunpack.c.l.b16 %v2147
        %v3548 = vunpack.c.h.b16 %v2147
        %v3549 = vunpack.c.l.b16 %v2148
        %v3550 = vunpack.c.h.b16 %v2148
        %v3551 = vunpack.c.l.b16 %v2149
        %v3552 = vunpack.c.h.b16 %v2149
        %v3553 = vunpack.c.l.b16 %v2150
        %v3554 = vunpack.c.h.b16 %v2150
        %v3555 = vunpack.c.l.b16 %v2151
        %v3556 = vunpack.c.h.b16 %v2151
        %v3557 = vunpack.c.l.b16 %v2152
        %v3558 = vunpack.c.h.b16 %v2152
        %v3559 = vunpack.c.l.b16 %v2153
        %v3560 = vunpack.c.h.b16 %v2153
        %v3561 = vunpack.c.l.b16 %v2154
        %v3562 = vunpack.c.h.b16 %v2154
        %v3563 = vunpack.c.l.b16 %v2155
        %v3564 = vunpack.c.h.b16 %v2155
        %v3565 = vunpack.c.l.b16 %v2156
        %v3566 = vunpack.c.h.b16 %v2156
        %v3567 = vunpack.c.l.b16 %v2157
        %v3568 = vunpack.c.h.b16 %v2157
        %v3569 = vunpack.c.l.b16 %v2158
        %v3570 = vunpack.c.h.b16 %v2158
        %v3571 = vunpack.c.l.b16 %v2159
        %v3572 = vunpack.c.h.b16 %v2159
        %v3573 = vunpack.c.l.b16 %v2160
        %v3574 = vunpack.c.h.b16 %v2160
        %v3575 = vunpack.c.l.b16 %v2161
        %v3576 = vunpack.c.h.b16 %v2161
        %v3577 = vunpack.c.l.b16 %v2162
        %v3578 = vunpack.c.h.b16 %v2162
        %v3579 = vunpack.c.l.b16 %v2163
        %v3580 = vunpack.c.h.b16 %v2163
        %v3581 = vunpack.c.l.b16 %v2164
        %v3582 = vunpack.c.h.b16 %v2164
        %v3583 = vunpack.c.l.b16 %v2165
        %v3584 = vunpack.c.h.b16 %v2165
        %v3585 = vunpack.c.l.b16 %v2166
        %v3586 = vunpack.c.h.b16 %v2166
        %v3587 = vunpack.c.l.b16 %v2167
        %v3588 = vunpack.c.h.b16 %v2167
        %v3589 = vunpack.c.l.b16 %v2168
        %v3590 = vunpack.c.h.b16 %v2168
        %v3591 = vunpack.c.l.b16 %v2169
        %v3592 = vunpack.c.h.b16 %v2169
        %v3593 = vunpack.c.l.b16 %v2170
        %v3594 = vunpack.c.h.b16 %v2170
        %v3595 = vunpack.c.l.b16 %v2171
        %v3596 = vunpack.c.h.b16 %v2171
        %v3597 = vunpack.c.l.b16 %v2172
        %v3598 = vunpack.c.h.b16 %v2172
        %v3599 = vunpack.c.l.b16 %v2173
        %v3600 = vunpack.c.h.b16 %v2173
        %v3601 = vunpack.c.l.b16 %v2174
        %v3602 = vunpack.c.h.b16 %v2174
        %v3603 = vunpack.c.l.b16 %v2175
        %v3604 = vunpack.c.h.b16 %v2175
        %v3605 = vunpack.c.l.b16 %v2176
        %v3606 = vunpack.c.h.b16 %v2176
        %v3607 = vunpack.c.l.b16 %v2177
        %v3608 = vunpack.c.h.b16 %v2177
        %v3609 = vunpack.c.l.b16 %v2178
        %v3610 = vunpack.c.h.b16 %v2178
        %v3611 = vunpack.c.l.b16 %v2179
        %v3612 = vunpack.c.h.b16 %v2179
        %v3613 = vunpack.c.l.b16 %v2180
        %v3614 = vunpack.c.h.b16 %v2180
        %v3615 = vunpack.c.l.b16 %v2181
        %v3616 = vunpack.c.h.b16 %v2181
        %v3617 = vunpack.c.l.b16 %v2182
        %v3618 = vunpack.c.h.b16 %v2182
        %v3619 = vunpack.c.l.b16 %v2183
        %v3620 = vunpack.c.h.b16 %v2183
        %v3621 = vunpack.c.l.b16 %v2184
        %v3622 = vunpack.c.h.b16 %v2184
        %v3623 = vunpack.c.l.b16 %v2185
        %v3624 = vunpack.c.h.b16 %v2185
        %v3625 = vunpack.c.l.b16 %v2186
        %v3626 = vunpack.c.h.b16 %v2186
        %v3627 = vunpack.c.l.b16 %v2187
        %v3628 = vunpack.c.h.b16 %v2187
        %v3629 = vunpack.c.l.b16 %v2188
        %v3630 = vunpack.c.h.b16 %v2188
        %v3631 = vunpack.c.l.b16 %v2189
        %v3632 = vunpack.c.h.b16 %v2189
        %v3633 = vunpack.c.l.b16 %v2190
        %v3634 = vunpack.c.h.b16 %v2190
        %v3635 = vunpack.c.l.b16 %v2191
        %v3636 = vunpack.c.h.b16 %v2191
        %v3637 = vunpack.c.l.b16 %v2192
        %v3638 = vunpack.c.h.b16 %v2192
        %v3639 = vunpack.c.l.b16 %v2193
        %v3640 = vunpack.c.h.b16 %v2193
        %v3641 = vunpack.c.l.b16 %v2194
        %v3642 = vunpack.c.h.b16 %v2194
        %v3643 = vunpack.c.l.b16 %v2195
        %v3644 = vunpack.c.h.b16 %v2195
        %v3645 = vunpack.c.l.b16 %v2196
        %v3646 = vunpack.c.h.b16 %v2196
        %v3647 = vunpack.c.l.b16 %v2197
        %v3648 = vunpack.c.h.b16 %v2197
        %v3649 = vunpack.c.l.b16 %v2198
        %v3650 = vunpack.c.h.b16 %v2198
        %v3651 = vunpack.c.l.b16 %v2199
        %v3652 = vunpack.c.h.b16 %v2199
        %v3653 = vunpack.c.l.b16 %v2200
        %v3654 = vunpack.c.h.b16 %v2200
        %v3655 = vunpack.c.l.b16 %v2201
        %v3656 = vunpack.c.h.b16 %v2201
        %v3657 = vunpack.c.l.b16 %v2202
        %v3658 = vunpack.c.h.b16 %v2202
        %v3659 = vunpack.c.l.b16 %v2203
        %v3660 = vunpack.c.h.b16 %v2203
        %v3661 = vunpack.c.l.b16 %v2204
        %v3662 = vunpack.c.h.b16 %v2204
        %v3663 = vunpack.c.l.b16 %v2205
        %v3664 = vunpack.c.h.b16 %v2205
        %v3665 = vunpack.c.l.b16 %v2206
        %v3666 = vunpack.c.h.b16 %v2206
        %v3667 = vunpack.c.l.b16 %v2207
        %v3668 = vunpack.c.h.b16 %v2207
        %v3669 = vunpack.c.l.b16 %v2208
        %v3670 = vunpack.c.h.b16 %v2208
        %v3671 = vunpack.c.l.b16 %v2209
        %v3672 = vunpack.c.h.b16 %v2209
        %v3673 = vunpack.c.l.b16 %v2210
        %v3674 = vunpack.c.h.b16 %v2210
        %v3675 = vunpack.c.l.b16 %v2211
        %v3676 = vunpack.c.h.b16 %v2211
        %v3677 = vunpack.c.l.b16 %v2212
        %v3678 = vunpack.c.h.b16 %v2212
        %v3679 = vunpack.c.l.b16 %v2213
        %v3680 = vunpack.c.h.b16 %v2213
        %v3681 = vunpack.c.l.b16 %v2214
        %v3682 = vunpack.c.h.b16 %v2214
        %v3683 = vunpack.c.l.b16 %v2215
        %v3684 = vunpack.c.h.b16 %v2215
        %v3685 = vunpack.c.l.b16 %v2216
        %v3686 = vunpack.c.h.b16 %v2216
        %v3687 = vunpack.c.l.b16 %v2217
        %v3688 = vunpack.c.h.b16 %v2217
        %v3689 = vunpack.c.l.b16 %v2218
        %v3690 = vunpack.c.h.b16 %v2218
        %v3691 = vunpack.c.l.b16 %v2219
        %v3692 = vunpack.c.h.b16 %v2219
        %v3693 = vunpack.c.l.b16 %v2220
        %v3694 = vunpack.c.h.b16 %v2220
        %v3695 = vunpack.c.l.b16 %v2221
        %v3696 = vunpack.c.h.b16 %v2221
        %v3697 = vunpack.c.l.b16 %v2222
        %v3698 = vunpack.c.h.b16 %v2222
        %v3699 = vunpack.c.l.b16 %v2223
        %v3700 = vunpack.c.h.b16 %v2223
        %v3701 = vunpack.c.l.b16 %v2224
        %v3702 = vunpack.c.h.b16 %v2224
        %v3703 = vunpack.c.l.b16 %v2225
        %v3704 = vunpack.c.h.b16 %v2225
        %v3705 = vunpack.c.l.b16 %v2226
        %v3706 = vunpack.c.h.b16 %v2226
        %v3707 = vunpack.c.l.b16 %v2227
        %v3708 = vunpack.c.h.b16 %v2227
        %v3709 = vunpack.c.l.b16 %v2228
        %v3710 = vunpack.c.h.b16 %v2228
        %v3711 = vunpack.c.l.b16 %v2229
        %v3712 = vunpack.c.h.b16 %v2229
        %v3713 = vunpack.c.l.b16 %v2230
        %v3714 = vunpack.c.h.b16 %v2230
        %v3715 = vunpack.c.l.b16 %v2231
        %v3716 = vunpack.c.h.b16 %v2231
        %v3717 = vunpack.c.l.b16 %v2232
        %v3718 = vunpack.c.h.b16 %v2232
        %v3719 = vunpack.c.l.b16 %v2233
        %v3720 = vunpack.c.h.b16 %v2233
        %v3721 = vunpack.c.l.b16 %v2234
        %v3722 = vunpack.c.h.b16 %v2234
        %v3723 = vunpack.c.l.b16 %v2235
        %v3724 = vunpack.c.h.b16 %v2235
        %v3725 = vunpack.c.l.b16 %v2236
        %v3726 = vunpack.c.h.b16 %v2236
        %v3727 = vunpack.c.l.b16 %v2237
        %v3728 = vunpack.c.h.b16 %v2237
        %v3729 = vunpack.c.l.b16 %v2238
        %v3730 = vunpack.c.h.b16 %v2238
        %v3731 = vunpack.c.l.b16 %v2239
        %v3732 = vunpack.c.h.b16 %v2239
        %v3733 = vunpack.c.l.b16 %v2240
        %v3734 = vunpack.c.h.b16 %v2240
        %v3735 = vunpack.c.l.b16 %v2241
        %v3736 = vunpack.c.h.b16 %v2241
        %v3737 = vunpack.c.l.b16 %v2242
        %v3738 = vunpack.c.h.b16 %v2242
        %v3739 = vunpack.c.l.b16 %v2243
        %v3740 = vunpack.c.h.b16 %v2243
        %v3741 = vunpack.c.l.b16 %v2244
        %v3742 = vunpack.c.h.b16 %v2244
        %v3743 = vunpack.c.l.b16 %v2245
        %v3744 = vunpack.c.h.b16 %v2245
        %v3745 = vunpack.c.l.b16 %v2246
        %v3746 = vunpack.c.h.b16 %v2246
        %v3747 = vunpack.c.l.b16 %v2247
        %v3748 = vunpack.c.h.b16 %v2247
        %v3749 = vunpack.c.l.b16 %v2248
        %v3750 = vunpack.c.h.b16 %v2248
        %v3751 = vunpack.c.l.b16 %v2249
        %v3752 = vunpack.c.h.b16 %v2249
        %v3753 = vunpack.c.l.b16 %v2250
        %v3754 = vunpack.c.h.b16 %v2250
        %v3755 = vunpack.c.l.b16 %v2251
        %v3756 = vunpack.c.h.b16 %v2251
        %v3757 = vunpack.c.l.b16 %v2252
        %v3758 = vunpack.c.h.b16 %v2252
        %v3759 = vunpack.c.l.b16 %v2253
        %v3760 = vunpack.c.h.b16 %v2253
        %v3761 = vunpack.c.l.b16 %v2254
        %v3762 = vunpack.c.h.b16 %v2254
        %v3763 = vunpack.c.l.b16 %v2255
        %v3764 = vunpack.c.h.b16 %v2255
        %v3765 = vunpack.c.l.b16 %v2256
        %v3766 = vunpack.c.h.b16 %v2256
        %v3767 = vunpack.c.l.b16 %v2257
        %v3768 = vunpack.c.h.b16 %v2257
        %v3769 = vunpack.c.l.b16 %v2258
        %v3770 = vunpack.c.h.b16 %v2258
        %v3771 = vunpack.c.l.b16 %v2259
        %v3772 = vunpack.c.h.b16 %v2259
        %v3773 = vunpack.c.l.b16 %v2260
        %v3774 = vunpack.c.h.b16 %v2260
        %v3775 = vunpack.c.l.b16 %v2261
        %v3776 = vunpack.c.h.b16 %v2261
        %v3777 = vunpack.c.l.b16 %v2262
        %v3778 = vunpack.c.h.b16 %v2262
        %v3779 = vunpack.c.l.b16 %v2263
        %v3780 = vunpack.c.h.b16 %v2263
        %v3781 = vunpack.c.l.b16 %v2264
        %v3782 = vunpack.c.h.b16 %v2264
        %v3783 = vunpack.c.l.b16 %v2265
        %v3784 = vunpack.c.h.b16 %v2265
        %v3785 = vunpack.c.l.b16 %v2266
        %v3786 = vunpack.c.h.b16 %v2266
        %v3787 = vunpack.c.l.b16 %v2267
        %v3788 = vunpack.c.h.b16 %v2267
        %v3789 = vunpack.c.l.b16 %v2268
        %v3790 = vunpack.c.h.b16 %v2268
        %v3791 = vunpack.c.l.b16 %v2269
        %v3792 = vunpack.c.h.b16 %v2269
        %v3793 = vunpack.c.l.b16 %v2270
        %v3794 = vunpack.c.h.b16 %v2270
        %v3795 = vunpack.c.l.b16 %v2271
        %v3796 = vunpack.c.h.b16 %v2271
        %v3797 = vunpack.c.l.b16 %v2272
        %v3798 = vunpack.c.h.b16 %v2272
        %v3799 = vunpack.c.l.b16 %v2273
        %v3800 = vunpack.c.h.b16 %v2273
        %v3801 = vunpack.c.l.b16 %v2274
        %v3802 = vunpack.c.h.b16 %v2274
        %v3803 = vunpack.c.l.b16 %v2275
        %v3804 = vunpack.c.h.b16 %v2275
        %v3805 = vunpack.c.l.b16 %v2276
        %v3806 = vunpack.c.h.b16 %v2276
        %v3807 = vunpack.c.l.b16 %v2277
        %v3808 = vunpack.c.h.b16 %v2277
        %v3809 = vunpack.c.l.b16 %v2278
        %v3810 = vunpack.c.h.b16 %v2278
        %v3811 = vunpack.c.l.b16 %v2279
        %v3812 = vunpack.c.h.b16 %v2279
        %v3813 = vunpack.c.l.b16 %v2280
        %v3814 = vunpack.c.h.b16 %v2280
        %v3815 = vunpack.c.l.b16 %v2281
        %v3816 = vunpack.c.h.b16 %v2281
        %v3817 = vunpack.c.l.b16 %v2282
        %v3818 = vunpack.c.h.b16 %v2282
        %v3819 = vunpack.c.l.b16 %v2283
        %v3820 = vunpack.c.h.b16 %v2283
        %v3821 = vunpack.c.l.b16 %v2284
        %v3822 = vunpack.c.h.b16 %v2284
        %v3823 = vunpack.c.l.b16 %v2285
        %v3824 = vunpack.c.h.b16 %v2285
        %v3825 = vunpack.c.l.b16 %v2286
        %v3826 = vunpack.c.h.b16 %v2286
        %v3827 = vunpack.c.l.b16 %v2287
        %v3828 = vunpack.c.h.b16 %v2287
        %v3829 = vunpack.c.l.b16 %v2288
        %v3830 = vunpack.c.h.b16 %v2288
        %v3831 = vunpack.c.l.b16 %v2289
        %v3832 = vunpack.c.h.b16 %v2289
        %v3833 = vunpack.c.l.b16 %v2290
        %v3834 = vunpack.c.h.b16 %v2290
        %v3835 = vunpack.c.l.b16 %v2291
        %v3836 = vunpack.c.h.b16 %v2291
        %v3837 = vunpack.c.l.b16 %v2292
        %v3838 = vunpack.c.h.b16 %v2292
        %v3839 = vunpack.c.l.b16 %v2293
        %v3840 = vunpack.c.h.b16 %v2293
        %v3841 = vunpack.c.l.b16 %v2294
        %v3842 = vunpack.c.h.b16 %v2294
        %v3843 = vunpack.c.l.b16 %v2295
        %v3844 = vunpack.c.h.b16 %v2295
        %v3845 = vunpack.c.l.b16 %v2296
        %v3846 = vunpack.c.h.b16 %v2296
        %v3847 = vunpack.c.l.b16 %v2297
        %v3848 = vunpack.c.h.b16 %v2297
        %v3849 = vunpack.c.l.b16 %v2298
        %v3850 = vunpack.c.h.b16 %v2298
        %v3851 = vunpack.c.l.b16 %v2299
        %v3852 = vunpack.c.h.b16 %v2299
        %v3853 = vunpack.c.l.b16 %v2300
        %v3854 = vunpack.c.h.b16 %v2300
        %v3855 = vunpack.c.l.b16 %v2301
        %v3856 = vunpack.c.h.b16 %v2301
        %v3857 = vunpack.c.l.b16 %v2302
        %v3858 = vunpack.c.h.b16 %v2302
        %v3859 = vunpack.c.l.b16 %v2303
        %v3860 = vunpack.c.h.b16 %v2303
        %v3861 = vunpack.c.l.b16 %v2304
        %v3862 = vunpack.c.h.b16 %v2304
        %v3863 = vunpack.c.l.b16 %v2305
        %v3864 = vunpack.c.h.b16 %v2305
        %v3865 = vunpack.c.l.b16 %v2306
        %v3866 = vunpack.c.h.b16 %v2306
        %v3867 = vunpack.c.l.b16 %v2307
        %v3868 = vunpack.c.h.b16 %v2307
        %v3869 = vunpack.c.l.b16 %v2308
        %v3870 = vunpack.c.h.b16 %v2308
        %v3871 = vunpack.c.l.b16 %v2309
        %v3872 = vunpack.c.h.b16 %v2309
        %v3873 = vunpack.c.l.b16 %v2310
        %v3874 = vunpack.c.h.b16 %v2310
        %v3875 = vunpack.c.l.b16 %v2311
        %v3876 = vunpack.c.h.b16 %v2311
        %v3877 = vunpack.c.l.b16 %v2312
        %v3878 = vunpack.c.h.b16 %v2312
        %v3879 = vunpack.c.l.b16 %v2313
        %v3880 = vunpack.c.h.b16 %v2313
        %v3881 = vunpack.c.l.b16 %v2314
        %v3882 = vunpack.c.h.b16 %v2314
        %v3883 = vunpack.c.l.b16 %v2315
        %v3884 = vunpack.c.h.b16 %v2315
        %v3885 = vunpack.c.l.b16 %v2316
        %v3886 = vunpack.c.h.b16 %v2316
        %v3887 = vunpack.c.l.b16 %v2317
        %v3888 = vunpack.c.h.b16 %v2317
        %v3889 = vunpack.c.l.b16 %v2318
        %v3890 = vunpack.c.h.b16 %v2318
        %v3891 = vunpack.c.l.b16 %v2319
        %v3892 = vunpack.c.h.b16 %v2319
        %v3893 = vunpack.c.l.b16 %v2320
        %v3894 = vunpack.c.h.b16 %v2320
        %v3895 = vunpack.c.l.b16 %v2321
        %v3896 = vunpack.c.h.b16 %v2321
        %v3897 = vunpack.c.l.b16 %v2322
        %v3898 = vunpack.c.h.b16 %v2322
        %v3899 = vunpack.c.l.b16 %v2323
        %v3900 = vunpack.c.h.b16 %v2323
        %v3901 = vunpack.c.l.b16 %v2324
        %v3902 = vunpack.c.h.b16 %v2324
        %v3903 = vpack.c.b16 %v2887, %v2879
        %v3904 = vpack.c.b16 %v2888, %v2880
        %v3905 = vpack.c.b16 %v2889, %v2881
        %v3906 = vpack.c.b16 %v2890, %v2882
        %v3907 = vpack.c.b16 %v2891, %v2883
        %v3908 = vpack.c.b16 %v2892, %v2884
        %v3909 = vpack.c.b16 %v2893, %v2885
        %v3910 = vpack.c.b16 %v2894, %v2886
        %v3911 = vpack.c.b16 %v2903, %v2895
        %v3912 = vpack.c.b16 %v2904, %v2896
        %v3913 = vpack.c.b16 %v2905, %v2897
        %v3914 = vpack.c.b16 %v2906, %v2898
        %v3915 = vpack.c.b16 %v2907, %v2899
        %v3916 = vpack.c.b16 %v2908, %v2900
        %v3917 = vpack.c.b16 %v2909, %v2901
        %v3918 = vpack.c.b16 %v2910, %v2902
        %v3919 = vpack.c.b16 %v2919, %v2911
        %v3920 = vpack.c.b16 %v2920, %v2912
        %v3921 = vpack.c.b16 %v2921, %v2913
        %v3922 = vpack.c.b16 %v2922, %v2914
        %v3923 = vpack.c.b16 %v2923, %v2915
        %v3924 = vpack.c.b16 %v2924, %v2916
        %v3925 = vpack.c.b16 %v2925, %v2917
        %v3926 = vpack.c.b16 %v2926, %v2918
        %v3927 = vpack.c.b16 %v2935, %v2927
        %v3928 = vpack.c.b16 %v2936, %v2928
        %v3929 = vpack.c.b16 %v2937, %v2929
        %v3930 = vpack.c.b16 %v2938, %v2930
        %v3931 = vpack.c.b16 %v2939, %v2931
        %v3932 = vpack.c.b16 %v2940, %v2932
        %v3933 = vpack.c.b16 %v2941, %v2933
        %v3934 = vpack.c.b16 %v2942, %v2934
        %v3935 = vpack.c.b16 %v2951, %v2943
        %v3936 = vpack.c.b16 %v2952, %v2944
        %v3937 = vpack.c.b16 %v2953, %v2945
        %v3938 = vpack.c.b16 %v2954, %v2946
        %v3939 = vpack.c.b16 %v2955, %v2947
        %v3940 = vpack.c.b16 %v2956, %v2948
        %v3941 = vpack.c.b16 %v2957, %v2949
        %v3942 = vpack.c.b16 %v2958, %v2950
        %v3943 = vpack.c.b16 %v2967, %v2959
        %v3944 = vpack.c.b16 %v2968, %v2960
        %v3945 = vpack.c.b16 %v2969, %v2961
        %v3946 = vpack.c.b16 %v2970, %v2962
        %v3947 = vpack.c.b16 %v2971, %v2963
        %v3948 = vpack.c.b16 %v2972, %v2964
        %v3949 = vpack.c.b16 %v2973, %v2965
        %v3950 = vpack.c.b16 %v2974, %v2966
        %v3951 = vpack.c.b16 %v2983, %v2975
        %v3952 = vpack.c.b16 %v2984, %v2976
        %v3953 = vpack.c.b16 %v2985, %v2977
        %v3954 = vpack.c.b16 %v2986, %v2978
        %v3955 = vpack.c.b16 %v2987, %v2979
        %v3956 = vpack.c.b16 %v2988, %v2980
        %v3957 = vpack.c.b16 %v2989, %v2981
        %v3958 = vpack.c.b16 %v2990, %v2982
        %v3959 = vpack.c.b16 %v2999, %v2991
        %v3960 = vpack.c.b16 %v3000, %v2992
        %v3961 = vpack.c.b16 %v3001, %v2993
        %v3962 = vpack.c.b16 %v3002, %v2994
        %v3963 = vpack.c.b16 %v3003, %v2995
        %v3964 = vpack.c.b16 %v3004, %v2996
        %v3965 = vpack.c.b16 %v3005, %v2997
        %v3966 = vpack.c.b16 %v3006, %v2998
        %v3967 = vpack.c.b16 %v3015, %v3007
        %v3968 = vpack.c.b16 %v3016, %v3008
        %v3969 = vpack.c.b16 %v3017, %v3009
        %v3970 = vpack.c.b16 %v3018, %v3010
        %v3971 = vpack.c.b16 %v3019, %v3011
        %v3972 = vpack.c.b16 %v3020, %v3012
        %v3973 = vpack.c.b16 %v3021, %v3013
        %v3974 = vpack.c.b16 %v3022, %v3014
        %v3975 = vpack.c.b16 %v3031, %v3023
        %v3976 = vpack.c.b16 %v3032, %v3024
        %v3977 = vpack.c.b16 %v3033, %v3025
        %v3978 = vpack.c.b16 %v3034, %v3026
        %v3979 = vpack.c.b16 %v3035, %v3027
        %v3980 = vpack.c.b16 %v3036, %v3028
        %v3981 = vpack.c.b16 %v3037, %v3029
        %v3982 = vpack.c.b16 %v3038, %v3030
        %v3983 = vpack.c.b16 %v3047, %v3039
        %v3984 = vpack.c.b16 %v3048, %v3040
        %v3985 = vpack.c.b16 %v3049, %v3041
        %v3986 = vpack.c.b16 %v3050, %v3042
        %v3987 = vpack.c.b16 %v3051, %v3043
        %v3988 = vpack.c.b16 %v3052, %v3044
        %v3989 = vpack.c.b16 %v3053, %v3045
        %v3990 = vpack.c.b16 %v3054, %v3046
        %v3991 = vpack.c.b16 %v3063, %v3055
        %v3992 = vpack.c.b16 %v3064, %v3056
        %v3993 = vpack.c.b16 %v3065, %v3057
        %v3994 = vpack.c.b16 %v3066, %v3058
        %v3995 = vpack.c.b16 %v3067, %v3059
        %v3996 = vpack.c.b16 %v3068, %v3060
        %v3997 = vpack.c.b16 %v3069, %v3061
        %v3998 = vpack.c.b16 %v3070, %v3062
        %v3999 = vpack.c.b16 %v3079, %v3071
        %v4000 = vpack.c.b16 %v3080, %v3072
        %v4001 = vpack.c.b16 %v3081, %v3073
        %v4002 = vpack.c.b16 %v3082, %v3074
        %v4003 = vpack.c.b16 %v3083, %v3075
        %v4004 = vpack.c.b16 %v3084, %v3076
        %v4005 = vpack.c.b16 %v3085, %v3077
        %v4006 = vpack.c.b16 %v3086, %v3078
        %v4007 = vpack.c.b16 %v3095, %v3087
        %v4008 = vpack.c.b16 %v3096, %v3088
        %v4009 = vpack.c.b16 %v3097, %v3089
        %v4010 = vpack.c.b16 %v3098, %v3090
        %v4011 = vpack.c.b16 %v3099, %v3091
        %v4012 = vpack.c.b16 %v3100, %v3092
        %v4013 = vpack.c.b16 %v3101, %v3093
        %v4014 = vpack.c.b16 %v3102, %v3094
        %v4015 = vpack.c.b16 %v3111, %v3103
        %v4016 = vpack.c.b16 %v3112, %v3104
        %v4017 = vpack.c.b16 %v3113, %v3105
        %v4018 = vpack.c.b16 %v3114, %v3106
        %v4019 = vpack.c.b16 %v3115, %v3107
        %v4020 = vpack.c.b16 %v3116, %v3108
        %v4021 = vpack.c.b16 %v3117, %v3109
        %v4022 = vpack.c.b16 %v3118, %v3110
        %v4023 = vpack.c.b16 %v3127, %v3119
        %v4024 = vpack.c.b16 %v3128, %v3120
        %v4025 = vpack.c.b16 %v3129, %v3121
        %v4026 = vpack.c.b16 %v3130, %v3122
        %v4027 = vpack.c.b16 %v3131, %v3123
        %v4028 = vpack.c.b16 %v3132, %v3124
        %v4029 = vpack.c.b16 %v3133, %v3125
        %v4030 = vpack.c.b16 %v3134, %v3126
        %v4031 = vpack.c.b16 %v3143, %v3135
        %v4032 = vpack.c.b16 %v3144, %v3136
        %v4033 = vpack.c.b16 %v3145, %v3137
        %v4034 = vpack.c.b16 %v3146, %v3138
        %v4035 = vpack.c.b16 %v3147, %v3139
        %v4036 = vpack.c.b16 %v3148, %v3140
        %v4037 = vpack.c.b16 %v3149, %v3141
        %v4038 = vpack.c.b16 %v3150, %v3142
        %v4039 = vpack.c.b16 %v3159, %v3151
        %v4040 = vpack.c.b16 %v3160, %v3152
        %v4041 = vpack.c.b16 %v3161, %v3153
        %v4042 = vpack.c.b16 %v3162, %v3154
        %v4043 = vpack.c.b16 %v3163, %v3155
        %v4044 = vpack.c.b16 %v3164, %v3156
        %v4045 = vpack.c.b16 %v3165, %v3157
        %v4046 = vpack.c.b16 %v3166, %v3158
        %v4047 = vpack.c.b16 %v3175, %v3167
        %v4048 = vpack.c.b16 %v3176, %v3168
        %v4049 = vpack.c.b16 %v3177, %v3169
        %v4050 = vpack.c.b16 %v3178, %v3170
        %v4051 = vpack.c.b16 %v3179, %v3171
        %v4052 = vpack.c.b16 %v3180, %v3172
        %v4053 = vpack.c.b16 %v3181, %v3173
        %v4054 = vpack.c.b16 %v3182, %v3174
        %v4055 = vpack.c.b16 %v3191, %v3183
        %v4056 = vpack.c.b16 %v3192, %v3184
        %v4057 = vpack.c.b16 %v3193, %v3185
        %v4058 = vpack.c.b16 %v3194, %v3186
        %v4059 = vpack.c.b16 %v3195, %v3187
        %v4060 = vpack.c.b16 %v3196, %v3188
        %v4061 = vpack.c.b16 %v3197, %v3189
        %v4062 = vpack.c.b16 %v3198, %v3190
        %v4063 = vpack.c.b16 %v3207, %v3199
        %v4064 = vpack.c.b16 %v3208, %v3200
        %v4065 = vpack.c.b16 %v3209, %v3201
        %v4066 = vpack.c.b16 %v3210, %v3202
        %v4067 = vpack.c.b16 %v3211, %v3203
        %v4068 = vpack.c.b16 %v3212, %v3204
        %v4069 = vpack.c.b16 %v3213, %v3205
        %v4070 = vpack.c.b16 %v3214, %v3206
        %v4071 = vpack.c.b16 %v3223, %v3215
        %v4072 = vpack.c.b16 %v3224, %v3216
        %v4073 = vpack.c.b16 %v3225, %v3217
        %v4074 = vpack.c.b16 %v3226, %v3218
        %v4075 = vpack.c.b16 %v3227, %v3219
        %v4076 = vpack.c.b16 %v3228, %v3220
        %v4077 = vpack.c.b16 %v3229, %v3221
        %v4078 = vpack.c.b16 %v3230, %v3222
        %v4079 = vpack.c.b16 %v3239, %v3231
        %v4080 = vpack.c.b16 %v3240, %v3232
        %v4081 = vpack.c.b16 %v3241, %v3233
        %v4082 = vpack.c.b16 %v3242, %v3234
        %v4083 = vpack.c.b16 %v3243, %v3235
        %v4084 = vpack.c.b16 %v3244, %v3236
        %v4085 = vpack.c.b16 %v3245, %v3237
        %v4086 = vpack.c.b16 %v3246, %v3238
        %v4087 = vpack.c.b16 %v3255, %v3247
        %v4088 = vpack.c.b16 %v3256, %v3248
        %v4089 = vpack.c.b16 %v3257, %v3249
        %v4090 = vpack.c.b16 %v3258, %v3250
        %v4091 = vpack.c.b16 %v3259, %v3251
        %v4092 = vpack.c.b16 %v3260, %v3252
        %v4093 = vpack.c.b16 %v3261, %v3253
        %v4094 = vpack.c.b16 %v3262, %v3254
        %v4095 = vpack.c.b16 %v3271, %v3263
        %v4096 = vpack.c.b16 %v3272, %v3264
        %v4097 = vpack.c.b16 %v3273, %v3265
        %v4098 = vpack.c.b16 %v3274, %v3266
        %v4099 = vpack.c.b16 %v3275, %v3267
        %v4100 = vpack.c.b16 %v3276, %v3268
        %v4101 = vpack.c.b16 %v3277, %v3269
        %v4102 = vpack.c.b16 %v3278, %v3270
        %v4103 = vpack.c.b16 %v3287, %v3279
        %v4104 = vpack.c.b16 %v3288, %v3280
        %v4105 = vpack.c.b16 %v3289, %v3281
        %v4106 = vpack.c.b16 %v3290, %v3282
        %v4107 = vpack.c.b16 %v3291, %v3283
        %v4108 = vpack.c.b16 %v3292, %v3284
        %v4109 = vpack.c.b16 %v3293, %v3285
        %v4110 = vpack.c.b16 %v3294, %v3286
        %v4111 = vpack.c.b16 %v3303, %v3295
        %v4112 = vpack.c.b16 %v3304, %v3296
        %v4113 = vpack.c.b16 %v3305, %v3297
        %v4114 = vpack.c.b16 %v3306, %v3298
        %v4115 = vpack.c.b16 %v3307, %v3299
        %v4116 = vpack.c.b16 %v3308, %v3300
        %v4117 = vpack.c.b16 %v3309, %v3301
        %v4118 = vpack.c.b16 %v3310, %v3302
        %v4119 = vpack.c.b16 %v3319, %v3311
        %v4120 = vpack.c.b16 %v3320, %v3312
        %v4121 = vpack.c.b16 %v3321, %v3313
        %v4122 = vpack.c.b16 %v3322, %v3314
        %v4123 = vpack.c.b16 %v3323, %v3315
        %v4124 = vpack.c.b16 %v3324, %v3316
        %v4125 = vpack.c.b16 %v3325, %v3317
        %v4126 = vpack.c.b16 %v3326, %v3318
        %v4127 = vpack.c.b16 %v3335, %v3327
        %v4128 = vpack.c.b16 %v3336, %v3328
        %v4129 = vpack.c.b16 %v3337, %v3329
        %v4130 = vpack.c.b16 %v3338, %v3330
        %v4131 = vpack.c.b16 %v3339, %v3331
        %v4132 = vpack.c.b16 %v3340, %v3332
        %v4133 = vpack.c.b16 %v3341, %v3333
        %v4134 = vpack.c.b16 %v3342, %v3334
        %v4135 = vpack.c.b16 %v3351, %v3343
        %v4136 = vpack.c.b16 %v3352, %v3344
        %v4137 = vpack.c.b16 %v3353, %v3345
        %v4138 = vpack.c.b16 %v3354, %v3346
        %v4139 = vpack.c.b16 %v3355, %v3347
        %v4140 = vpack.c.b16 %v3356, %v3348
        %v4141 = vpack.c.b16 %v3357, %v3349
        %v4142 = vpack.c.b16 %v3358, %v3350
        %v4143 = vpack.c.b16 %v3367, %v3359
        %v4144 = vpack.c.b16 %v3368, %v3360
        %v4145 = vpack.c.b16 %v3369, %v3361
        %v4146 = vpack.c.b16 %v3370, %v3362
        %v4147 = vpack.c.b16 %v3371, %v3363
        %v4148 = vpack.c.b16 %v3372, %v3364
        %v4149 = vpack.c.b16 %v3373, %v3365
        %v4150 = vpack.c.b16 %v3374, %v3366
        %v4151 = vpack.c.b16 %v3383, %v3375
        %v4152 = vpack.c.b16 %v3384, %v3376
        %v4153 = vpack.c.b16 %v3385, %v3377
        %v4154 = vpack.c.b16 %v3386, %v3378
        %v4155 = vpack.c.b16 %v3387, %v3379
        %v4156 = vpack.c.b16 %v3388, %v3380
        %v4157 = vpack.c.b16 %v3389, %v3381
        %v4158 = vpack.c.b16 %v3390, %v3382
        %v4159 = vpack.c.b16 %v3399, %v3391
        %v4160 = vpack.c.b16 %v3400, %v3392
        %v4161 = vpack.c.b16 %v3401, %v3393
        %v4162 = vpack.c.b16 %v3402, %v3394
        %v4163 = vpack.c.b16 %v3403, %v3395
        %v4164 = vpack.c.b16 %v3404, %v3396
        %v4165 = vpack.c.b16 %v3405, %v3397
        %v4166 = vpack.c.b16 %v3406, %v3398
        %v4167 = vpack.c.b16 %v3415, %v3407
        %v4168 = vpack.c.b16 %v3416, %v3408
        %v4169 = vpack.c.b16 %v3417, %v3409
        %v4170 = vpack.c.b16 %v3418, %v3410
        %v4171 = vpack.c.b16 %v3419, %v3411
        %v4172 = vpack.c.b16 %v3420, %v3412
        %v4173 = vpack.c.b16 %v3421, %v3413
        %v4174 = vpack.c.b16 %v3422, %v3414
        %v4175 = vpack.c.b16 %v3431, %v3423
        %v4176 = vpack.c.b16 %v3432, %v3424
        %v4177 = vpack.c.b16 %v3433, %v3425
        %v4178 = vpack.c.b16 %v3434, %v3426
        %v4179 = vpack.c.b16 %v3435, %v3427
        %v4180 = vpack.c.b16 %v3436, %v3428
        %v4181 = vpack.c.b16 %v3437, %v3429
        %v4182 = vpack.c.b16 %v3438, %v3430
        %v4183 = vpack.c.b16 %v3447, %v3439
        %v4184 = vpack.c.b16 %v3448, %v3440
        %v4185 = vpack.c.b16 %v3449, %v3441
        %v4186 = vpack.c.b16 %v3450, %v3442
        %v4187 = vpack.c.b16 %v3451, %v3443
        %v4188 = vpack.c.b16 %v3452, %v3444
        %v4189 = vpack.c.b16 %v3453, %v3445
        %v4190 = vpack.c.b16 %v3454, %v3446
        %v4191 = vpack.c.b16 %v3463, %v3455
        %v4192 = vpack.c.b16 %v3464, %v3456
        %v4193 = vpack.c.b16 %v3465, %v3457
        %v4194 = vpack.c.b16 %v3466, %v3458
        %v4195 = vpack.c.b16 %v3467, %v3459
        %v4196 = vpack.c.b16 %v3468, %v3460
        %v4197 = vpack.c.b16 %v3469, %v3461
        %v4198 = vpack.c.b16 %v3470, %v3462
        %v4199 = vpack.c.b16 %v3479, %v3471
        %v4200 = vpack.c.b16 %v3480, %v3472
        %v4201 = vpack.c.b16 %v3481, %v3473
        %v4202 = vpack.c.b16 %v3482, %v3474
        %v4203 = vpack.c.b16 %v3483, %v3475
        %v4204 = vpack.c.b16 %v3484, %v3476
        %v4205 = vpack.c.b16 %v3485, %v3477
        %v4206 = vpack.c.b16 %v3486, %v3478
        %v4207 = vpack.c.b16 %v3495, %v3487
        %v4208 = vpack.c.b16 %v3496, %v3488
        %v4209 = vpack.c.b16 %v3497, %v3489
        %v4210 = vpack.c.b16 %v3498, %v3490
        %v4211 = vpack.c.b16 %v3499, %v3491
        %v4212 = vpack.c.b16 %v3500, %v3492
        %v4213 = vpack.c.b16 %v3501, %v3493
        %v4214 = vpack.c.b16 %v3502, %v3494
        %v4215 = vpack.c.b16 %v3511, %v3503
        %v4216 = vpack.c.b16 %v3512, %v3504
        %v4217 = vpack.c.b16 %v3513, %v3505
        %v4218 = vpack.c.b16 %v3514, %v3506
        %v4219 = vpack.c.b16 %v3515, %v3507
        %v4220 = vpack.c.b16 %v3516, %v3508
        %v4221 = vpack.c.b16 %v3517, %v3509
        %v4222 = vpack.c.b16 %v3518, %v3510
        %v4223 = vpack.c.b16 %v3527, %v3519
        %v4224 = vpack.c.b16 %v3528, %v3520
        %v4225 = vpack.c.b16 %v3529, %v3521
        %v4226 = vpack.c.b16 %v3530, %v3522
        %v4227 = vpack.c.b16 %v3531, %v3523
        %v4228 = vpack.c.b16 %v3532, %v3524
        %v4229 = vpack.c.b16 %v3533, %v3525
        %v4230 = vpack.c.b16 %v3534, %v3526
        %v4231 = vpack.c.b16 %v3543, %v3535
        %v4232 = vpack.c.b16 %v3544, %v3536
        %v4233 = vpack.c.b16 %v3545, %v3537
        %v4234 = vpack.c.b16 %v3546, %v3538
        %v4235 = vpack.c.b16 %v3547, %v3539
        %v4236 = vpack.c.b16 %v3548, %v3540
        %v4237 = vpack.c.b16 %v3549, %v3541
        %v4238 = vpack.c.b16 %v3550, %v3542
        %v4239 = vpack.c.b16 %v3559, %v3551
        %v4240 = vpack.c.b16 %v3560, %v3552
        %v4241 = vpack.c.b16 %v3561, %v3553
        %v4242 = vpack.c.b16 %v3562, %v3554
        %v4243 = vpack.c.b16 %v3563, %v3555
        %v4244 = vpack.c.b16 %v3564, %v3556
        %v4245 = vpack.c.b16 %v3565, %v3557
        %v4246 = vpack.c.b16 %v3566, %v3558
        %v4247 = vpack.c.b16 %v3575, %v3567
        %v4248 = vpack.c.b16 %v3576, %v3568
        %v4249 = vpack.c.b16 %v3577, %v3569
        %v4250 = vpack.c.b16 %v3578, %v3570
        %v4251 = vpack.c.b16 %v3579, %v3571
        %v4252 = vpack.c.b16 %v3580, %v3572
        %v4253 = vpack.c.b16 %v3581, %v3573
        %v4254 = vpack.c.b16 %v3582, %v3574
        %v4255 = vpack.c.b16 %v3591, %v3583
        %v4256 = vpack.c.b16 %v3592, %v3584
        %v4257 = vpack.c.b16 %v3593, %v3585
        %v4258 = vpack.c.b16 %v3594, %v3586
        %v4259 = vpack.c.b16 %v3595, %v3587
        %v4260 = vpack.c.b16 %v3596, %v3588
        %v4261 = vpack.c.b16 %v3597, %v3589
        %v4262 = vpack.c.b16 %v3598, %v3590
        %v4263 = vpack.c.b16 %v3607, %v3599
        %v4264 = vpack.c.b16 %v3608, %v3600
        %v4265 = vpack.c.b16 %v3609, %v3601
        %v4266 = vpack.c.b16 %v3610, %v3602
        %v4267 = vpack.c.b16 %v3611, %v3603
        %v4268 = vpack.c.b16 %v3612, %v3604
        %v4269 = vpack.c.b16 %v3613, %v3605
        %v4270 = vpack.c.b16 %v3614, %v3606
        %v4271 = vpack.c.b16 %v3623, %v3615
        %v4272 = vpack.c.b16 %v3624, %v3616
        %v4273 = vpack.c.b16 %v3625, %v3617
        %v4274 = vpack.c.b16 %v3626, %v3618
        %v4275 = vpack.c.b16 %v3627, %v3619
        %v4276 = vpack.c.b16 %v3628, %v3620
        %v4277 = vpack.c.b16 %v3629, %v3621
        %v4278 = vpack.c.b16 %v3630, %v3622
        %v4279 = vpack.c.b16 %v3639, %v3631
        %v4280 = vpack.c.b16 %v3640, %v3632
        %v4281 = vpack.c.b16 %v3641, %v3633
        %v4282 = vpack.c.b16 %v3642, %v3634
        %v4283 = vpack.c.b16 %v3643, %v3635
        %v4284 = vpack.c.b16 %v3644, %v3636
        %v4285 = vpack.c.b16 %v3645, %v3637
        %v4286 = vpack.c.b16 %v3646, %v3638
        %v4287 = vpack.c.b16 %v3655, %v3647
        %v4288 = vpack.c.b16 %v3656, %v3648
        %v4289 = vpack.c.b16 %v3657, %v3649
        %v4290 = vpack.c.b16 %v3658, %v3650
        %v4291 = vpack.c.b16 %v3659, %v3651
        %v4292 = vpack.c.b16 %v3660, %v3652
        %v4293 = vpack.c.b16 %v3661, %v3653
        %v4294 = vpack.c.b16 %v3662, %v3654
        %v4295 = vpack.c.b16 %v3671, %v3663
        %v4296 = vpack.c.b16 %v3672, %v3664
        %v4297 = vpack.c.b16 %v3673, %v3665
        %v4298 = vpack.c.b16 %v3674, %v3666
        %v4299 = vpack.c.b16 %v3675, %v3667
        %v4300 = vpack.c.b16 %v3676, %v3668
        %v4301 = vpack.c.b16 %v3677, %v3669
        %v4302 = vpack.c.b16 %v3678, %v3670
        %v4303 = vpack.c.b16 %v3687, %v3679
        %v4304 = vpack.c.b16 %v3688, %v3680
        %v4305 = vpack.c.b16 %v3689, %v3681
        %v4306 = vpack.c.b16 %v3690, %v3682
        %v4307 = vpack.c.b16 %v3691, %v3683
        %v4308 = vpack.c.b16 %v3692, %v3684
        %v4309 = vpack.c.b16 %v3693, %v3685
        %v4310 = vpack.c.b16 %v3694, %v3686
        %v4311 = vpack.c.b16 %v3703, %v3695
        %v4312 = vpack.c.b16 %v3704, %v3696
        %v4313 = vpack.c.b16 %v3705, %v3697
        %v4314 = vpack.c.b16 %v3706, %v3698
        %v4315 = vpack.c.b16 %v3707, %v3699
        %v4316 = vpack.c.b16 %v3708, %v3700
        %v4317 = vpack.c.b16 %v3709, %v3701
        %v4318 = vpack.c.b16 %v3710, %v3702
        %v4319 = vpack.c.b16 %v3719, %v3711
        %v4320 = vpack.c.b16 %v3720, %v3712
        %v4321 = vpack.c.b16 %v3721, %v3713
        %v4322 = vpack.c.b16 %v3722, %v3714
        %v4323 = vpack.c.b16 %v3723, %v3715
        %v4324 = vpack.c.b16 %v3724, %v3716
        %v4325 = vpack.c.b16 %v3725, %v3717
        %v4326 = vpack.c.b16 %v3726, %v3718
        %v4327 = vpack.c.b16 %v3735, %v3727
        %v4328 = vpack.c.b16 %v3736, %v3728
        %v4329 = vpack.c.b16 %v3737, %v3729
        %v4330 = vpack.c.b16 %v3738, %v3730
        %v4331 = vpack.c.b16 %v3739, %v3731
        %v4332 = vpack.c.b16 %v3740, %v3732
        %v4333 = vpack.c.b16 %v3741, %v3733
        %v4334 = vpack.c.b16 %v3742, %v3734
        %v4335 = vpack.c.b16 %v3751, %v3743
        %v4336 = vpack.c.b16 %v3752, %v3744
        %v4337 = vpack.c.b16 %v3753, %v3745
        %v4338 = vpack.c.b16 %v3754, %v3746
        %v4339 = vpack.c.b16 %v3755, %v3747
        %v4340 = vpack.c.b16 %v3756, %v3748
        %v4341 = vpack.c.b16 %v3757, %v3749
        %v4342 = vpack.c.b16 %v3758, %v3750
        %v4343 = vpack.c.b16 %v3767, %v3759
        %v4344 = vpack.c.b16 %v3768, %v3760
        %v4345 = vpack.c.b16 %v3769, %v3761
        %v4346 = vpack.c.b16 %v3770, %v3762
        %v4347 = vpack.c.b16 %v3771, %v3763
        %v4348 = vpack.c.b16 %v3772, %v3764
        %v4349 = vpack.c.b16 %v3773, %v3765
        %v4350 = vpack.c.b16 %v3774, %v3766
        %v4351 = vpack.c.b16 %v3783, %v3775
        %v4352 = vpack.c.b16 %v3784, %v3776
        %v4353 = vpack.c.b16 %v3785, %v3777
        %v4354 = vpack.c.b16 %v3786, %v3778
        %v4355 = vpack.c.b16 %v3787, %v3779
        %v4356 = vpack.c.b16 %v3788, %v3780
        %v4357 = vpack.c.b16 %v3789, %v3781
        %v4358 = vpack.c.b16 %v3790, %v3782
        %v4359 = vpack.c.b16 %v3799, %v3791
        %v4360 = vpack.c.b16 %v3800, %v3792
        %v4361 = vpack.c.b16 %v3801, %v3793
        %v4362 = vpack.c.b16 %v3802, %v3794
        %v4363 = vpack.c.b16 %v3803, %v3795
        %v4364 = vpack.c.b16 %v3804, %v3796
        %v4365 = vpack.c.b16 %v3805, %v3797
        %v4366 = vpack.c.b16 %v3806, %v3798
        %v4367 = vpack.c.b16 %v3815, %v3807
        %v4368 = vpack.c.b16 %v3816, %v3808
        %v4369 = vpack.c.b16 %v3817, %v3809
        %v4370 = vpack.c.b16 %v3818, %v3810
        %v4371 = vpack.c.b16 %v3819, %v3811
        %v4372 = vpack.c.b16 %v3820, %v3812
        %v4373 = vpack.c.b16 %v3821, %v3813
        %v4374 = vpack.c.b16 %v3822, %v3814
        %v4375 = vpack.c.b16 %v3831, %v3823
        %v4376 = vpack.c.b16 %v3832, %v3824
        %v4377 = vpack.c.b16 %v3833, %v3825
        %v4378 = vpack.c.b16 %v3834, %v3826
        %v4379 = vpack.c.b16 %v3835, %v3827
        %v4380 = vpack.c.b16 %v3836, %v3828
        %v4381 = vpack.c.b16 %v3837, %v3829
        %v4382 = vpack.c.b16 %v3838, %v3830
        %v4383 = vpack.c.b16 %v3847, %v3839
        %v4384 = vpack.c.b16 %v3848, %v3840
        %v4385 = vpack.c.b16 %v3849, %v3841
        %v4386 = vpack.c.b16 %v3850, %v3842
        %v4387 = vpack.c.b16 %v3851, %v3843
        %v4388 = vpack.c.b16 %v3852, %v3844
        %v4389 = vpack.c.b16 %v3853, %v3845
        %v4390 = vpack.c.b16 %v3854, %v3846
        %v4391 = vpack.c.b16 %v3863, %v3855
        %v4392 = vpack.c.b16 %v3864, %v3856
        %v4393 = vpack.c.b16 %v3865, %v3857
        %v4394 = vpack.c.b16 %v3866, %v3858
        %v4395 = vpack.c.b16 %v3867, %v3859
        %v4396 = vpack.c.b16 %v3868, %v3860
        %v4397 = vpack.c.b16 %v3869, %v3861
        %v4398 = vpack.c.b16 %v3870, %v3862
        %v4399 = vpack.c.b16 %v3879, %v3871
        %v4400 = vpack.c.b16 %v3880, %v3872
        %v4401 = vpack.c.b16 %v3881, %v3873
        %v4402 = vpack.c.b16 %v3882, %v3874
        %v4403 = vpack.c.b16 %v3883, %v3875
        %v4404 = vpack.c.b16 %v3884, %v3876
        %v4405 = vpack.c.b16 %v3885, %v3877
        %v4406 = vpack.c.b16 %v3886, %v3878
        %v4407 = vpack.c.b16 %v3895, %v3887
        %v4408 = vpack.c.b16 %v3896, %v3888
        %v4409 = vpack.c.b16 %v3897, %v3889
        %v4410 = vpack.c.b16 %v3898, %v3890
        %v4411 = vpack.c.b16 %v3899, %v3891
        %v4412 = vpack.c.b16 %v3900, %v3892
        %v4413 = vpack.c.b16 %v3901, %v3893
        %v4414 = vpack.c.b16 %v3902, %v3894
        %4927 = vmatprep.subr.bf16.mxu0 %v3960
        %4928 = vmatpush1.bf16.msra.mxu0 %v3959
        %4929 = vmatprep.subr.bf16.mxu0 %v3952
        %4930 = vmatpush1.bf16.msra.mxu0 %v3951
        %4931 = vmatprep.subr.bf16.mxu0 %v3944
        %4932 = vmatpush1.bf16.msra.mxu0 %v3943
        %4933 = vmatprep.subr.bf16.mxu0 %v3936
        %4934 = vmatpush1.bf16.msra.mxu0 %v3935
        %4935 = vmatprep.subr.bf16.mxu0 %v3928
        %4936 = vmatpush1.bf16.msra.mxu0 %v3927
        %4937 = vmatprep.subr.bf16.mxu0 %v3920
        %4938 = vmatpush1.bf16.msra.mxu0 %v3919
        %4939 = vmatprep.subr.bf16.mxu0 %v3912
        %4940 = vmatpush1.bf16.msra.mxu0 %v3911
        %4941 = vmatprep.subr.bf16.mxu0 %v3904
        %4942 = vmatpush1.bf16.msra.mxu0 %v3903
        %4943 = vmatprep.subr.bf16.mxu0 %v4024
        %4944 = vmatpush2.bf16.msra.mxu0 %v4023
        %4945 = vmatprep.subr.bf16.mxu0 %v4016
        %4946 = vmatpush2.bf16.msra.mxu0 %v4015
        %4947 = vmatprep.subr.bf16.mxu0 %v4008
        %4948 = vmatpush2.bf16.msra.mxu0 %v4007
        %4949 = vmatprep.subr.bf16.mxu0 %v4000
        %4950 = vmatpush2.bf16.msra.mxu0 %v3999
        %4951 = vmatprep.subr.bf16.mxu0 %v3992
        %4952 = vmatpush2.bf16.msra.mxu0 %v3991
        %4953 = vmatprep.subr.bf16.mxu0 %v3984
        %4954 = vmatpush2.bf16.msra.mxu0 %v3983
        %4955 = vmatprep.subr.bf16.mxu0 %v3976
        %4956 = vmatpush2.bf16.msra.mxu0 %v3975
        %4957 = vmatprep.subr.bf16.mxu0 %v3968
        %4958 = vmatpush2.bf16.msra.mxu0 %v3967
        %4959 = vmatprep.mubr.bf16.mxu0 %v1806
        %4960 = vmatmul.mubr.bf16.gmra.mxu0 %v1805
        %v4961 = vpop.f32.mrf.mxu0
        %v4962 = vadd.f32 %v2330, %v4961
        %v4963 = vpop.f32.mrf.mxu0
        %v4964 = vadd.f32 %v2334, %v4963
        %v4965 = vpop.f32.mrf.mxu0
        %v4966 = vpop.f32.mrf.mxu0
        %4967 = vdwg.mxu0
        %4968 = vmatprep.subr.bf16.mxu0 %v4088
        %4969 = vmatpush1.bf16.msra.mxu0 %v4087
        %4970 = vmatprep.subr.bf16.mxu0 %v4080
        %4971 = vmatpush1.bf16.msra.mxu0 %v4079
        %4972 = vmatprep.subr.bf16.mxu0 %v4072
        %4973 = vmatpush1.bf16.msra.mxu0 %v4071
        %4974 = vmatprep.subr.bf16.mxu0 %v4064
        %4975 = vmatpush1.bf16.msra.mxu0 %v4063
        %4976 = vmatprep.subr.bf16.mxu0 %v4056
        %4977 = vmatpush1.bf16.msra.mxu0 %v4055
        %4978 = vmatprep.subr.bf16.mxu0 %v4048
        %4979 = vmatpush1.bf16.msra.mxu0 %v4047
        %4980 = vmatprep.subr.bf16.mxu0 %v4040
        %4981 = vmatpush1.bf16.msra.mxu0 %v4039
        %4982 = vmatprep.subr.bf16.mxu0 %v4032
        %4983 = vmatpush1.bf16.msra.mxu0 %v4031
        %4984 = vmatprep.subr.bf16.mxu0 %v4152
        %4985 = vmatpush2.bf16.msra.mxu0 %v4151
        %4986 = vmatprep.subr.bf16.mxu0 %v4144
        %4987 = vmatpush2.bf16.msra.mxu0 %v4143
        %4988 = vmatprep.subr.bf16.mxu0 %v4136
        %4989 = vmatpush2.bf16.msra.mxu0 %v4135
        %4990 = vmatprep.subr.bf16.mxu0 %v4128
        %4991 = vmatpush2.bf16.msra.mxu0 %v4127
        %4992 = vmatprep.subr.bf16.mxu0 %v4120
        %4993 = vmatpush2.bf16.msra.mxu0 %v4119
        %4994 = vmatprep.subr.bf16.mxu0 %v4112
        %4995 = vmatpush2.bf16.msra.mxu0 %v4111
        %4996 = vmatprep.subr.bf16.mxu0 %v4104
        %4997 = vmatpush2.bf16.msra.mxu0 %v4103
        %4998 = vmatprep.subr.bf16.mxu0 %v4096
        %4999 = vmatpush2.bf16.msra.mxu0 %v4095
        %5000 = vmatprep.mubr.bf16.mxu0 %v1808
        %5001 = vmatmul.mubr.bf16.gmra.mxu0 %v1807
        %v5002 = vpop.f32.mrf.mxu0
        %v5003 = vadd.f32 %v4962, %v5002
        %v5004 = vpop.f32.mrf.mxu0
        %v5005 = vadd.f32 %v4964, %v5004
        %v5006 = vpop.f32.mrf.mxu0
        %v5007 = vpop.f32.mrf.mxu0
        %5008 = vdwg.mxu0
        %5009 = vmatprep.subr.bf16.mxu0 %v4216
        %5010 = vmatpush1.bf16.msra.mxu0 %v4215
        %5011 = vmatprep.subr.bf16.mxu0 %v4208
        %5012 = vmatpush1.bf16.msra.mxu0 %v4207
        %5013 = vmatprep.subr.bf16.mxu0 %v4200
        %5014 = vmatpush1.bf16.msra.mxu0 %v4199
        %5015 = vmatprep.subr.bf16.mxu0 %v4192
        %5016 = vmatpush1.bf16.msra.mxu0 %v4191
        %5017 = vmatprep.subr.bf16.mxu0 %v4184
        %5018 = vmatpush1.bf16.msra.mxu0 %v4183
        %5019 = vmatprep.subr.bf16.mxu0 %v4176
        %5020 = vmatpush1.bf16.msra.mxu0 %v4175
        %5021 = vmatprep.subr.bf16.mxu0 %v4168
        %5022 = vmatpush1.bf16.msra.mxu0 %v4167
        %5023 = vmatprep.subr.bf16.mxu0 %v4160
        %5024 = vmatpush1.bf16.msra.mxu0 %v4159
        %5025 = vmatprep.subr.bf16.mxu0 %v4280
        %5026 = vmatpush2.bf16.msra.mxu0 %v4279
        %5027 = vmatprep.subr.bf16.mxu0 %v4272
        %5028 = vmatpush2.bf16.msra.mxu0 %v4271
        %5029 = vmatprep.subr.bf16.mxu0 %v4264
        %5030 = vmatpush2.bf16.msra.mxu0 %v4263
        %5031 = vmatprep.subr.bf16.mxu0 %v4256
        %5032 = vmatpush2.bf16.msra.mxu0 %v4255
        %5033 = vmatprep.subr.bf16.mxu0 %v4248
        %5034 = vmatpush2.bf16.msra.mxu0 %v4247
        %5035 = vmatprep.subr.bf16.mxu0 %v4240
        %5036 = vmatpush2.bf16.msra.mxu0 %v4239
        %5037 = vmatprep.subr.bf16.mxu0 %v4232
        %5038 = vmatpush2.bf16.msra.mxu0 %v4231
        %5039 = vmatprep.subr.bf16.mxu0 %v4224
        %5040 = vmatpush2.bf16.msra.mxu0 %v4223
        %5041 = vmatprep.mubr.bf16.mxu0 %v1810
        %5042 = vmatmul.mubr.bf16.gmra.mxu0 %v1809
        %v5043 = vpop.f32.mrf.mxu0
        %v5044 = vadd.f32 %v5003, %v5043
        %v5045 = vpop.f32.mrf.mxu0
        %v5046 = vadd.f32 %v5005, %v5045
        %v5047 = vpop.f32.mrf.mxu0
        %v5048 = vpop.f32.mrf.mxu0
        %5049 = vdwg.mxu0
        %5050 = vmatprep.subr.bf16.mxu0 %v4344
        %5051 = vmatpush1.bf16.msra.mxu0 %v4343
        %5052 = vmatprep.subr.bf16.mxu0 %v4336
        %5053 = vmatpush1.bf16.msra.mxu0 %v4335
        %5054 = vmatprep.subr.bf16.mxu0 %v4328
        %5055 = vmatpush1.bf16.msra.mxu0 %v4327
        %5056 = vmatprep.subr.bf16.mxu0 %v4320
        %5057 = vmatpush1.bf16.msra.mxu0 %v4319
        %5058 = vmatprep.subr.bf16.mxu0 %v4312
        %5059 = vmatpush1.bf16.msra.mxu0 %v4311
        %5060 = vmatprep.subr.bf16.mxu0 %v4304
        %5061 = vmatpush1.bf16.msra.mxu0 %v4303
        %5062 = vmatprep.subr.bf16.mxu0 %v4296
        %5063 = vmatpush1.bf16.msra.mxu0 %v4295
        %5064 = vmatprep.subr.bf16.mxu0 %v4288
        %5065 = vmatpush1.bf16.msra.mxu0 %v4287
        %5066 = vmatprep.subr.bf16.mxu0 %v4408
        %5067 = vmatpush2.bf16.msra.mxu0 %v4407
        %5068 = vmatprep.subr.bf16.mxu0 %v4400
        %5069 = vmatpush2.bf16.msra.mxu0 %v4399
        %5070 = vmatprep.subr.bf16.mxu0 %v4392
        %5071 = vmatpush2.bf16.msra.mxu0 %v4391
        %5072 = vmatprep.subr.bf16.mxu0 %v4384
        %5073 = vmatpush2.bf16.msra.mxu0 %v4383
        %5074 = vmatprep.subr.bf16.mxu0 %v4376
        %5075 = vmatpush2.bf16.msra.mxu0 %v4375
        %5076 = vmatprep.subr.bf16.mxu0 %v4368
        %5077 = vmatpush2.bf16.msra.mxu0 %v4367
        %5078 = vmatprep.subr.bf16.mxu0 %v4360
        %5079 = vmatpush2.bf16.msra.mxu0 %v4359
        %5080 = vmatprep.subr.bf16.mxu0 %v4352
        %5081 = vmatpush2.bf16.msra.mxu0 %v4351
        %5082 = vmatprep.mubr.bf16.mxu0 %v1812
        %5083 = vmatmul.mubr.bf16.gmra.mxu0 %v1811
        %v5084 = vpop.f32.mrf.mxu0
        %v5085 = vadd.f32 %v5044, %v5084
        %v5086 = vpop.f32.mrf.mxu0
        %v5087 = vadd.f32 %v5046, %v5086
        %v5088 = vpop.f32.mrf.mxu0
        %v5089 = vpop.f32.mrf.mxu0
        %5090 = vdwg.mxu0
        %5091 = vmatprep.subr.bf16.mxu0 %v3962
        %5092 = vmatpush1.bf16.msra.mxu0 %v3961
        %5093 = vmatprep.subr.bf16.mxu0 %v3954
        %5094 = vmatpush1.bf16.msra.mxu0 %v3953
        %5095 = vmatprep.subr.bf16.mxu0 %v3946
        %5096 = vmatpush1.bf16.msra.mxu0 %v3945
        %5097 = vmatprep.subr.bf16.mxu0 %v3938
        %5098 = vmatpush1.bf16.msra.mxu0 %v3937
        %5099 = vmatprep.subr.bf16.mxu0 %v3930
        %5100 = vmatpush1.bf16.msra.mxu0 %v3929
        %5101 = vmatprep.subr.bf16.mxu0 %v3922
        %5102 = vmatpush1.bf16.msra.mxu0 %v3921
        %5103 = vmatprep.subr.bf16.mxu0 %v3914
        %5104 = vmatpush1.bf16.msra.mxu0 %v3913
        %5105 = vmatprep.subr.bf16.mxu0 %v3906
        %5106 = vmatpush1.bf16.msra.mxu0 %v3905
        %5107 = vmatprep.subr.bf16.mxu0 %v4026
        %5108 = vmatpush2.bf16.msra.mxu0 %v4025
        %5109 = vmatprep.subr.bf16.mxu0 %v4018
        %5110 = vmatpush2.bf16.msra.mxu0 %v4017
        %5111 = vmatprep.subr.bf16.mxu0 %v4010
        %5112 = vmatpush2.bf16.msra.mxu0 %v4009
        %5113 = vmatprep.subr.bf16.mxu0 %v4002
        %5114 = vmatpush2.bf16.msra.mxu0 %v4001
        %5115 = vmatprep.subr.bf16.mxu0 %v3994
        %5116 = vmatpush2.bf16.msra.mxu0 %v3993
        %5117 = vmatprep.subr.bf16.mxu0 %v3986
        %5118 = vmatpush2.bf16.msra.mxu0 %v3985
        %5119 = vmatprep.subr.bf16.mxu0 %v3978
        %5120 = vmatpush2.bf16.msra.mxu0 %v3977
        %5121 = vmatprep.subr.bf16.mxu0 %v3970
        %5122 = vmatpush2.bf16.msra.mxu0 %v3969
        %5123 = vmatprep.mubr.bf16.mxu0 %v1806
        %5124 = vmatmul.mubr.bf16.gmra.mxu0 %v1805
        %v5125 = vpop.f32.mrf.mxu0
        %v5126 = vadd.f32 %v2338, %v5125
        %v5127 = vpop.f32.mrf.mxu0
        %v5128 = vadd.f32 %v2342, %v5127
        %v5129 = vpop.f32.mrf.mxu0
        %v5130 = vpop.f32.mrf.mxu0
        %5131 = vdwg.mxu0
        %5132 = vmatprep.subr.bf16.mxu0 %v4090
        %5133 = vmatpush1.bf16.msra.mxu0 %v4089
        %5134 = vmatprep.subr.bf16.mxu0 %v4082
        %5135 = vmatpush1.bf16.msra.mxu0 %v4081
        %5136 = vmatprep.subr.bf16.mxu0 %v4074
        %5137 = vmatpush1.bf16.msra.mxu0 %v4073
        %5138 = vmatprep.subr.bf16.mxu0 %v4066
        %5139 = vmatpush1.bf16.msra.mxu0 %v4065
        %5140 = vmatprep.subr.bf16.mxu0 %v4058
        %5141 = vmatpush1.bf16.msra.mxu0 %v4057
        %5142 = vmatprep.subr.bf16.mxu0 %v4050
        %5143 = vmatpush1.bf16.msra.mxu0 %v4049
        %5144 = vmatprep.subr.bf16.mxu0 %v4042
        %5145 = vmatpush1.bf16.msra.mxu0 %v4041
        %5146 = vmatprep.subr.bf16.mxu0 %v4034
        %5147 = vmatpush1.bf16.msra.mxu0 %v4033
        %5148 = vmatprep.subr.bf16.mxu0 %v4154
        %5149 = vmatpush2.bf16.msra.mxu0 %v4153
        %5150 = vmatprep.subr.bf16.mxu0 %v4146
        %5151 = vmatpush2.bf16.msra.mxu0 %v4145
        %5152 = vmatprep.subr.bf16.mxu0 %v4138
        %5153 = vmatpush2.bf16.msra.mxu0 %v4137
        %5154 = vmatprep.subr.bf16.mxu0 %v4130
        %5155 = vmatpush2.bf16.msra.mxu0 %v4129
        %5156 = vmatprep.subr.bf16.mxu0 %v4122
        %5157 = vmatpush2.bf16.msra.mxu0 %v4121
        %5158 = vmatprep.subr.bf16.mxu0 %v4114
        %5159 = vmatpush2.bf16.msra.mxu0 %v4113
        %5160 = vmatprep.subr.bf16.mxu0 %v4106
        %5161 = vmatpush2.bf16.msra.mxu0 %v4105
        %5162 = vmatprep.subr.bf16.mxu0 %v4098
        %5163 = vmatpush2.bf16.msra.mxu0 %v4097
        %5164 = vmatprep.mubr.bf16.mxu0 %v1808
        %5165 = vmatmul.mubr.bf16.gmra.mxu0 %v1807
        %v5166 = vpop.f32.mrf.mxu0
        %v5167 = vadd.f32 %v5126, %v5166
        %v5168 = vpop.f32.mrf.mxu0
        %v5169 = vadd.f32 %v5128, %v5168
        %v5170 = vpop.f32.mrf.mxu0
        %v5171 = vpop.f32.mrf.mxu0
        %5172 = vdwg.mxu0
        %5173 = vmatprep.subr.bf16.mxu0 %v4218
        %5174 = vmatpush1.bf16.msra.mxu0 %v4217
        %5175 = vmatprep.subr.bf16.mxu0 %v4210
        %5176 = vmatpush1.bf16.msra.mxu0 %v4209
        %5177 = vmatprep.subr.bf16.mxu0 %v4202
        %5178 = vmatpush1.bf16.msra.mxu0 %v4201
        %5179 = vmatprep.subr.bf16.mxu0 %v4194
        %5180 = vmatpush1.bf16.msra.mxu0 %v4193
        %5181 = vmatprep.subr.bf16.mxu0 %v4186
        %5182 = vmatpush1.bf16.msra.mxu0 %v4185
        %5183 = vmatprep.subr.bf16.mxu0 %v4178
        %5184 = vmatpush1.bf16.msra.mxu0 %v4177
        %5185 = vmatprep.subr.bf16.mxu0 %v4170
        %5186 = vmatpush1.bf16.msra.mxu0 %v4169
        %5187 = vmatprep.subr.bf16.mxu0 %v4162
        %5188 = vmatpush1.bf16.msra.mxu0 %v4161
        %5189 = vmatprep.subr.bf16.mxu0 %v4282
        %5190 = vmatpush2.bf16.msra.mxu0 %v4281
        %5191 = vmatprep.subr.bf16.mxu0 %v4274
        %5192 = vmatpush2.bf16.msra.mxu0 %v4273
        %5193 = vmatprep.subr.bf16.mxu0 %v4266
        %5194 = vmatpush2.bf16.msra.mxu0 %v4265
        %5195 = vmatprep.subr.bf16.mxu0 %v4258
        %5196 = vmatpush2.bf16.msra.mxu0 %v4257
        %5197 = vmatprep.subr.bf16.mxu0 %v4250
        %5198 = vmatpush2.bf16.msra.mxu0 %v4249
        %5199 = vmatprep.subr.bf16.mxu0 %v4242
        %5200 = vmatpush2.bf16.msra.mxu0 %v4241
        %5201 = vmatprep.subr.bf16.mxu0 %v4234
        %5202 = vmatpush2.bf16.msra.mxu0 %v4233
        %5203 = vmatprep.subr.bf16.mxu0 %v4226
        %5204 = vmatpush2.bf16.msra.mxu0 %v4225
        %5205 = vmatprep.mubr.bf16.mxu0 %v1810
        %5206 = vmatmul.mubr.bf16.gmra.mxu0 %v1809
        %v5207 = vpop.f32.mrf.mxu0
        %v5208 = vadd.f32 %v5167, %v5207
        %v5209 = vpop.f32.mrf.mxu0
        %v5210 = vadd.f32 %v5169, %v5209
        %v5211 = vpop.f32.mrf.mxu0
        %v5212 = vpop.f32.mrf.mxu0
        %5213 = vdwg.mxu0
        %5214 = vmatprep.subr.bf16.mxu0 %v4346
        %5215 = vmatpush1.bf16.msra.mxu0 %v4345
        %5216 = vmatprep.subr.bf16.mxu0 %v4338
        %5217 = vmatpush1.bf16.msra.mxu0 %v4337
        %5218 = vmatprep.subr.bf16.mxu0 %v4330
        %5219 = vmatpush1.bf16.msra.mxu0 %v4329
        %5220 = vmatprep.subr.bf16.mxu0 %v4322
        %5221 = vmatpush1.bf16.msra.mxu0 %v4321
        %5222 = vmatprep.subr.bf16.mxu0 %v4314
        %5223 = vmatpush1.bf16.msra.mxu0 %v4313
        %5224 = vmatprep.subr.bf16.mxu0 %v4306
        %5225 = vmatpush1.bf16.msra.mxu0 %v4305
        %5226 = vmatprep.subr.bf16.mxu0 %v4298
        %5227 = vmatpush1.bf16.msra.mxu0 %v4297
        %5228 = vmatprep.subr.bf16.mxu0 %v4290
        %5229 = vmatpush1.bf16.msra.mxu0 %v4289
        %5230 = vmatprep.subr.bf16.mxu0 %v4410
        %5231 = vmatpush2.bf16.msra.mxu0 %v4409
        %5232 = vmatprep.subr.bf16.mxu0 %v4402
        %5233 = vmatpush2.bf16.msra.mxu0 %v4401
        %5234 = vmatprep.subr.bf16.mxu0 %v4394
        %5235 = vmatpush2.bf16.msra.mxu0 %v4393
        %5236 = vmatprep.subr.bf16.mxu0 %v4386
        %5237 = vmatpush2.bf16.msra.mxu0 %v4385
        %5238 = vmatprep.subr.bf16.mxu0 %v4378
        %5239 = vmatpush2.bf16.msra.mxu0 %v4377
        %5240 = vmatprep.subr.bf16.mxu0 %v4370
        %5241 = vmatpush2.bf16.msra.mxu0 %v4369
        %5242 = vmatprep.subr.bf16.mxu0 %v4362
        %5243 = vmatpush2.bf16.msra.mxu0 %v4361
        %5244 = vmatprep.subr.bf16.mxu0 %v4354
        %5245 = vmatpush2.bf16.msra.mxu0 %v4353
        %5246 = vmatprep.mubr.bf16.mxu0 %v1812
        %5247 = vmatmul.mubr.bf16.gmra.mxu0 %v1811
        %v5248 = vpop.f32.mrf.mxu0
        %v5249 = vadd.f32 %v5208, %v5248
        %v5250 = vpop.f32.mrf.mxu0
        %v5251 = vadd.f32 %v5210, %v5250
        %v5252 = vpop.f32.mrf.mxu0
        %v5253 = vpop.f32.mrf.mxu0
        %5254 = vdwg.mxu0
        %5255 = vmatprep.subr.bf16.mxu0 %v3964
        %5256 = vmatpush1.bf16.msra.mxu0 %v3963
        %5257 = vmatprep.subr.bf16.mxu0 %v3956
        %5258 = vmatpush1.bf16.msra.mxu0 %v3955
        %5259 = vmatprep.subr.bf16.mxu0 %v3948
        %5260 = vmatpush1.bf16.msra.mxu0 %v3947
        %5261 = vmatprep.subr.bf16.mxu0 %v3940
        %5262 = vmatpush1.bf16.msra.mxu0 %v3939
        %5263 = vmatprep.subr.bf16.mxu0 %v3932
        %5264 = vmatpush1.bf16.msra.mxu0 %v3931
        %5265 = vmatprep.subr.bf16.mxu0 %v3924
        %5266 = vmatpush1.bf16.msra.mxu0 %v3923
        %5267 = vmatprep.subr.bf16.mxu0 %v3916
        %5268 = vmatpush1.bf16.msra.mxu0 %v3915
        %5269 = vmatprep.subr.bf16.mxu0 %v3908
        %5270 = vmatpush1.bf16.msra.mxu0 %v3907
        %5271 = vmatprep.subr.bf16.mxu0 %v4028
        %5272 = vmatpush2.bf16.msra.mxu0 %v4027
        %5273 = vmatprep.subr.bf16.mxu0 %v4020
        %5274 = vmatpush2.bf16.msra.mxu0 %v4019
        %5275 = vmatprep.subr.bf16.mxu0 %v4012
        %5276 = vmatpush2.bf16.msra.mxu0 %v4011
        %5277 = vmatprep.subr.bf16.mxu0 %v4004
        %5278 = vmatpush2.bf16.msra.mxu0 %v4003
        %5279 = vmatprep.subr.bf16.mxu0 %v3996
        %5280 = vmatpush2.bf16.msra.mxu0 %v3995
        %5281 = vmatprep.subr.bf16.mxu0 %v3988
        %5282 = vmatpush2.bf16.msra.mxu0 %v3987
        %5283 = vmatprep.subr.bf16.mxu0 %v3980
        %5284 = vmatpush2.bf16.msra.mxu0 %v3979
        %5285 = vmatprep.subr.bf16.mxu0 %v3972
        %5286 = vmatpush2.bf16.msra.mxu0 %v3971
        %5287 = vmatprep.mubr.bf16.mxu0 %v1806
        %5288 = vmatmul.mubr.bf16.gmra.mxu0 %v1805
        %v5289 = vpop.f32.mrf.mxu0
        %v5290 = vadd.f32 %v2346, %v5289
        %v5291 = vpop.f32.mrf.mxu0
        %v5292 = vadd.f32 %v2350, %v5291
        %v5293 = vpop.f32.mrf.mxu0
        %v5294 = vpop.f32.mrf.mxu0
        %5295 = vdwg.mxu0
        %5296 = vmatprep.subr.bf16.mxu0 %v4092
        %5297 = vmatpush1.bf16.msra.mxu0 %v4091
        %5298 = vmatprep.subr.bf16.mxu0 %v4084
        %5299 = vmatpush1.bf16.msra.mxu0 %v4083
        %5300 = vmatprep.subr.bf16.mxu0 %v4076
        %5301 = vmatpush1.bf16.msra.mxu0 %v4075
        %5302 = vmatprep.subr.bf16.mxu0 %v4068
        %5303 = vmatpush1.bf16.msra.mxu0 %v4067
        %5304 = vmatprep.subr.bf16.mxu0 %v4060
        %5305 = vmatpush1.bf16.msra.mxu0 %v4059
        %5306 = vmatprep.subr.bf16.mxu0 %v4052
        %5307 = vmatpush1.bf16.msra.mxu0 %v4051
        %5308 = vmatprep.subr.bf16.mxu0 %v4044
        %5309 = vmatpush1.bf16.msra.mxu0 %v4043
        %5310 = vmatprep.subr.bf16.mxu0 %v4036
        %5311 = vmatpush1.bf16.msra.mxu0 %v4035
        %5312 = vmatprep.subr.bf16.mxu0 %v4156
        %5313 = vmatpush2.bf16.msra.mxu0 %v4155
        %5314 = vmatprep.subr.bf16.mxu0 %v4148
        %5315 = vmatpush2.bf16.msra.mxu0 %v4147
        %5316 = vmatprep.subr.bf16.mxu0 %v4140
        %5317 = vmatpush2.bf16.msra.mxu0 %v4139
        %5318 = vmatprep.subr.bf16.mxu0 %v4132
        %5319 = vmatpush2.bf16.msra.mxu0 %v4131
        %5320 = vmatprep.subr.bf16.mxu0 %v4124
        %5321 = vmatpush2.bf16.msra.mxu0 %v4123
        %5322 = vmatprep.subr.bf16.mxu0 %v4116
        %5323 = vmatpush2.bf16.msra.mxu0 %v4115
        %5324 = vmatprep.subr.bf16.mxu0 %v4108
        %5325 = vmatpush2.bf16.msra.mxu0 %v4107
        %5326 = vmatprep.subr.bf16.mxu0 %v4100
        %5327 = vmatpush2.bf16.msra.mxu0 %v4099
        %5328 = vmatprep.mubr.bf16.mxu0 %v1808
        %5329 = vmatmul.mubr.bf16.gmra.mxu0 %v1807
        %v5330 = vpop.f32.mrf.mxu0
        %v5331 = vadd.f32 %v5290, %v5330
        %v5332 = vpop.f32.mrf.mxu0
        %v5333 = vadd.f32 %v5292, %v5332
        %v5334 = vpop.f32.mrf.mxu0
        %v5335 = vpop.f32.mrf.mxu0
        %5336 = vdwg.mxu0
        %5337 = vmatprep.subr.bf16.mxu0 %v4220
        %5338 = vmatpush1.bf16.msra.mxu0 %v4219
        %5339 = vmatprep.subr.bf16.mxu0 %v4212
        %5340 = vmatpush1.bf16.msra.mxu0 %v4211
        %5341 = vmatprep.subr.bf16.mxu0 %v4204
        %5342 = vmatpush1.bf16.msra.mxu0 %v4203
        %5343 = vmatprep.subr.bf16.mxu0 %v4196
        %5344 = vmatpush1.bf16.msra.mxu0 %v4195
        %5345 = vmatprep.subr.bf16.mxu0 %v4188
        %5346 = vmatpush1.bf16.msra.mxu0 %v4187
        %5347 = vmatprep.subr.bf16.mxu0 %v4180
        %5348 = vmatpush1.bf16.msra.mxu0 %v4179
        %5349 = vmatprep.subr.bf16.mxu0 %v4172
        %5350 = vmatpush1.bf16.msra.mxu0 %v4171
        %5351 = vmatprep.subr.bf16.mxu0 %v4164
        %5352 = vmatpush1.bf16.msra.mxu0 %v4163
        %5353 = vmatprep.subr.bf16.mxu0 %v4284
        %5354 = vmatpush2.bf16.msra.mxu0 %v4283
        %5355 = vmatprep.subr.bf16.mxu0 %v4276
        %5356 = vmatpush2.bf16.msra.mxu0 %v4275
        %5357 = vmatprep.subr.bf16.mxu0 %v4268
        %5358 = vmatpush2.bf16.msra.mxu0 %v4267
        %5359 = vmatprep.subr.bf16.mxu0 %v4260
        %5360 = vmatpush2.bf16.msra.mxu0 %v4259
        %5361 = vmatprep.subr.bf16.mxu0 %v4252
        %5362 = vmatpush2.bf16.msra.mxu0 %v4251
        %5363 = vmatprep.subr.bf16.mxu0 %v4244
        %5364 = vmatpush2.bf16.msra.mxu0 %v4243
        %5365 = vmatprep.subr.bf16.mxu0 %v4236
        %5366 = vmatpush2.bf16.msra.mxu0 %v4235
        %5367 = vmatprep.subr.bf16.mxu0 %v4228
        %5368 = vmatpush2.bf16.msra.mxu0 %v4227
        %5369 = vmatprep.mubr.bf16.mxu0 %v1810
        %5370 = vmatmul.mubr.bf16.gmra.mxu0 %v1809
        %v5371 = vpop.f32.mrf.mxu0
        %v5372 = vadd.f32 %v5331, %v5371
        %v5373 = vpop.f32.mrf.mxu0
        %v5374 = vadd.f32 %v5333, %v5373
        %v5375 = vpop.f32.mrf.mxu0
        %v5376 = vpop.f32.mrf.mxu0
        %5377 = vdwg.mxu0
        %5378 = vmatprep.subr.bf16.mxu0 %v4348
        %5379 = vmatpush1.bf16.msra.mxu0 %v4347
        %5380 = vmatprep.subr.bf16.mxu0 %v4340
        %5381 = vmatpush1.bf16.msra.mxu0 %v4339
        %5382 = vmatprep.subr.bf16.mxu0 %v4332
        %5383 = vmatpush1.bf16.msra.mxu0 %v4331
        %5384 = vmatprep.subr.bf16.mxu0 %v4324
        %5385 = vmatpush1.bf16.msra.mxu0 %v4323
        %5386 = vmatprep.subr.bf16.mxu0 %v4316
        %5387 = vmatpush1.bf16.msra.mxu0 %v4315
        %5388 = vmatprep.subr.bf16.mxu0 %v4308
        %5389 = vmatpush1.bf16.msra.mxu0 %v4307
        %5390 = vmatprep.subr.bf16.mxu0 %v4300
        %5391 = vmatpush1.bf16.msra.mxu0 %v4299
        %5392 = vmatprep.subr.bf16.mxu0 %v4292
        %5393 = vmatpush1.bf16.msra.mxu0 %v4291
        %5394 = vmatprep.subr.bf16.mxu0 %v4412
        %5395 = vmatpush2.bf16.msra.mxu0 %v4411
        %5396 = vmatprep.subr.bf16.mxu0 %v4404
        %5397 = vmatpush2.bf16.msra.mxu0 %v4403
        %5398 = vmatprep.subr.bf16.mxu0 %v4396
        %5399 = vmatpush2.bf16.msra.mxu0 %v4395
        %5400 = vmatprep.subr.bf16.mxu0 %v4388
        %5401 = vmatpush2.bf16.msra.mxu0 %v4387
        %5402 = vmatprep.subr.bf16.mxu0 %v4380
        %5403 = vmatpush2.bf16.msra.mxu0 %v4379
        %5404 = vmatprep.subr.bf16.mxu0 %v4372
        %5405 = vmatpush2.bf16.msra.mxu0 %v4371
        %5406 = vmatprep.subr.bf16.mxu0 %v4364
        %5407 = vmatpush2.bf16.msra.mxu0 %v4363
        %5408 = vmatprep.subr.bf16.mxu0 %v4356
        %5409 = vmatpush2.bf16.msra.mxu0 %v4355
        %5410 = vmatprep.mubr.bf16.mxu0 %v1812
        %5411 = vmatmul.mubr.bf16.gmra.mxu0 %v1811
        %v5412 = vpop.f32.mrf.mxu0
        %v5413 = vadd.f32 %v5372, %v5412
        %v5414 = vpop.f32.mrf.mxu0
        %v5415 = vadd.f32 %v5374, %v5414
        %v5416 = vpop.f32.mrf.mxu0
        %v5417 = vpop.f32.mrf.mxu0
        %5418 = vdwg.mxu0
        %5419 = vmatprep.subr.bf16.mxu0 %v3966
        %5420 = vmatpush1.bf16.msra.mxu0 %v3965
        %5421 = vmatprep.subr.bf16.mxu0 %v3958
        %5422 = vmatpush1.bf16.msra.mxu0 %v3957
        %5423 = vmatprep.subr.bf16.mxu0 %v3950
        %5424 = vmatpush1.bf16.msra.mxu0 %v3949
        %5425 = vmatprep.subr.bf16.mxu0 %v3942
        %5426 = vmatpush1.bf16.msra.mxu0 %v3941
        %5427 = vmatprep.subr.bf16.mxu0 %v3934
        %5428 = vmatpush1.bf16.msra.mxu0 %v3933
        %5429 = vmatprep.subr.bf16.mxu0 %v3926
        %5430 = vmatpush1.bf16.msra.mxu0 %v3925
        %5431 = vmatprep.subr.bf16.mxu0 %v3918
        %5432 = vmatpush1.bf16.msra.mxu0 %v3917
        %5433 = vmatprep.subr.bf16.mxu0 %v3910
        %5434 = vmatpush1.bf16.msra.mxu0 %v3909
        %5435 = vmatprep.subr.bf16.mxu0 %v4030
        %5436 = vmatpush2.bf16.msra.mxu0 %v4029
        %5437 = vmatprep.subr.bf16.mxu0 %v4022
        %5438 = vmatpush2.bf16.msra.mxu0 %v4021
        %5439 = vmatprep.subr.bf16.mxu0 %v4014
        %5440 = vmatpush2.bf16.msra.mxu0 %v4013
        %5441 = vmatprep.subr.bf16.mxu0 %v4006
        %5442 = vmatpush2.bf16.msra.mxu0 %v4005
        %5443 = vmatprep.subr.bf16.mxu0 %v3998
        %5444 = vmatpush2.bf16.msra.mxu0 %v3997
        %5445 = vmatprep.subr.bf16.mxu0 %v3990
        %5446 = vmatpush2.bf16.msra.mxu0 %v3989
        %5447 = vmatprep.subr.bf16.mxu0 %v3982
        %5448 = vmatpush2.bf16.msra.mxu0 %v3981
        %5449 = vmatprep.subr.bf16.mxu0 %v3974
        %5450 = vmatpush2.bf16.msra.mxu0 %v3973
        %5451 = vmatprep.mubr.bf16.mxu0 %v1806
        %5452 = vmatmul.mubr.bf16.gmra.mxu0 %v1805
        %v5453 = vpop.f32.mrf.mxu0
        %v5454 = vadd.f32 %v2354, %v5453
        %v5455 = vpop.f32.mrf.mxu0
        %v5456 = vadd.f32 %v2358, %v5455
        %v5457 = vpop.f32.mrf.mxu0
        %v5458 = vpop.f32.mrf.mxu0
        %5459 = vdwg.mxu0
        %5460 = vmatprep.subr.bf16.mxu0 %v4094
        %5461 = vmatpush1.bf16.msra.mxu0 %v4093
        %5462 = vmatprep.subr.bf16.mxu0 %v4086
        %5463 = vmatpush1.bf16.msra.mxu0 %v4085
        %5464 = vmatprep.subr.bf16.mxu0 %v4078
        %5465 = vmatpush1.bf16.msra.mxu0 %v4077
        %5466 = vmatprep.subr.bf16.mxu0 %v4070
        %5467 = vmatpush1.bf16.msra.mxu0 %v4069
        %5468 = vmatprep.subr.bf16.mxu0 %v4062
        %5469 = vmatpush1.bf16.msra.mxu0 %v4061
        %5470 = vmatprep.subr.bf16.mxu0 %v4054
        %5471 = vmatpush1.bf16.msra.mxu0 %v4053
        %5472 = vmatprep.subr.bf16.mxu0 %v4046
        %5473 = vmatpush1.bf16.msra.mxu0 %v4045
        %5474 = vmatprep.subr.bf16.mxu0 %v4038
        %5475 = vmatpush1.bf16.msra.mxu0 %v4037
        %5476 = vmatprep.subr.bf16.mxu0 %v4158
        %5477 = vmatpush2.bf16.msra.mxu0 %v4157
        %5478 = vmatprep.subr.bf16.mxu0 %v4150
        %5479 = vmatpush2.bf16.msra.mxu0 %v4149
        %5480 = vmatprep.subr.bf16.mxu0 %v4142
        %5481 = vmatpush2.bf16.msra.mxu0 %v4141
        %5482 = vmatprep.subr.bf16.mxu0 %v4134
        %5483 = vmatpush2.bf16.msra.mxu0 %v4133
        %5484 = vmatprep.subr.bf16.mxu0 %v4126
        %5485 = vmatpush2.bf16.msra.mxu0 %v4125
        %5486 = vmatprep.subr.bf16.mxu0 %v4118
        %5487 = vmatpush2.bf16.msra.mxu0 %v4117
        %5488 = vmatprep.subr.bf16.mxu0 %v4110
        %5489 = vmatpush2.bf16.msra.mxu0 %v4109
        %5490 = vmatprep.subr.bf16.mxu0 %v4102
        %5491 = vmatpush2.bf16.msra.mxu0 %v4101
        %5492 = vmatprep.mubr.bf16.mxu0 %v1808
        %5493 = vmatmul.mubr.bf16.gmra.mxu0 %v1807
        %v5494 = vpop.f32.mrf.mxu0
        %v5495 = vadd.f32 %v5454, %v5494
        %v5496 = vpop.f32.mrf.mxu0
        %v5497 = vadd.f32 %v5456, %v5496
        %v5498 = vpop.f32.mrf.mxu0
        %v5499 = vpop.f32.mrf.mxu0
        %5500 = vdwg.mxu0
        %5501 = vmatprep.subr.bf16.mxu0 %v4222
        %5502 = vmatpush1.bf16.msra.mxu0 %v4221
        %5503 = vmatprep.subr.bf16.mxu0 %v4214
        %5504 = vmatpush1.bf16.msra.mxu0 %v4213
        %5505 = vmatprep.subr.bf16.mxu0 %v4206
        %5506 = vmatpush1.bf16.msra.mxu0 %v4205
        %5507 = vmatprep.subr.bf16.mxu0 %v4198
        %5508 = vmatpush1.bf16.msra.mxu0 %v4197
        %5509 = vmatprep.subr.bf16.mxu0 %v4190
        %5510 = vmatpush1.bf16.msra.mxu0 %v4189
        %5511 = vmatprep.subr.bf16.mxu0 %v4182
        %5512 = vmatpush1.bf16.msra.mxu0 %v4181
        %5513 = vmatprep.subr.bf16.mxu0 %v4174
        %5514 = vmatpush1.bf16.msra.mxu0 %v4173
        %5515 = vmatprep.subr.bf16.mxu0 %v4166
        %5516 = vmatpush1.bf16.msra.mxu0 %v4165
        %5517 = vmatprep.subr.bf16.mxu0 %v4286
        %5518 = vmatpush2.bf16.msra.mxu0 %v4285
        %5519 = vmatprep.subr.bf16.mxu0 %v4278
        %5520 = vmatpush2.bf16.msra.mxu0 %v4277
        %5521 = vmatprep.subr.bf16.mxu0 %v4270
        %5522 = vmatpush2.bf16.msra.mxu0 %v4269
        %5523 = vmatprep.subr.bf16.mxu0 %v4262
        %5524 = vmatpush2.bf16.msra.mxu0 %v4261
        %5525 = vmatprep.subr.bf16.mxu0 %v4254
        %5526 = vmatpush2.bf16.msra.mxu0 %v4253
        %5527 = vmatprep.subr.bf16.mxu0 %v4246
        %5528 = vmatpush2.bf16.msra.mxu0 %v4245
        %5529 = vmatprep.subr.bf16.mxu0 %v4238
        %5530 = vmatpush2.bf16.msra.mxu0 %v4237
        %5531 = vmatprep.subr.bf16.mxu0 %v4230
        %5532 = vmatpush2.bf16.msra.mxu0 %v4229
        %5533 = vmatprep.mubr.bf16.mxu0 %v1810
        %5534 = vmatmul.mubr.bf16.gmra.mxu0 %v1809
        %v5535 = vpop.f32.mrf.mxu0
        %v5536 = vadd.f32 %v5495, %v5535
        %v5537 = vpop.f32.mrf.mxu0
        %v5538 = vadd.f32 %v5497, %v5537
        %v5539 = vpop.f32.mrf.mxu0
        %v5540 = vpop.f32.mrf.mxu0
        %5541 = vdwg.mxu0
        %5542 = vmatprep.subr.bf16.mxu0 %v4350
        %5543 = vmatpush1.bf16.msra.mxu0 %v4349
        %5544 = vmatprep.subr.bf16.mxu0 %v4342
        %5545 = vmatpush1.bf16.msra.mxu0 %v4341
        %5546 = vmatprep.subr.bf16.mxu0 %v4334
        %5547 = vmatpush1.bf16.msra.mxu0 %v4333
        %5548 = vmatprep.subr.bf16.mxu0 %v4326
        %5549 = vmatpush1.bf16.msra.mxu0 %v4325
        %5550 = vmatprep.subr.bf16.mxu0 %v4318
        %5551 = vmatpush1.bf16.msra.mxu0 %v4317
        %5552 = vmatprep.subr.bf16.mxu0 %v4310
        %5553 = vmatpush1.bf16.msra.mxu0 %v4309
        %5554 = vmatprep.subr.bf16.mxu0 %v4302
        %5555 = vmatpush1.bf16.msra.mxu0 %v4301
        %5556 = vmatprep.subr.bf16.mxu0 %v4294
        %5557 = vmatpush1.bf16.msra.mxu0 %v4293
        %5558 = vmatprep.subr.bf16.mxu0 %v4414
        %5559 = vmatpush2.bf16.msra.mxu0 %v4413
        %5560 = vmatprep.subr.bf16.mxu0 %v4406
        %5561 = vmatpush2.bf16.msra.mxu0 %v4405
        %5562 = vmatprep.subr.bf16.mxu0 %v4398
        %5563 = vmatpush2.bf16.msra.mxu0 %v4397
        %5564 = vmatprep.subr.bf16.mxu0 %v4390
        %5565 = vmatpush2.bf16.msra.mxu0 %v4389
        %5566 = vmatprep.subr.bf16.mxu0 %v4382
        %5567 = vmatpush2.bf16.msra.mxu0 %v4381
        %5568 = vmatprep.subr.bf16.mxu0 %v4374
        %5569 = vmatpush2.bf16.msra.mxu0 %v4373
        %5570 = vmatprep.subr.bf16.mxu0 %v4366
        %5571 = vmatpush2.bf16.msra.mxu0 %v4365
        %5572 = vmatprep.subr.bf16.mxu0 %v4358
        %5573 = vmatpush2.bf16.msra.mxu0 %v4357
        %5574 = vmatprep.mubr.bf16.mxu0 %v1812
        %5575 = vmatmul.mubr.bf16.gmra.mxu0 %v1811
        %v5576 = vpop.f32.mrf.mxu0
        %v5577 = vadd.f32 %v5536, %v5576
        %v5578 = vpop.f32.mrf.mxu0
        %v5579 = vadd.f32 %v5538, %v5578
        %v5580 = vpop.f32.mrf.mxu0
        %v5581 = vpop.f32.mrf.mxu0
        %5582 = vdwg.mxu0
        %v5583 = vtanh.pop %v5085
        %v5584 = vtanh.pop %v5087
        %v5585 = vtanh.pop %v5249
        %v5586 = vtanh.pop %v5251
        %v5587 = vtanh.pop %v5413
        %v5588 = vtanh.pop %v5415
        %v5589 = vtanh.pop %v5577
        %v5590 = vtanh.pop %v5579
        %v5591 = vadd.f32 %v5583, 1.0
        %v5592 = vadd.f32 %v5584, 1.0
        %v5593 = vadd.f32 %v5585, 1.0
        %v5594 = vadd.f32 %v5586, 1.0
        %v5595 = vadd.f32 %v5587, 1.0
        %v5596 = vadd.f32 %v5588, 1.0
        %v5597 = vadd.f32 %v5589, 1.0
        %v5598 = vadd.f32 %v5590, 1.0
        %v5599 = vmul.f32 %v5591, 0.5
        %v5600 = vmul.f32 %v5592, 0.5
        %v5601 = vmul.f32 %v5593, 0.5
        %v5602 = vmul.f32 %v5594, 0.5
        %v5603 = vmul.f32 %v5595, 0.5
        %v5604 = vmul.f32 %v5596, 0.5
        %v5605 = vmul.f32 %v5597, 0.5
        %v5606 = vmul.f32 %v5598, 0.5
        %5607 = vst [vmem:[%s548] sm:$0xff] %v5599
        %5608 = vst [vmem:[%s548 + $0x8] sm:$0xff] %v5600
        %5609 = vst [vmem:[%s548 + $0x10] sm:$0xff] %v5601
        %5610 = vst [vmem:[%s548 + $0x18] sm:$0xff] %v5602
        %5611 = vst [vmem:[%s548 + $0x20] sm:$0xff] %v5603
        %5612 = vst [vmem:[%s548 + $0x28] sm:$0xff] %v5604
        %5613 = vst [vmem:[%s548 + $0x30] sm:$0xff] %v5605
        %5614 = vst [vmem:[%s548 + $0x38] sm:$0xff] %v5606
        %s5615 = sand.u32 %s297, 1
        %s5616 = scalar_lea.sflag [#allocation4], %s5615
        %s5617 = sand.u32 %s297, 1
        %s5618 = smul.addr %s5617, 64
        %s5619 = scalar_lea.vmem [#allocation20], %s5618
        // Predicated region
        $region113: #{_forward.1} parent=67 // pred_check
          %p5620 = pneg %p307
        $region114: #{_forward.1} parent=67 // pred_check_branch
          %5622 = sbr.rel (%p5620) target = $region116
        $region115: #{_forward.1} parent=67 // pred_region
          %s5624 = ssub.s32 1024, 1024
          %5625 = vsyncadd %s5616, %s5624
          %s5626 = smul.addr %s32, 8
          %s5627 = smul.addr %s5626, 128
          %s5628 = scalar_lea.hbm %s12, %s5627
          %s5630 = sshll.u32 %s5619, 4
          %s5631 = int_to_ptr.vmem [resolvable:$true] %s5630
          %5633 = dma.vmem_to_hbm [thread:$0]  %s5631, 1024, %s5628, %s5616
        $region116: #{_forward.1} parent=67 // pred_fallthru
          _
      $region68: #{_forward.1} parent=5 // pred_fallthru
        _
      %p5634 = scmp.le.s32.totalorder 2, %s27
      // Predicated region
      $region117: #{_forward.1} parent=5 // pred_check
        %p5635 = pneg %p5634
      $region118: #{_forward.1} parent=5 // pred_check_branch
        %5637 = sbr.rel (%p5635) target = $region120
      $region119: #{_forward.1} parent=5 // pred_region
        %s5638 = ssub.s32 %s27, 2
        // Predicated region
        $region121: #{_forward.1} parent=119 // pred_check
          %p5639 = pneg %p313
        $region122: #{_forward.1} parent=119 // pred_check_branch
          %5641 = sbr.rel (%p5639) target = $region124
        $region123: #{_forward.1} parent=119 // pred_region
          %s5642 = sand.u32 %s298, 1
          %s5643 = scalar_lea.sflag [#allocation4], %s5642
          %s5644 = sand.u32 %s298, 1
          %s5645 = smul.addr %s5644, 64
          %s5646 = scalar_lea.vmem [#allocation20], %s5645
          %5647 = dma.done %s5643, 1024
        $region124: #{_forward.1} parent=119 // pred_fallthru
          _
      $region120: #{_forward.1} parent=5 // pred_fallthru
        _
    $region6: #{_forward.1} parent=1 // loop_footer
      %s31 = sadd.s32 1, %s27
    $region7: #{_forward.1} parent=1 // loop_footer_branch
      %26 = sbr.rel target = $region3
    $region8: #{_forward.1} parent=1 // loop_exit
      _
    %5648 = vsyncpa [#allocation3], 1
    %s5649 = scalar_lea.sflag [#allocation3], 1
    %5650 = vsyncpa %s5649, 1
    %5651 = vsyncpa [#allocation6], 1
    %5652 = vsyncpa [#allocation9], 1
    %5653 = vsyncpa [#allocation12], 1
    %5654 = vsyncpa [#allocation15], 1
    %5655 = vsyncpa [#allocation18], 1
    %5656 = vsyncpa [#allocation4], 1
    %s5657 = scalar_lea.sflag [#allocation4], 1
    %5658 = vsyncpa %s5657, 1

</llo_original>
